<compile_context>
chip_gen: v6e
topology: v6e:2x2x1
jax: 0.10.0
libtpu: 0.0.40
codegen_flags: <defaults>
</compile_context>

<pallas_src>
import functools

import jax
import jax.numpy as jnp
from jax import lax
from jax.experimental import pallas as pl
from jax.experimental.pallas import tpu as pltpu


# ----------------------------------------------------------------------------- wrapper-side helpers
def _pool_matrix(L, P, length, step):
    """(L, P) matrix M with M[t, p] = 1/length if p*step <= t < p*step+length."""
    t = jnp.arange(L)[:, None]
    p = jnp.arange(P)[None, :]
    m = (t >= p * step) & (t < p * step + length)
    return m.astype(jnp.float32) * (1.0 / float(length))


def _block_diag(blocks):
    rows = sum(b.shape[0] for b in blocks)
    cols = sum(b.shape[1] for b in blocks)
    out = jnp.zeros((rows, cols), jnp.float32)
    r = c = 0
    for b in blocks:
        out = out.at[r:r + b.shape[0], c:c + b.shape[1]].set(b)
        r += b.shape[0]
        c += b.shape[1]
    return out


def _conv_toeplitz(w, T):
    """Conv2d(1xK) weights (num_T, C_in, K) -> Toeplitz (C_in, T, num_T, L)."""
    num_T, C_in, K = w.shape
    L = T - K + 1
    r = jnp.arange(T)[:, None]            # row in the time axis
    t = jnp.arange(L)[None, :]            # output time index
    k = r - t
    valid = (k >= 0) & (k < K)
    kc = jnp.clip(k, 0, K - 1)
    g = w[:, :, kc]                       # (num_T, C_in, T, L)
    g = jnp.where(valid[None, None], g, 0.0)
    return jnp.transpose(g, (1, 2, 0, 3))  # (C_in, T, num_T, L)


def _const_spec(arr):
    nd = arr.ndim
    return pl.BlockSpec(arr.shape, lambda bb, _z=(0,) * nd: _z)


def _pick_batch_block(B):
    """Largest divisor of B that still leaves >=2 grid steps (v7x) and <=8 stacked examples."""
    if B <= 1:
        return 1
    cap = min(B // 2, 8)
    for c in range(cap, 0, -1):
        if B % c == 0:
            return c
    return 1


# ----------------------------------------------------------------------------- fused kernel
def _lggnet_fused_kernel(wconv_ref, bconv_ref, pm1_ref, w11_ref, b11_ref,
                         pm2_ref, bns_sh_ref, lw_ref, lb_ref, aagg_ref,
                         gsym_ref, bn_sc_ref, bn_sh_ref, wg_ref, bg_ref,
                         bn2_sc_ref, bn2_sh_ref, wfc_ref, mask_ref,
                         rowpool_ref, colpool_ref, bfc_ref,
                         x_ref, o_ref, *, C_in):
    f32 = jnp.float32

    # ---- Tception (all 3 branches + all num_T channels): Toeplitz-matmul conv,
    #      PowerLayer = square -> AvgPool (matmul) -> log
    conv = jnp.dot(x_ref[0], wconv_ref[0], preferred_element_type=f32)
    for ic in range(1, C_in):
        conv = conv + jnp.dot(x_ref[ic], wconv_ref[ic], preferred_element_type=f32)
    conv = conv + bconv_ref[...]                               # (rows, Fc)
    sq = conv * conv
    cat = jnp.log(jnp.dot(sq, pm1_ref[...], preferred_element_type=f32))   # (rows, Fp)

    # ---- BN_t folded into the 1x1 conv, LeakyReLU, AvgPool(1,2)+BN_s folded
    z = jnp.dot(cat, w11_ref[...], preferred_element_type=f32) + b11_ref[...]
    z = jnp.where(z > 0.0, z, 0.01 * z)                        # LeakyReLU
    z = jnp.dot(z, pm2_ref[...], preferred_element_type=f32) + bns_sh_ref[...]

    # ---- local filter + per-brain-area mean aggregation (matmul)
    z = jnp.maximum(z * lw_ref[...] - lb_ref[...], 0.0)        # (rows, feat)
    agg = jnp.dot(aagg_ref[...], z, preferred_element_type=f32)  # (N, feat)

    # ---- adjacency: Gram matrix -> relu(. * Gsym) -> +I -> sym-normalize
    s = lax.dot_general(agg, agg, (((1,), (1,)), ((), ())),
                        preferred_element_type=f32)            # (N, N)
    n = s.shape[0]
    adj = jnp.maximum(s * gsym_ref[...], 0.0)
    rr = lax.broadcasted_iota(jnp.int32, (n, n), 0)
    cc = lax.broadcasted_iota(jnp.int32, (n, n), 1)
    adj = adj + (rr == cc).astype(f32)                         # + I (self loop)
    rowsum = jnp.sum(adj, axis=-1, keepdims=True)
    rowsum = rowsum + (rowsum == 0.0).astype(f32)
    colsum = jnp.sum(adj, axis=0, keepdims=True)
    colsum = colsum + (colsum == 0.0).astype(f32)
    adj = adj * lax.rsqrt(rowsum) * lax.rsqrt(colsum)          # D^-1/2 A D^-1/2

    # ---- BatchNorm1d (eval) -> GCN (xW - b, relu(adj @ .)) -> BatchNorm1d (eval)
    xb = agg * bn_sc_ref[...] + bn_sh_ref[...]
    h = jnp.dot(xb, wg_ref[...], preferred_element_type=f32) - bg_ref[...]
    h = jnp.maximum(jnp.dot(adj, h, preferred_element_type=f32), 0.0)
    h = h * bn2_sc_ref[...] + bn2_sh_ref[...]                  # (N, out_graph)

    # ---- flatten + Linear head, expressed via matmuls (no in-kernel reshape)
    p = jnp.dot(h, wfc_ref[...], preferred_element_type=f32) * mask_ref[...]
    logits = jnp.dot(jnp.dot(rowpool_ref[...], p, preferred_element_type=f32),
                     colpool_ref[...], preferred_element_type=f32) + bfc_ref[...]
    o_ref[:, 0, :] = logits                                    # (Bblk, ncls)


# ----------------------------------------------------------------------------- forward
def lggnet_forward(x, params, cfg):
    B, C_in, n_chan, T = x.shape
    pool, step = cfg['pool'], cfg['pool_step']
    idx_graph = tuple(cfg['idx_graph'])
    area = len(idx_graph)
    assert sum(idx_graph) == n_chan
    num_T = params['t1_w'].shape[0]
    out_graph = params['gcn_w'].shape[1]
    ncls = params['fc_b'].shape[-1]

    Bblk = _pick_batch_block(B)
    N = Bblk * area

    Ks = [params[k].shape[-1] for k in ('t1_w', 't2_w', 't3_w')]
    Ls = [T - k + 1 for k in Ks]
    Ps = [(L - pool) // step + 1 for L in Ls]
    Ltot, Ptot = sum(Ls), sum(Ps)
    T2 = Ptot // 2
    feat = num_T * T2
    Fc, Fp = num_T * Ltot, num_T * Ptot

    eye = lambda m: jnp.eye(m, dtype=jnp.float32)

    # --- Tception tables: Toeplitz conv matrix, bias row, power-pool matrix ---
    wpieces = [_conv_toeplitz(params[k], T) for k in ('t1_w', 't2_w', 't3_w')]
    Wconv = jnp.concatenate(wpieces, axis=-1).reshape(C_in, T, Fc)
    bconv_row = jnp.concatenate(
        [jnp.broadcast_to(params[k][:, None], (num_T, L))
         for k, L in zip(('t1_b', 't2_b', 't3_b'), Ls)], axis=-1).reshape(1, Fc)
    pm_branch = _block_diag([_pool_matrix(L, P, pool, step) for L, P in zip(Ls, Ps)])
    PM1 = jnp.kron(eye(num_T), pm_branch)                           # (Fc, Fp)

    # --- BN_t folded into the 1x1 conv; BN_s folded into the (1,2) pooling ---
    w11 = params['w11']
    W1x1 = jnp.kron((w11 * params['bnt_scale'][None, :]).T, eye(Ptot))   # (Fp, Fp)
    b11_row = jnp.repeat(params['b11'] + w11 @ params['bnt_shift'], Ptot)[None, :]
    PM2 = jnp.kron(jnp.diag(params['bns_scale']), _pool_matrix(Ptot, T2, 2, 2))
    bns_sh_row = jnp.repeat(params['bns_shift'], T2)[None, :]

    # --- local filter & brain-area aggregation (batch block stacked on sublanes) ---
    lw_t = jnp.tile(params['local_w'], (Bblk, 1))
    lb_t = jnp.tile(params['local_b'].reshape(n_chan, 1), (Bblk, 1))
    rows = []
    lo = 0
    for ngrp in idx_graph:
        rows.append(jnp.zeros((n_chan,), jnp.float32).at[lo:lo + ngrp].set(1.0 / ngrp))
        lo += ngrp
    Aagg = jnp.stack(rows, axis=0)                                  # (area, n_chan)
    Ablock = jnp.kron(eye(Bblk), Aagg)                              # (N, Bblk*n_chan)

    # --- graph head tables ---
    GsymBlock = jnp.kron(eye(Bblk), params['gsym'])                 # (N, N), block diag
    bn_sc = jnp.tile(params['bn_scale'].reshape(area, 1), (Bblk, 1))
    bn_sh = jnp.tile(params['bn_shift'].reshape(area, 1), (Bblk, 1))
    bn2_sc = jnp.tile(params['bn2_scale'].reshape(area, 1), (Bblk, 1))
    bn2_sh = jnp.tile(params['bn2_shift'].reshape(area, 1), (Bblk, 1))
    Wg = params['gcn_w']
    bg_row = params['gcn_b'].reshape(1, out_graph)
    # fc head as matmuls: logits[b,c] = sum_{a,g} h[b*area+a, g] * fc_w[c, a*og+g]
    wfc3 = params['fc_w'].reshape(ncls, area, out_graph)
    Wfc_cat = jnp.transpose(wfc3, (2, 1, 0)).reshape(out_graph, area * ncls)
    MaskT = jnp.tile(jnp.kron(eye(area), jnp.ones((1, ncls), jnp.float32)), (Bblk, 1))
    RowPool = jnp.kron(eye(Bblk), jnp.ones((1, area), jnp.float32))   # (Bblk, N)
    ColPool = jnp.tile(eye(ncls), (area, 1))                          # (area*ncls, ncls)
    bfc_row = params['fc_b'].reshape(1, ncls)

    tables = [Wconv, bconv_row, PM1, W1x1, b11_row, PM2, bns_sh_row,
              lw_t, lb_t, Ablock, GsymBlock, bn_sc, bn_sh, Wg, bg_row,
              bn2_sc, bn2_sh, Wfc_cat, MaskT, RowPool, ColPool, bfc_row]

    # x laid out so one batch block is a contiguous sublane slab: (C_in, B*n_chan, T)
    x_r = jnp.transpose(x, (1, 0, 2, 3)).reshape(C_in, B * n_chan, T)

    grid = (B // Bblk,)
    in_specs = [_const_spec(t) for t in tables] + [
        pl.BlockSpec((C_in, Bblk * n_chan, T), lambda bb: (0, bb, 0))]
    out_spec = pl.BlockSpec((Bblk, 1, ncls), lambda bb: (bb, 0, 0))

    # Advisory cost estimate (tiny kernel; helps XLA schedule it tightly).
    rows_b = Bblk * n_chan
    nblk = B // Bblk
    flops_blk = 2 * rows_b * (C_in * T * Fc + Fc * Fp + Fp * Fp + Fp * feat) \
        + 2 * (N * rows_b * feat + N * N * feat + N * feat * out_graph
               + N * N * out_graph + N * out_graph * area * ncls)
    cost = pl.CostEstimate(
        flops=int(flops_blk * nblk),
        transcendentals=int((rows_b * Fp + 2 * N) * nblk),
        bytes_accessed=int(4 * (x.size + sum(t.size for t in tables) + B * ncls)))

    kern = functools.partial(_lggnet_fused_kernel, C_in=C_in)
    y = pl.pallas_call(
        kern,
        out_shape=jax.ShapeDtypeStruct((B, 1, ncls), jnp.float32),
        grid=grid,
        in_specs=in_specs,
        out_specs=out_spec,
        compiler_params=pltpu.CompilerParams(dimension_semantics=("parallel",)),
        cost_estimate=cost,
    )(*tables, x_r)
    return y[:, 0, :]


# ----------------------------------------------------------------------------- main
if __name__ == "__main__":
    # Small LGGNet config
    num_classes = 3
    C_in, n_chan, T = 1, 8, 64                  # input_size = (1, 8, 64)
    sampling_rate = 16
    num_T = 4
    out_graph = 8
    pool = 4
    pool_step_rate = 0.5
    idx_graph = [2, 3, 3]                       # brain areas (sum == n_chan)
    area = len(idx_graph)
    step = int(pool_step_rate * pool)
    windows = [0.5, 0.25, 0.125]
    Ks = [int(w * sampling_rate) for w in windows]   # temporal kernel widths
    eps = 1e-5

    # mirror get_size_temporal()
    Ls = [T - k + 1 for k in Ks]
    Ps = [(L - pool) // step + 1 for L in Ls]
    Tc = sum(Ps)
    T2 = Tc // 2
    feat = num_T * T2

    key = jax.random.PRNGKey(0)
    keys = iter(jax.random.split(key, 48))

    def nrm(shape, scale=0.1):
        return (scale * jax.random.normal(next(keys), shape)).astype(jnp.float32)

    def bn_affine(n):
        gamma = 1.0 + 0.1 * jax.random.normal(next(keys), (n,))
        beta = 0.1 * jax.random.normal(next(keys), (n,))
        rmean = 0.1 * jax.random.normal(next(keys), (n,))
        rvar = 1.0 + 0.1 * jax.random.uniform(next(keys), (n,))
        scale = gamma / jnp.sqrt(rvar + eps)
        shift = beta - rmean * scale
        return scale.astype(jnp.float32), shift.astype(jnp.float32)

    params = {}
    params['t1_w'] = nrm((num_T, C_in, Ks[0])); params['t1_b'] = nrm((num_T,))
    params['t2_w'] = nrm((num_T, C_in, Ks[1])); params['t2_b'] = nrm((num_T,))
    params['t3_w'] = nrm((num_T, C_in, Ks[2])); params['t3_b'] = nrm((num_T,))
    params['w11'] = nrm((num_T, num_T)); params['b11'] = nrm((num_T,))
    params['bnt_scale'], params['bnt_shift'] = bn_affine(num_T)     # BN_t (eval)
    params['bns_scale'], params['bns_shift'] = bn_affine(num_T)     # BN_s (eval)
    params['local_w'] = nrm((n_chan, feat), scale=0.2)              # local_filter_weight
    params['local_b'] = jnp.zeros((n_chan, 1), jnp.float32)         # local_filter_bias
    g = nrm((area, area), scale=0.5)                                # global_adj
    params['gsym'] = g + g.T
    params['bn_scale'], params['bn_shift'] = bn_affine(area)        # bn (eval)
    params['bn2_scale'], params['bn2_shift'] = bn_affine(area)      # bn_ (eval)
    params['gcn_w'] = nrm((feat, out_graph), scale=1.0 / (feat ** 0.5))
    params['gcn_b'] = jnp.zeros((1, out_graph), jnp.float32)
    params['fc_w'] = nrm((num_classes, area * out_graph))
    params['fc_b'] = nrm((num_classes,))

    B = 2
    x = jax.random.normal(next(keys), (B, C_in, n_chan, T), dtype=jnp.float32)

    cfg = {'pool': pool, 'pool_step': step, 'idx_graph': tuple(idx_graph)}
    out = jax.jit(lambda xx: lggnet_forward(xx, params, cfg))(x)
    out = jax.block_until_ready(out)
    assert out.shape == (B, num_classes)
    print("KERNEL_OK")
</pallas_src>

<mosaic_0001>
module attributes {stable_mosaic.version = 11 : i64} {
  func.func @_lggnet_fused_kernel(%arg0: i32, %arg1: memref<1x64x724xf32, #tpu.memory_space<vmem>>, %arg2: memref<1x724xf32, #tpu.memory_space<vmem>>, %arg3: memref<724x344xf32, #tpu.memory_space<vmem>>, %arg4: memref<344x344xf32, #tpu.memory_space<vmem>>, %arg5: memref<1x344xf32, #tpu.memory_space<vmem>>, %arg6: memref<344x172xf32, #tpu.memory_space<vmem>>, %arg7: memref<1x172xf32, #tpu.memory_space<vmem>>, %arg8: memref<8x172xf32, #tpu.memory_space<vmem>>, %arg9: memref<8x1xf32, #tpu.memory_space<vmem>>, %arg10: memref<3x8xf32, #tpu.memory_space<vmem>>, %arg11: memref<3x3xf32, #tpu.memory_space<vmem>>, %arg12: memref<3x1xf32, #tpu.memory_space<vmem>>, %arg13: memref<3x1xf32, #tpu.memory_space<vmem>>, %arg14: memref<172x8xf32, #tpu.memory_space<vmem>>, %arg15: memref<1x8xf32, #tpu.memory_space<vmem>>, %arg16: memref<3x1xf32, #tpu.memory_space<vmem>>, %arg17: memref<3x1xf32, #tpu.memory_space<vmem>>, %arg18: memref<8x9xf32, #tpu.memory_space<vmem>>, %arg19: memref<3x9xf32, #tpu.memory_space<vmem>>, %arg20: memref<1x3xf32, #tpu.memory_space<vmem>>, %arg21: memref<9x3xf32, #tpu.memory_space<vmem>>, %arg22: memref<1x3xf32, #tpu.memory_space<vmem>>, %arg23: memref<1x8x64xf32, #tpu.memory_space<vmem>>, %arg24: memref<1x1x3xf32, #tpu.memory_space<vmem>>) attributes {dimension_semantics = [#tpu.dimension_semantics<parallel>], iteration_bounds = array<i64: 2>, scalar_prefetch = 0 : i64, scratch_operands = 0 : i64, tpu.core_type = #tpu.core_type<tc>, window_params = [{pipeline_mode = #tpu.pipeline_mode<synchronous>, transform_indices = @transform_0, window_bounds = array<i64: 1, 64, 724>}, {pipeline_mode = #tpu.pipeline_mode<synchronous>, transform_indices = @transform_1, window_bounds = array<i64: 1, 724>}, {pipeline_mode = #tpu.pipeline_mode<synchronous>, transform_indices = @transform_2, window_bounds = array<i64: 724, 344>}, {pipeline_mode = #tpu.pipeline_mode<synchronous>, transform_indices = @transform_3, window_bounds = array<i64: 344, 344>}, {pipeline_mode = #tpu.pipeline_mode<synchronous>, transform_indices = @transform_4, window_bounds = array<i64: 1, 344>}, {pipeline_mode = #tpu.pipeline_mode<synchronous>, transform_indices = @transform_5, window_bounds = array<i64: 344, 172>}, {pipeline_mode = #tpu.pipeline_mode<synchronous>, transform_indices = @transform_6, window_bounds = array<i64: 1, 172>}, {pipeline_mode = #tpu.pipeline_mode<synchronous>, transform_indices = @transform_7, window_bounds = array<i64: 8, 172>}, {pipeline_mode = #tpu.pipeline_mode<synchronous>, transform_indices = @transform_8, window_bounds = array<i64: 8, 1>}, {pipeline_mode = #tpu.pipeline_mode<synchronous>, transform_indices = @transform_9, window_bounds = array<i64: 3, 8>}, {pipeline_mode = #tpu.pipeline_mode<synchronous>, transform_indices = @transform_10, window_bounds = array<i64: 3, 3>}, {pipeline_mode = #tpu.pipeline_mode<synchronous>, transform_indices = @transform_11, window_bounds = array<i64: 3, 1>}, {pipeline_mode = #tpu.pipeline_mode<synchronous>, transform_indices = @transform_12, window_bounds = array<i64: 3, 1>}, {pipeline_mode = #tpu.pipeline_mode<synchronous>, transform_indices = @transform_13, window_bounds = array<i64: 172, 8>}, {pipeline_mode = #tpu.pipeline_mode<synchronous>, transform_indices = @transform_14, window_bounds = array<i64: 1, 8>}, {pipeline_mode = #tpu.pipeline_mode<synchronous>, transform_indices = @transform_15, window_bounds = array<i64: 3, 1>}, {pipeline_mode = #tpu.pipeline_mode<synchronous>, transform_indices = @transform_16, window_bounds = array<i64: 3, 1>}, {pipeline_mode = #tpu.pipeline_mode<synchronous>, transform_indices = @transform_17, window_bounds = array<i64: 8, 9>}, {pipeline_mode = #tpu.pipeline_mode<synchronous>, transform_indices = @transform_18, window_bounds = array<i64: 3, 9>}, {pipeline_mode = #tpu.pipeline_mode<synchronous>, transform_indices = @transform_19, window_bounds = array<i64: 1, 3>}, {pipeline_mode = #tpu.pipeline_mode<synchronous>, transform_indices = @transform_20, window_bounds = array<i64: 9, 3>}, {pipeline_mode = #tpu.pipeline_mode<synchronous>, transform_indices = @transform_21, window_bounds = array<i64: 1, 3>}, {transform_indices = @transform_22, window_bounds = array<i64: 1, 8, 64>}, {transform_indices = @transform_23, window_bounds = array<i64: 1, 1, 3>}]} {
    %c0 = arith.constant 0 : index
    %c0_0 = arith.constant 0 : index
    %c0_1 = arith.constant 0 : index
    %0 = vector.load %arg23[%c0, %c0_0, %c0_1] : memref<1x8x64xf32, #tpu.memory_space<vmem>>, vector<1x8x64xf32>
    %1 = vector.shape_cast %0 : vector<1x8x64xf32> to vector<8x64xf32>
    %c0_2 = arith.constant 0 : index
    %c0_3 = arith.constant 0 : index
    %c0_4 = arith.constant 0 : index
    %2 = vector.load %arg1[%c0_2, %c0_3, %c0_4] : memref<1x64x724xf32, #tpu.memory_space<vmem>>, vector<1x64x724xf32>
    %3 = vector.shape_cast %2 : vector<1x64x724xf32> to vector<64x724xf32>
    %cst = arith.constant dense<0.000000e+00> : vector<8x724xf32>
    %4 = tpu.matmul %1, %3, %cst {dimension_numbers = #tpu.dot_dimension_numbers<[1], [0], [0], [1], [0, 0, 1, 1], [], []>} : vector<8x64xf32>, vector<64x724xf32>, vector<8x724xf32> -> vector<8x724xf32>
    %c0_5 = arith.constant 0 : index
    %c0_6 = arith.constant 0 : index
    %5 = vector.load %arg2[%c0_5, %c0_6] : memref<1x724xf32, #tpu.memory_space<vmem>>, vector<1x724xf32>
    %6 = vector.broadcast %5 : vector<1x724xf32> to vector<8x724xf32>
    %7 = arith.addf %4, %6 : vector<8x724xf32>
    %8 = arith.mulf %7, %7 : vector<8x724xf32>
    %c0_7 = arith.constant 0 : index
    %c0_8 = arith.constant 0 : index
    %9 = vector.load %arg3[%c0_7, %c0_8] : memref<724x344xf32, #tpu.memory_space<vmem>>, vector<724x344xf32>
    %cst_9 = arith.constant dense<0.000000e+00> : vector<8x344xf32>
    %10 = tpu.matmul %8, %9, %cst_9 {dimension_numbers = #tpu.dot_dimension_numbers<[1], [0], [0], [1], [0, 0, 1, 1], [], []>} : vector<8x724xf32>, vector<724x344xf32>, vector<8x344xf32> -> vector<8x344xf32>
    %11 = math.log %10 : vector<8x344xf32>
    %c0_10 = arith.constant 0 : index
    %c0_11 = arith.constant 0 : index
    %12 = vector.load %arg4[%c0_10, %c0_11] : memref<344x344xf32, #tpu.memory_space<vmem>>, vector<344x344xf32>
    %cst_12 = arith.constant dense<0.000000e+00> : vector<8x344xf32>
    %13 = tpu.matmul %11, %12, %cst_12 {dimension_numbers = #tpu.dot_dimension_numbers<[1], [0], [0], [1], [0, 0, 1, 1], [], []>} : vector<8x344xf32>, vector<344x344xf32>, vector<8x344xf32> -> vector<8x344xf32>
    %c0_13 = arith.constant 0 : index
    %c0_14 = arith.constant 0 : index
    %14 = vector.load %arg5[%c0_13, %c0_14] : memref<1x344xf32, #tpu.memory_space<vmem>>, vector<1x344xf32>
    %15 = vector.broadcast %14 : vector<1x344xf32> to vector<8x344xf32>
    %16 = arith.addf %13, %15 : vector<8x344xf32>
    %cst_15 = arith.constant 0.000000e+00 : f32
    %17 = vector.broadcast %cst_15 : f32 to vector<8x344xf32>
    %18 = arith.cmpf ogt, %16, %17 : vector<8x344xf32>
    %cst_16 = arith.constant 0.00999999977 : f32
    %19 = vector.broadcast %cst_16 : f32 to vector<8x344xf32>
    %20 = arith.mulf %19, %16 : vector<8x344xf32>
    %21 = arith.select %18, %16, %20 : vector<8x344xi1>, vector<8x344xf32>
    %c0_17 = arith.constant 0 : index
    %c0_18 = arith.constant 0 : index
    %22 = vector.load %arg6[%c0_17, %c0_18] : memref<344x172xf32, #tpu.memory_space<vmem>>, vector<344x172xf32>
    %cst_19 = arith.constant dense<0.000000e+00> : vector<8x172xf32>
    %23 = tpu.matmul %21, %22, %cst_19 {dimension_numbers = #tpu.dot_dimension_numbers<[1], [0], [0], [1], [0, 0, 1, 1], [], []>} : vector<8x344xf32>, vector<344x172xf32>, vector<8x172xf32> -> vector<8x172xf32>
    %c0_20 = arith.constant 0 : index
    %c0_21 = arith.constant 0 : index
    %24 = vector.load %arg7[%c0_20, %c0_21] : memref<1x172xf32, #tpu.memory_space<vmem>>, vector<1x172xf32>
    %25 = vector.broadcast %24 : vector<1x172xf32> to vector<8x172xf32>
    %26 = arith.addf %23, %25 : vector<8x172xf32>
    %c0_22 = arith.constant 0 : index
    %c0_23 = arith.constant 0 : index
    %27 = vector.load %arg8[%c0_22, %c0_23] : memref<8x172xf32, #tpu.memory_space<vmem>>, vector<8x172xf32>
    %28 = arith.mulf %26, %27 : vector<8x172xf32>
    %c0_24 = arith.constant 0 : index
    %c0_25 = arith.constant 0 : index
    %29 = vector.load %arg9[%c0_24, %c0_25] : memref<8x1xf32, #tpu.memory_space<vmem>>, vector<8x1xf32>
    %30 = vector.broadcast %29 : vector<8x1xf32> to vector<8x172xf32>
    %31 = arith.subf %28, %30 : vector<8x172xf32>
    %cst_26 = arith.constant 0.000000e+00 : f32
    %32 = vector.broadcast %cst_26 : f32 to vector<8x172xf32>
    %33 = arith.maximumf %31, %32 : vector<8x172xf32>
    %c0_27 = arith.constant 0 : index
    %c0_28 = arith.constant 0 : index
    %34 = vector.load %arg10[%c0_27, %c0_28] : memref<3x8xf32, #tpu.memory_space<vmem>>, vector<3x8xf32>
    %cst_29 = arith.constant dense<0.000000e+00> : vector<3x172xf32>
    %35 = tpu.matmul %34, %33, %cst_29 {dimension_numbers = #tpu.dot_dimension_numbers<[1], [0], [0], [1], [0, 0, 1, 1], [], []>} : vector<3x8xf32>, vector<8x172xf32>, vector<3x172xf32> -> vector<3x172xf32>
    %cst_30 = arith.constant dense<0.000000e+00> : vector<3x3xf32>
    %36 = tpu.matmul %35, %35, %cst_30 {dimension_numbers = #tpu.dot_dimension_numbers<[1], [1], [0], [0], [0, 0, 1, 0], [], []>} : vector<3x172xf32>, vector<3x172xf32>, vector<3x3xf32> -> vector<3x3xf32>
    %c0_31 = arith.constant 0 : index
    %c0_32 = arith.constant 0 : index
    %37 = vector.load %arg11[%c0_31, %c0_32] : memref<3x3xf32, #tpu.memory_space<vmem>>, vector<3x3xf32>
    %38 = arith.mulf %36, %37 : vector<3x3xf32>
    %cst_33 = arith.constant 0.000000e+00 : f32
    %39 = vector.broadcast %cst_33 : f32 to vector<3x3xf32>
    %40 = arith.maximumf %38, %39 : vector<3x3xf32>
    %41 = tpu.iota {dimensions = array<i32: 0>} : vector<3x3xi32>
    %42 = tpu.iota {dimensions = array<i32: 1>} : vector<3x3xi32>
    %43 = arith.cmpi eq, %41, %42 : vector<3x3xi32>
    %44 = arith.extui %43 : vector<3x3xi1> to vector<3x3xi32>
    %45 = arith.sitofp %44 : vector<3x3xi32> to vector<3x3xf32>
    %46 = arith.addf %40, %45 : vector<3x3xf32>
    %cst_34 = arith.constant dense<0.000000e+00> : vector<3xf32>
    %47 = vector.multi_reduction <add>, %46, %cst_34 [1] : vector<3x3xf32> to vector<3xf32>
    %48 = vector.shape_cast %47 : vector<3xf32> to vector<3x1xf32>
    %cst_35 = arith.constant 0.000000e+00 : f32
    %49 = vector.broadcast %cst_35 : f32 to vector<3x1xf32>
    %50 = arith.cmpf oeq, %48, %49 : vector<3x1xf32>
    %51 = arith.extui %50 : vector<3x1xi1> to vector<3x1xi32>
    %52 = arith.sitofp %51 : vector<3x1xi32> to vector<3x1xf32>
    %53 = arith.addf %48, %52 : vector<3x1xf32>
    %cst_36 = arith.constant dense<0.000000e+00> : vector<3xf32>
    %54 = vector.multi_reduction <add>, %46, %cst_36 [0] : vector<3x3xf32> to vector<3xf32>
    %55 = vector.shape_cast %54 : vector<3xf32> to vector<1x3xf32>
    %cst_37 = arith.constant 0.000000e+00 : f32
    %56 = vector.broadcast %cst_37 : f32 to vector<1x3xf32>
    %57 = arith.cmpf oeq, %55, %56 : vector<1x3xf32>
    %58 = arith.extui %57 : vector<1x3xi1> to vector<1x3xi32>
    %59 = arith.sitofp %58 : vector<1x3xi32> to vector<1x3xf32>
    %60 = arith.addf %55, %59 : vector<1x3xf32>
    %61 = math.rsqrt %53 : vector<3x1xf32>
    %62 = vector.broadcast %61 : vector<3x1xf32> to vector<3x3xf32>
    %63 = arith.mulf %46, %62 : vector<3x3xf32>
    %64 = math.rsqrt %60 : vector<1x3xf32>
    %65 = vector.broadcast %64 : vector<1x3xf32> to vector<3x3xf32>
    %66 = arith.mulf %63, %65 : vector<3x3xf32>
    %c0_38 = arith.constant 0 : index
    %c0_39 = arith.constant 0 : index
    %67 = vector.load %arg12[%c0_38, %c0_39] : memref<3x1xf32, #tpu.memory_space<vmem>>, vector<3x1xf32>
    %68 = vector.broadcast %67 : vector<3x1xf32> to vector<3x172xf32>
    %69 = arith.mulf %35, %68 : vector<3x172xf32>
    %c0_40 = arith.constant 0 : index
    %c0_41 = arith.constant 0 : index
    %70 = vector.load %arg13[%c0_40, %c0_41] : memref<3x1xf32, #tpu.memory_space<vmem>>, vector<3x1xf32>
    %71 = vector.broadcast %70 : vector<3x1xf32> to vector<3x172xf32>
    %72 = arith.addf %69, %71 : vector<3x172xf32>
    %c0_42 = arith.constant 0 : index
    %c0_43 = arith.constant 0 : index
    %73 = vector.load %arg14[%c0_42, %c0_43] : memref<172x8xf32, #tpu.memory_space<vmem>>, vector<172x8xf32>
    %cst_44 = arith.constant dense<0.000000e+00> : vector<3x8xf32>
    %74 = tpu.matmul %72, %73, %cst_44 {dimension_numbers = #tpu.dot_dimension_numbers<[1], [0], [0], [1], [0, 0, 1, 1], [], []>} : vector<3x172xf32>, vector<172x8xf32>, vector<3x8xf32> -> vector<3x8xf32>
    %c0_45 = arith.constant 0 : index
    %c0_46 = arith.constant 0 : index
    %75 = vector.load %arg15[%c0_45, %c0_46] : memref<1x8xf32, #tpu.memory_space<vmem>>, vector<1x8xf32>
    %76 = vector.broadcast %75 : vector<1x8xf32> to vector<3x8xf32>
    %77 = arith.subf %74, %76 : vector<3x8xf32>
    %cst_47 = arith.constant dense<0.000000e+00> : vector<3x8xf32>
    %78 = tpu.matmul %66, %77, %cst_47 {dimension_numbers = #tpu.dot_dimension_numbers<[1], [0], [0], [1], [0, 0, 1, 1], [], []>} : vector<3x3xf32>, vector<3x8xf32>, vector<3x8xf32> -> vector<3x8xf32>
    %cst_48 = arith.constant 0.000000e+00 : f32
    %79 = vector.broadcast %cst_48 : f32 to vector<3x8xf32>
    %80 = arith.maximumf %78, %79 : vector<3x8xf32>
    %c0_49 = arith.constant 0 : index
    %c0_50 = arith.constant 0 : index
    %81 = vector.load %arg16[%c0_49, %c0_50] : memref<3x1xf32, #tpu.memory_space<vmem>>, vector<3x1xf32>
    %82 = vector.broadcast %81 : vector<3x1xf32> to vector<3x8xf32>
    %83 = arith.mulf %80, %82 : vector<3x8xf32>
    %c0_51 = arith.constant 0 : index
    %c0_52 = arith.constant 0 : index
    %84 = vector.load %arg17[%c0_51, %c0_52] : memref<3x1xf32, #tpu.memory_space<vmem>>, vector<3x1xf32>
    %85 = vector.broadcast %84 : vector<3x1xf32> to vector<3x8xf32>
    %86 = arith.addf %83, %85 : vector<3x8xf32>
    %c0_53 = arith.constant 0 : index
    %c0_54 = arith.constant 0 : index
    %87 = vector.load %arg18[%c0_53, %c0_54] : memref<8x9xf32, #tpu.memory_space<vmem>>, vector<8x9xf32>
    %cst_55 = arith.constant dense<0.000000e+00> : vector<3x9xf32>
    %88 = tpu.matmul %86, %87, %cst_55 {dimension_numbers = #tpu.dot_dimension_numbers<[1], [0], [0], [1], [0, 0, 1, 1], [], []>} : vector<3x8xf32>, vector<8x9xf32>, vector<3x9xf32> -> vector<3x9xf32>
    %c0_56 = arith.constant 0 : index
    %c0_57 = arith.constant 0 : index
    %89 = vector.load %arg19[%c0_56, %c0_57] : memref<3x9xf32, #tpu.memory_space<vmem>>, vector<3x9xf32>
    %90 = arith.mulf %88, %89 : vector<3x9xf32>
    %c0_58 = arith.constant 0 : index
    %c0_59 = arith.constant 0 : index
    %91 = vector.load %arg20[%c0_58, %c0_59] : memref<1x3xf32, #tpu.memory_space<vmem>>, vector<1x3xf32>
    %cst_60 = arith.constant dense<0.000000e+00> : vector<1x9xf32>
    %92 = tpu.matmul %91, %90, %cst_60 {dimension_numbers = #tpu.dot_dimension_numbers<[1], [0], [0], [1], [0, 0, 1, 1], [], []>} : vector<1x3xf32>, vector<3x9xf32>, vector<1x9xf32> -> vector<1x9xf32>
    %c0_61 = arith.constant 0 : index
    %c0_62 = arith.constant 0 : index
    %93 = vector.load %arg21[%c0_61, %c0_62] : memref<9x3xf32, #tpu.memory_space<vmem>>, vector<9x3xf32>
    %cst_63 = arith.constant dense<0.000000e+00> : vector<1x3xf32>
    %94 = tpu.matmul %92, %93, %cst_63 {dimension_numbers = #tpu.dot_dimension_numbers<[1], [0], [0], [1], [0, 0, 1, 1], [], []>} : vector<1x9xf32>, vector<9x3xf32>, vector<1x3xf32> -> vector<1x3xf32>
    %c0_64 = arith.constant 0 : index
    %c0_65 = arith.constant 0 : index
    %95 = vector.load %arg22[%c0_64, %c0_65] : memref<1x3xf32, #tpu.memory_space<vmem>>, vector<1x3xf32>
    %96 = arith.addf %94, %95 : vector<1x3xf32>
    %c0_66 = arith.constant 0 : index
    %c0_67 = arith.constant 0 : index
    %c0_68 = arith.constant 0 : index
    %97 = vector.load %arg24[%c0_66, %c0_67, %c0_68] : memref<1x1x3xf32, #tpu.memory_space<vmem>>, vector<1x1x3xf32>
    %98 = vector.shape_cast %97 : vector<1x1x3xf32> to vector<1x3xf32>
    %99 = vector.shape_cast %96 : vector<1x3xf32> to vector<1x1x3xf32>
    tpu.vector_store %arg24[%c0_66, %c0_67, %c0_68], %99 {strides = array<i32>} : memref<1x1x3xf32, #tpu.memory_space<vmem>>, vector<1x1x3xf32>,
    return
  }
  func.func @transform_0(%arg0: i32) -> (i32, i32, i32) {
    %c0_i32 = arith.constant 0 : i32
    %c0_i32_0 = arith.constant 0 : i32
    %c0_i32_1 = arith.constant 0 : i32
    %c0_i32_2 = arith.constant 0 : i32
    return %c0_i32, %c0_i32_0, %c0_i32_1 : i32, i32, i32
  }
  func.func @transform_1(%arg0: i32) -> (i32, i32) {
    %c0_i32 = arith.constant 0 : i32
    %c0_i32_0 = arith.constant 0 : i32
    %c0_i32_1 = arith.constant 0 : i32
    return %c0_i32, %c0_i32_0 : i32, i32
  }
  func.func @transform_2(%arg0: i32) -> (i32, i32) {
    %c0_i32 = arith.constant 0 : i32
    %c0_i32_0 = arith.constant 0 : i32
    %c0_i32_1 = arith.constant 0 : i32
    return %c0_i32, %c0_i32_0 : i32, i32
  }
  func.func @transform_3(%arg0: i32) -> (i32, i32) {
    %c0_i32 = arith.constant 0 : i32
    %c0_i32_0 = arith.constant 0 : i32
    %c0_i32_1 = arith.constant 0 : i32
    return %c0_i32, %c0_i32_0 : i32, i32
  }
  func.func @transform_4(%arg0: i32) -> (i32, i32) {
    %c0_i32 = arith.constant 0 : i32
    %c0_i32_0 = arith.constant 0 : i32
    %c0_i32_1 = arith.constant 0 : i32
    return %c0_i32, %c0_i32_0 : i32, i32
  }
  func.func @transform_5(%arg0: i32) -> (i32, i32) {
    %c0_i32 = arith.constant 0 : i32
    %c0_i32_0 = arith.constant 0 : i32
    %c0_i32_1 = arith.constant 0 : i32
    return %c0_i32, %c0_i32_0 : i32, i32
  }
  func.func @transform_6(%arg0: i32) -> (i32, i32) {
    %c0_i32 = arith.constant 0 : i32
    %c0_i32_0 = arith.constant 0 : i32
    %c0_i32_1 = arith.constant 0 : i32
    return %c0_i32, %c0_i32_0 : i32, i32
  }
  func.func @transform_7(%arg0: i32) -> (i32, i32) {
    %c0_i32 = arith.constant 0 : i32
    %c0_i32_0 = arith.constant 0 : i32
    %c0_i32_1 = arith.constant 0 : i32
    return %c0_i32, %c0_i32_0 : i32, i32
  }
  func.func @transform_8(%arg0: i32) -> (i32, i32) {
    %c0_i32 = arith.constant 0 : i32
    %c0_i32_0 = arith.constant 0 : i32
    %c0_i32_1 = arith.constant 0 : i32
    return %c0_i32, %c0_i32_0 : i32, i32
  }
  func.func @transform_9(%arg0: i32) -> (i32, i32) {
    %c0_i32 = arith.constant 0 : i32
    %c0_i32_0 = arith.constant 0 : i32
    %c0_i32_1 = arith.constant 0 : i32
    return %c0_i32, %c0_i32_0 : i32, i32
  }
  func.func @transform_10(%arg0: i32) -> (i32, i32) {
    %c0_i32 = arith.constant 0 : i32
    %c0_i32_0 = arith.constant 0 : i32
    %c0_i32_1 = arith.constant 0 : i32
    return %c0_i32, %c0_i32_0 : i32, i32
  }
  func.func @transform_11(%arg0: i32) -> (i32, i32) {
    %c0_i32 = arith.constant 0 : i32
    %c0_i32_0 = arith.constant 0 : i32
    %c0_i32_1 = arith.constant 0 : i32
    return %c0_i32, %c0_i32_0 : i32, i32
  }
  func.func @transform_12(%arg0: i32) -> (i32, i32) {
    %c0_i32 = arith.constant 0 : i32
    %c0_i32_0 = arith.constant 0 : i32
    %c0_i32_1 = arith.constant 0 : i32
    return %c0_i32, %c0_i32_0 : i32, i32
  }
  func.func @transform_13(%arg0: i32) -> (i32, i32) {
    %c0_i32 = arith.constant 0 : i32
    %c0_i32_0 = arith.constant 0 : i32
    %c0_i32_1 = arith.constant 0 : i32
    return %c0_i32, %c0_i32_0 : i32, i32
  }
  func.func @transform_14(%arg0: i32) -> (i32, i32) {
    %c0_i32 = arith.constant 0 : i32
    %c0_i32_0 = arith.constant 0 : i32
    %c0_i32_1 = arith.constant 0 : i32
    return %c0_i32, %c0_i32_0 : i32, i32
  }
  func.func @transform_15(%arg0: i32) -> (i32, i32) {
    %c0_i32 = arith.constant 0 : i32
    %c0_i32_0 = arith.constant 0 : i32
    %c0_i32_1 = arith.constant 0 : i32
    return %c0_i32, %c0_i32_0 : i32, i32
  }
  func.func @transform_16(%arg0: i32) -> (i32, i32) {
    %c0_i32 = arith.constant 0 : i32
    %c0_i32_0 = arith.constant 0 : i32
    %c0_i32_1 = arith.constant 0 : i32
    return %c0_i32, %c0_i32_0 : i32, i32
  }
  func.func @transform_17(%arg0: i32) -> (i32, i32) {
    %c0_i32 = arith.constant 0 : i32
    %c0_i32_0 = arith.constant 0 : i32
    %c0_i32_1 = arith.constant 0 : i32
    return %c0_i32, %c0_i32_0 : i32, i32
  }
  func.func @transform_18(%arg0: i32) -> (i32, i32) {
    %c0_i32 = arith.constant 0 : i32
    %c0_i32_0 = arith.constant 0 : i32
    %c0_i32_1 = arith.constant 0 : i32
    return %c0_i32, %c0_i32_0 : i32, i32
  }
  func.func @transform_19(%arg0: i32) -> (i32, i32) {
    %c0_i32 = arith.constant 0 : i32
    %c0_i32_0 = arith.constant 0 : i32
    %c0_i32_1 = arith.constant 0 : i32
    return %c0_i32, %c0_i32_0 : i32, i32
  }
  func.func @transform_20(%arg0: i32) -> (i32, i32) {
    %c0_i32 = arith.constant 0 : i32
    %c0_i32_0 = arith.constant 0 : i32
    %c0_i32_1 = arith.constant 0 : i32
    return %c0_i32, %c0_i32_0 : i32, i32
  }
  func.func @transform_21(%arg0: i32) -> (i32, i32) {
    %c0_i32 = arith.constant 0 : i32
    %c0_i32_0 = arith.constant 0 : i32
    %c0_i32_1 = arith.constant 0 : i32
    return %c0_i32, %c0_i32_0 : i32, i32
  }
  func.func @transform_22(%arg0: i32) -> (i32, i32, i32) {
    %c0_i32 = arith.constant 0 : i32
    %c0_i32_0 = arith.constant 0 : i32
    %c0_i32_1 = arith.constant 0 : i32
    return %c0_i32, %arg0, %c0_i32_0 : i32, i32, i32
  }
  func.func @transform_23(%arg0: i32) -> (i32, i32, i32) {
    %c0_i32 = arith.constant 0 : i32
    %c0_i32_0 = arith.constant 0 : i32
    %c0_i32_1 = arith.constant 0 : i32
    return %arg0, %c0_i32, %c0_i32_0 : i32, i32, i32
  }
}

</mosaic_0001>

<llo_original>
// kernel: tile.9
$region0: #{tile.9}
  %s0 = inlined_call_operand.vmem [shape: f32[3,3,3], index: 0, kind: input, shape index: {}]
  %s1 = inlined_call_operand.vmem [shape: f32[9,3], index: 1, kind: output, shape index: {}]
  $region1: #{tile.9} parent=0
    #allocation0 [shape = 'u8[4096]{0}', space=vmem, size = 0x1000, scoped, tag = 'scoped mem for output reshape']
    #allocation1 [shape = 'u8[12288]{0}', space=vmem, size = 0x3000, scoped, tag = 'scoped mem for input reshape']
    %s3 = sshll.u32 1, 4
    %s4 = ssub.s32 %s3, 1
    %s5 = smul.addr 4, 2
    %s6 = scalar_lea.vmem %s0, %s5
    %v7 = vld [vmem:[%s6] sm:%s4]
    %s8 = scalar_lea.vmem [#allocation1], 16
    %9 = vst [vmem:[%s8] sm:%s4] %v7
    %s10 = scalar_lea.vmem %s0, 4
    %v11 = vld [vmem:[%s10] sm:%s4]
    %s12 = scalar_lea.vmem [#allocation1], 8
    %13 = vst [vmem:[%s12] sm:%s4] %v11
    %v14 = vld [vmem:[%s0] sm:%s4]
    %15 = vst [vmem:[#allocation1] sm:%s4] %v14
    %v16 = vld [vmem:[#allocation1] ss:$8 sm:$0x7]
    %vm17 = vcmask 23552
    %18 = vst.msk [vmem:[#allocation0] sm:$0x7] %vm17, %v16
    %s19 = scalar_lea.vmem [#allocation1], 2
    %v20 = vld [vmem:[%s19] ss:$8 sm:$0x7]
    %21 = vrot.lane.b32.xlu0 %v20, 6
    %v22 = vpop.permute.xlu0 %21
    %vm23 = vcmask 72752
    %24 = vst.msk [vmem:[#allocation0] sm:$0x7] %vm23, %v22
    %s25 = scalar_lea.vmem [#allocation1], 1
    %v26 = vld [vmem:[%s25] ss:$8 sm:$0x7]
    %27 = vrot.lane.b32.xlu0 %v26, 3
    %v28 = vpop.permute.xlu0 %27
    %vm29 = vcmask 48152
    %30 = vst.msk [vmem:[#allocation0] sm:$0x7] %vm29, %v28
    %s32 = sshll.u32 1, 4
    %s33 = ssub.s32 %s32, 1
    %v35 = vld [vmem:[#allocation0] sm:%s33]
    %s36 = sshll.u32 1, 4
    %s37 = ssub.s32 %s36, 1
    %38 = vst [vmem:[%s1] sm:%s37] %v35

// kernel: _lambda_.1
$region0: #{_lambda_.1}
  #allocation0 [shape = 'u32[]', space=smem, size = 0x4, offset = 0x4, fixed_abs, tag = 'smem constant byte address 0x4 - core index']
  #allocation1 [shape = 'u32[144,128]{1,0:T(1,128)}', space=vmem, size = 0x12000, scoped, tag = 'internal scratch']
  %s0 = inlined_call_operand.vmem [shape: f32[1,64,724], index: 0, kind: input, shape index: {}]
  %s1 = inlined_call_operand.vmem [shape: f32[1,724], index: 1, kind: input, shape index: {}]
  %s2 = inlined_call_operand.vmem [shape: f32[724,344], index: 2, kind: input, shape index: {}]
  %s3 = inlined_call_operand.vmem [shape: f32[344,344], index: 3, kind: input, shape index: {}]
  %s4 = inlined_call_operand.vmem [shape: f32[1,344], index: 4, kind: input, shape index: {}]
  %s5 = inlined_call_operand.vmem [shape: f32[344,172], index: 5, kind: input, shape index: {}]
  %s6 = inlined_call_operand.vmem [shape: f32[1,172], index: 6, kind: input, shape index: {}]
  %s7 = inlined_call_operand.vmem [shape: f32[8,172], index: 7, kind: input, shape index: {}]
  %s8 = inlined_call_operand.vmem [shape: f32[8,1], index: 8, kind: input, shape index: {}]
  %s9 = inlined_call_operand.vmem [shape: f32[3,8], index: 9, kind: input, shape index: {}]
  %s10 = inlined_call_operand.vmem [shape: f32[3,3], index: 10, kind: input, shape index: {}]
  %s11 = inlined_call_operand.vmem [shape: f32[3,1], index: 11, kind: input, shape index: {}]
  %s12 = inlined_call_operand.vmem [shape: f32[3,1], index: 12, kind: input, shape index: {}]
  %s13 = inlined_call_operand.vmem [shape: f32[172,8], index: 13, kind: input, shape index: {}]
  %s14 = inlined_call_operand.vmem [shape: f32[1,8], index: 14, kind: input, shape index: {}]
  %s15 = inlined_call_operand.vmem [shape: f32[3,1], index: 15, kind: input, shape index: {}]
  %s16 = inlined_call_operand.vmem [shape: f32[3,1], index: 16, kind: input, shape index: {}]
  %s17 = inlined_call_operand.vmem [shape: f32[8,9], index: 17, kind: input, shape index: {}]
  %s18 = inlined_call_operand.vmem [shape: f32[3,9], index: 18, kind: input, shape index: {}]
  %s19 = inlined_call_operand.vmem [shape: f32[1,3], index: 19, kind: input, shape index: {}]
  %s20 = inlined_call_operand.vmem [shape: f32[9,3], index: 20, kind: input, shape index: {}]
  %s21 = inlined_call_operand.vmem [shape: f32[1,3], index: 21, kind: input, shape index: {}]
  %s22 = inlined_call_operand.vmem [shape: f32[1,16,64], index: 22, kind: input, shape index: {}]
  %s23 = inlined_call_operand.hbm [shape: f32[2,1,3], index: 23, kind: output, shape index: {}]
  %s24 = sld [smem:[#allocation0]]
  $region125: #{_lambda_.1} parent=0
    _
  %s26 = ssub.s32 1, %s24
  %s27 = scalar_select 0, %s26, %s24
  $region1: #{_lambda_.1} parent=0
    #allocation2 [shape = 'u8[1024]{0}', space=vmem, size = 0x400, scoped, tag = 'output window, operand 0']
    #allocation3 [shape = 's32[2]{0}', space=sflag, size = 0x8, scoped, tag = 'scoped memory for _lambda_.1']
    %28 = vsyncpa [#allocation3], 0
    %s29 = scalar_lea.sflag [#allocation3], 1
    %30 = vsyncpa %s29, 0
    loop: start=0, step=1, limit=4
    $region2: #{_lambda_.1} parent=1 // loop_pre_header
      _
    $region3: #{_lambda_.1} parent=1 // loop_header
      %s32 = sphi 0, %s36
      %p33 = scmp.ge.s32.totalorder %s32, 4
      %s40 = sphi 0, %s40
      %s42 = sphi 0, %s40
      %s43 = sphi 0, %s42
      %s57 = sphi 0, %s43
      %s61 = sphi 0, %s61
      %s63 = sphi 0, %s61
      %s64 = sphi 0, %s63
      %s78 = sphi 0, %s64
      %s82 = sphi 0, %s82
      %s84 = sphi 0, %s82
      %s85 = sphi 0, %s84
      %s99 = sphi 0, %s85
      %s103 = sphi 0, %s103
      %s105 = sphi 0, %s103
      %s106 = sphi 0, %s105
      %s120 = sphi 0, %s106
      %s124 = sphi 0, %s124
      %s126 = sphi 0, %s124
      %s127 = sphi 0, %s126
      %s141 = sphi 0, %s127
      %s145 = sphi 0, %s145
      %s147 = sphi 0, %s145
      %s148 = sphi 0, %s147
      %s162 = sphi 0, %s148
      %s166 = sphi 0, %s166
      %s168 = sphi 0, %s166
      %s169 = sphi 0, %s168
      %s183 = sphi 0, %s169
      %s187 = sphi 0, %s187
      %s189 = sphi 0, %s187
      %s190 = sphi 0, %s189
      %s204 = sphi 0, %s190
      %s208 = sphi 0, %s208
      %s210 = sphi 0, %s208
      %s211 = sphi 0, %s210
      %s225 = sphi 0, %s211
      %s229 = sphi 0, %s229
      %s231 = sphi 0, %s229
      %s232 = sphi 0, %s231
      %s246 = sphi 0, %s232
      %s250 = sphi 0, %s250
      %s252 = sphi 0, %s250
      %s253 = sphi 0, %s252
      %s267 = sphi 0, %s253
      %s271 = sphi 0, %s271
      %s273 = sphi 0, %s271
      %s274 = sphi 0, %s273
      %s288 = sphi 0, %s274
      %s292 = sphi 0, %s292
      %s294 = sphi 0, %s292
      %s295 = sphi 0, %s294
      %s309 = sphi 0, %s295
      %s313 = sphi 0, %s313
      %s315 = sphi 0, %s313
      %s316 = sphi 0, %s315
      %s330 = sphi 0, %s316
      %s334 = sphi 0, %s334
      %s336 = sphi 0, %s334
      %s337 = sphi 0, %s336
      %s351 = sphi 0, %s337
      %s355 = sphi 0, %s355
      %s357 = sphi 0, %s355
      %s358 = sphi 0, %s357
      %s372 = sphi 0, %s358
      %s376 = sphi 0, %s376
      %s378 = sphi 0, %s376
      %s379 = sphi 0, %s378
      %s393 = sphi 0, %s379
      %s397 = sphi 0, %s397
      %s399 = sphi 0, %s397
      %s400 = sphi 0, %s399
      %s414 = sphi 0, %s400
      %s418 = sphi 0, %s418
      %s420 = sphi 0, %s418
      %s421 = sphi 0, %s420
      %s435 = sphi 0, %s421
      %s439 = sphi 0, %s439
      %s441 = sphi 0, %s439
      %s442 = sphi 0, %s441
      %s456 = sphi 0, %s442
      %s460 = sphi 0, %s460
      %s462 = sphi 0, %s460
      %s463 = sphi 0, %s462
      %s477 = sphi 0, %s463
      %s481 = sphi 0, %s481
      %s483 = sphi 0, %s481
      %s484 = sphi 0, %s483
      %s498 = sphi 0, %s484
      %s504 = sphi 0, %s506
      %s507 = sphi 0, %s504
      %s508 = sphi 0, %s507
      %s524 = sphi 0, %s508
      %s530 = sphi 0, %s532
      %s533 = sphi 0, %s530
      %s534 = sphi 0, %s533
      %s550 = sphi 0, %s534
    $region4: #{_lambda_.1} parent=1 // loop_header_branch
      %35 = sbr.rel (%p33) target = $region8
    $region5: #{_lambda_.1} parent=1 // loop_body
      %s37 = ssub.s32 %s32, 1
      %s38 = ssub.s32 %s32, 2
      %s39 = sadd.s32 %s32, 1
      %s41 = sadd.s32 %s40, 1
      %p44 = scmp.eq.s32.totalorder %s32, 1
      %p45 = scmp.ne.s32.totalorder %s40, %s42
      %p46 = scmp.eq.s32.totalorder %s32, 0
      %p47 = por %p45, %p46
      %p48 = scmp.ne.s32.totalorder %s40, %s42
      %p49 = scmp.eq.s32.totalorder %s37, 1
      %p50 = por %p48, %p49
      %p51 = scmp.ne.s32.totalorder %s42, %s43
      %p52 = scmp.eq.s32.totalorder %s37, 0
      %p53 = por %p51, %p52
      %p54 = scmp.ne.s32.totalorder %s42, %s43
      %p55 = scmp.eq.s32.totalorder %s38, 1
      %p56 = por %p54, %p55
      %p58 = scmp.ne.s32.totalorder %s43, %s57
      %p59 = scmp.eq.s32.totalorder %s38, 0
      %p60 = por %p58, %p59
      %s62 = sadd.s32 %s61, 1
      %p65 = scmp.eq.s32.totalorder %s32, 1
      %p66 = scmp.ne.s32.totalorder %s61, %s63
      %p67 = scmp.eq.s32.totalorder %s32, 0
      %p68 = por %p66, %p67
      %p69 = scmp.ne.s32.totalorder %s61, %s63
      %p70 = scmp.eq.s32.totalorder %s37, 1
      %p71 = por %p69, %p70
      %p72 = scmp.ne.s32.totalorder %s63, %s64
      %p73 = scmp.eq.s32.totalorder %s37, 0
      %p74 = por %p72, %p73
      %p75 = scmp.ne.s32.totalorder %s63, %s64
      %p76 = scmp.eq.s32.totalorder %s38, 1
      %p77 = por %p75, %p76
      %p79 = scmp.ne.s32.totalorder %s64, %s78
      %p80 = scmp.eq.s32.totalorder %s38, 0
      %p81 = por %p79, %p80
      %s83 = sadd.s32 %s82, 1
      %p86 = scmp.eq.s32.totalorder %s32, 1
      %p87 = scmp.ne.s32.totalorder %s82, %s84
      %p88 = scmp.eq.s32.totalorder %s32, 0
      %p89 = por %p87, %p88
      %p90 = scmp.ne.s32.totalorder %s82, %s84
      %p91 = scmp.eq.s32.totalorder %s37, 1
      %p92 = por %p90, %p91
      %p93 = scmp.ne.s32.totalorder %s84, %s85
      %p94 = scmp.eq.s32.totalorder %s37, 0
      %p95 = por %p93, %p94
      %p96 = scmp.ne.s32.totalorder %s84, %s85
      %p97 = scmp.eq.s32.totalorder %s38, 1
      %p98 = por %p96, %p97
      %p100 = scmp.ne.s32.totalorder %s85, %s99
      %p101 = scmp.eq.s32.totalorder %s38, 0
      %p102 = por %p100, %p101
      %s104 = sadd.s32 %s103, 1
      %p107 = scmp.eq.s32.totalorder %s32, 1
      %p108 = scmp.ne.s32.totalorder %s103, %s105
      %p109 = scmp.eq.s32.totalorder %s32, 0
      %p110 = por %p108, %p109
      %p111 = scmp.ne.s32.totalorder %s103, %s105
      %p112 = scmp.eq.s32.totalorder %s37, 1
      %p113 = por %p111, %p112
      %p114 = scmp.ne.s32.totalorder %s105, %s106
      %p115 = scmp.eq.s32.totalorder %s37, 0
      %p116 = por %p114, %p115
      %p117 = scmp.ne.s32.totalorder %s105, %s106
      %p118 = scmp.eq.s32.totalorder %s38, 1
      %p119 = por %p117, %p118
      %p121 = scmp.ne.s32.totalorder %s106, %s120
      %p122 = scmp.eq.s32.totalorder %s38, 0
      %p123 = por %p121, %p122
      %s125 = sadd.s32 %s124, 1
      %p128 = scmp.eq.s32.totalorder %s32, 1
      %p129 = scmp.ne.s32.totalorder %s124, %s126
      %p130 = scmp.eq.s32.totalorder %s32, 0
      %p131 = por %p129, %p130
      %p132 = scmp.ne.s32.totalorder %s124, %s126
      %p133 = scmp.eq.s32.totalorder %s37, 1
      %p134 = por %p132, %p133
      %p135 = scmp.ne.s32.totalorder %s126, %s127
      %p136 = scmp.eq.s32.totalorder %s37, 0
      %p137 = por %p135, %p136
      %p138 = scmp.ne.s32.totalorder %s126, %s127
      %p139 = scmp.eq.s32.totalorder %s38, 1
      %p140 = por %p138, %p139
      %p142 = scmp.ne.s32.totalorder %s127, %s141
      %p143 = scmp.eq.s32.totalorder %s38, 0
      %p144 = por %p142, %p143
      %s146 = sadd.s32 %s145, 1
      %p149 = scmp.eq.s32.totalorder %s32, 1
      %p150 = scmp.ne.s32.totalorder %s145, %s147
      %p151 = scmp.eq.s32.totalorder %s32, 0
      %p152 = por %p150, %p151
      %p153 = scmp.ne.s32.totalorder %s145, %s147
      %p154 = scmp.eq.s32.totalorder %s37, 1
      %p155 = por %p153, %p154
      %p156 = scmp.ne.s32.totalorder %s147, %s148
      %p157 = scmp.eq.s32.totalorder %s37, 0
      %p158 = por %p156, %p157
      %p159 = scmp.ne.s32.totalorder %s147, %s148
      %p160 = scmp.eq.s32.totalorder %s38, 1
      %p161 = por %p159, %p160
      %p163 = scmp.ne.s32.totalorder %s148, %s162
      %p164 = scmp.eq.s32.totalorder %s38, 0
      %p165 = por %p163, %p164
      %s167 = sadd.s32 %s166, 1
      %p170 = scmp.eq.s32.totalorder %s32, 1
      %p171 = scmp.ne.s32.totalorder %s166, %s168
      %p172 = scmp.eq.s32.totalorder %s32, 0
      %p173 = por %p171, %p172
      %p174 = scmp.ne.s32.totalorder %s166, %s168
      %p175 = scmp.eq.s32.totalorder %s37, 1
      %p176 = por %p174, %p175
      %p177 = scmp.ne.s32.totalorder %s168, %s169
      %p178 = scmp.eq.s32.totalorder %s37, 0
      %p179 = por %p177, %p178
      %p180 = scmp.ne.s32.totalorder %s168, %s169
      %p181 = scmp.eq.s32.totalorder %s38, 1
      %p182 = por %p180, %p181
      %p184 = scmp.ne.s32.totalorder %s169, %s183
      %p185 = scmp.eq.s32.totalorder %s38, 0
      %p186 = por %p184, %p185
      %s188 = sadd.s32 %s187, 1
      %p191 = scmp.eq.s32.totalorder %s32, 1
      %p192 = scmp.ne.s32.totalorder %s187, %s189
      %p193 = scmp.eq.s32.totalorder %s32, 0
      %p194 = por %p192, %p193
      %p195 = scmp.ne.s32.totalorder %s187, %s189
      %p196 = scmp.eq.s32.totalorder %s37, 1
      %p197 = por %p195, %p196
      %p198 = scmp.ne.s32.totalorder %s189, %s190
      %p199 = scmp.eq.s32.totalorder %s37, 0
      %p200 = por %p198, %p199
      %p201 = scmp.ne.s32.totalorder %s189, %s190
      %p202 = scmp.eq.s32.totalorder %s38, 1
      %p203 = por %p201, %p202
      %p205 = scmp.ne.s32.totalorder %s190, %s204
      %p206 = scmp.eq.s32.totalorder %s38, 0
      %p207 = por %p205, %p206
      %s209 = sadd.s32 %s208, 1
      %p212 = scmp.eq.s32.totalorder %s32, 1
      %p213 = scmp.ne.s32.totalorder %s208, %s210
      %p214 = scmp.eq.s32.totalorder %s32, 0
      %p215 = por %p213, %p214
      %p216 = scmp.ne.s32.totalorder %s208, %s210
      %p217 = scmp.eq.s32.totalorder %s37, 1
      %p218 = por %p216, %p217
      %p219 = scmp.ne.s32.totalorder %s210, %s211
      %p220 = scmp.eq.s32.totalorder %s37, 0
      %p221 = por %p219, %p220
      %p222 = scmp.ne.s32.totalorder %s210, %s211
      %p223 = scmp.eq.s32.totalorder %s38, 1
      %p224 = por %p222, %p223
      %p226 = scmp.ne.s32.totalorder %s211, %s225
      %p227 = scmp.eq.s32.totalorder %s38, 0
      %p228 = por %p226, %p227
      %s230 = sadd.s32 %s229, 1
      %p233 = scmp.eq.s32.totalorder %s32, 1
      %p234 = scmp.ne.s32.totalorder %s229, %s231
      %p235 = scmp.eq.s32.totalorder %s32, 0
      %p236 = por %p234, %p235
      %p237 = scmp.ne.s32.totalorder %s229, %s231
      %p238 = scmp.eq.s32.totalorder %s37, 1
      %p239 = por %p237, %p238
      %p240 = scmp.ne.s32.totalorder %s231, %s232
      %p241 = scmp.eq.s32.totalorder %s37, 0
      %p242 = por %p240, %p241
      %p243 = scmp.ne.s32.totalorder %s231, %s232
      %p244 = scmp.eq.s32.totalorder %s38, 1
      %p245 = por %p243, %p244
      %p247 = scmp.ne.s32.totalorder %s232, %s246
      %p248 = scmp.eq.s32.totalorder %s38, 0
      %p249 = por %p247, %p248
      %s251 = sadd.s32 %s250, 1
      %p254 = scmp.eq.s32.totalorder %s32, 1
      %p255 = scmp.ne.s32.totalorder %s250, %s252
      %p256 = scmp.eq.s32.totalorder %s32, 0
      %p257 = por %p255, %p256
      %p258 = scmp.ne.s32.totalorder %s250, %s252
      %p259 = scmp.eq.s32.totalorder %s37, 1
      %p260 = por %p258, %p259
      %p261 = scmp.ne.s32.totalorder %s252, %s253
      %p262 = scmp.eq.s32.totalorder %s37, 0
      %p263 = por %p261, %p262
      %p264 = scmp.ne.s32.totalorder %s252, %s253
      %p265 = scmp.eq.s32.totalorder %s38, 1
      %p266 = por %p264, %p265
      %p268 = scmp.ne.s32.totalorder %s253, %s267
      %p269 = scmp.eq.s32.totalorder %s38, 0
      %p270 = por %p268, %p269
      %s272 = sadd.s32 %s271, 1
      %p275 = scmp.eq.s32.totalorder %s32, 1
      %p276 = scmp.ne.s32.totalorder %s271, %s273
      %p277 = scmp.eq.s32.totalorder %s32, 0
      %p278 = por %p276, %p277
      %p279 = scmp.ne.s32.totalorder %s271, %s273
      %p280 = scmp.eq.s32.totalorder %s37, 1
      %p281 = por %p279, %p280
      %p282 = scmp.ne.s32.totalorder %s273, %s274
      %p283 = scmp.eq.s32.totalorder %s37, 0
      %p284 = por %p282, %p283
      %p285 = scmp.ne.s32.totalorder %s273, %s274
      %p286 = scmp.eq.s32.totalorder %s38, 1
      %p287 = por %p285, %p286
      %p289 = scmp.ne.s32.totalorder %s274, %s288
      %p290 = scmp.eq.s32.totalorder %s38, 0
      %p291 = por %p289, %p290
      %s293 = sadd.s32 %s292, 1
      %p296 = scmp.eq.s32.totalorder %s32, 1
      %p297 = scmp.ne.s32.totalorder %s292, %s294
      %p298 = scmp.eq.s32.totalorder %s32, 0
      %p299 = por %p297, %p298
      %p300 = scmp.ne.s32.totalorder %s292, %s294
      %p301 = scmp.eq.s32.totalorder %s37, 1
      %p302 = por %p300, %p301
      %p303 = scmp.ne.s32.totalorder %s294, %s295
      %p304 = scmp.eq.s32.totalorder %s37, 0
      %p305 = por %p303, %p304
      %p306 = scmp.ne.s32.totalorder %s294, %s295
      %p307 = scmp.eq.s32.totalorder %s38, 1
      %p308 = por %p306, %p307
      %p310 = scmp.ne.s32.totalorder %s295, %s309
      %p311 = scmp.eq.s32.totalorder %s38, 0
      %p312 = por %p310, %p311
      %s314 = sadd.s32 %s313, 1
      %p317 = scmp.eq.s32.totalorder %s32, 1
      %p318 = scmp.ne.s32.totalorder %s313, %s315
      %p319 = scmp.eq.s32.totalorder %s32, 0
      %p320 = por %p318, %p319
      %p321 = scmp.ne.s32.totalorder %s313, %s315
      %p322 = scmp.eq.s32.totalorder %s37, 1
      %p323 = por %p321, %p322
      %p324 = scmp.ne.s32.totalorder %s315, %s316
      %p325 = scmp.eq.s32.totalorder %s37, 0
      %p326 = por %p324, %p325
      %p327 = scmp.ne.s32.totalorder %s315, %s316
      %p328 = scmp.eq.s32.totalorder %s38, 1
      %p329 = por %p327, %p328
      %p331 = scmp.ne.s32.totalorder %s316, %s330
      %p332 = scmp.eq.s32.totalorder %s38, 0
      %p333 = por %p331, %p332
      %s335 = sadd.s32 %s334, 1
      %p338 = scmp.eq.s32.totalorder %s32, 1
      %p339 = scmp.ne.s32.totalorder %s334, %s336
      %p340 = scmp.eq.s32.totalorder %s32, 0
      %p341 = por %p339, %p340
      %p342 = scmp.ne.s32.totalorder %s334, %s336
      %p343 = scmp.eq.s32.totalorder %s37, 1
      %p344 = por %p342, %p343
      %p345 = scmp.ne.s32.totalorder %s336, %s337
      %p346 = scmp.eq.s32.totalorder %s37, 0
      %p347 = por %p345, %p346
      %p348 = scmp.ne.s32.totalorder %s336, %s337
      %p349 = scmp.eq.s32.totalorder %s38, 1
      %p350 = por %p348, %p349
      %p352 = scmp.ne.s32.totalorder %s337, %s351
      %p353 = scmp.eq.s32.totalorder %s38, 0
      %p354 = por %p352, %p353
      %s356 = sadd.s32 %s355, 1
      %p359 = scmp.eq.s32.totalorder %s32, 1
      %p360 = scmp.ne.s32.totalorder %s355, %s357
      %p361 = scmp.eq.s32.totalorder %s32, 0
      %p362 = por %p360, %p361
      %p363 = scmp.ne.s32.totalorder %s355, %s357
      %p364 = scmp.eq.s32.totalorder %s37, 1
      %p365 = por %p363, %p364
      %p366 = scmp.ne.s32.totalorder %s357, %s358
      %p367 = scmp.eq.s32.totalorder %s37, 0
      %p368 = por %p366, %p367
      %p369 = scmp.ne.s32.totalorder %s357, %s358
      %p370 = scmp.eq.s32.totalorder %s38, 1
      %p371 = por %p369, %p370
      %p373 = scmp.ne.s32.totalorder %s358, %s372
      %p374 = scmp.eq.s32.totalorder %s38, 0
      %p375 = por %p373, %p374
      %s377 = sadd.s32 %s376, 1
      %p380 = scmp.eq.s32.totalorder %s32, 1
      %p381 = scmp.ne.s32.totalorder %s376, %s378
      %p382 = scmp.eq.s32.totalorder %s32, 0
      %p383 = por %p381, %p382
      %p384 = scmp.ne.s32.totalorder %s376, %s378
      %p385 = scmp.eq.s32.totalorder %s37, 1
      %p386 = por %p384, %p385
      %p387 = scmp.ne.s32.totalorder %s378, %s379
      %p388 = scmp.eq.s32.totalorder %s37, 0
      %p389 = por %p387, %p388
      %p390 = scmp.ne.s32.totalorder %s378, %s379
      %p391 = scmp.eq.s32.totalorder %s38, 1
      %p392 = por %p390, %p391
      %p394 = scmp.ne.s32.totalorder %s379, %s393
      %p395 = scmp.eq.s32.totalorder %s38, 0
      %p396 = por %p394, %p395
      %s398 = sadd.s32 %s397, 1
      %p401 = scmp.eq.s32.totalorder %s32, 1
      %p402 = scmp.ne.s32.totalorder %s397, %s399
      %p403 = scmp.eq.s32.totalorder %s32, 0
      %p404 = por %p402, %p403
      %p405 = scmp.ne.s32.totalorder %s397, %s399
      %p406 = scmp.eq.s32.totalorder %s37, 1
      %p407 = por %p405, %p406
      %p408 = scmp.ne.s32.totalorder %s399, %s400
      %p409 = scmp.eq.s32.totalorder %s37, 0
      %p410 = por %p408, %p409
      %p411 = scmp.ne.s32.totalorder %s399, %s400
      %p412 = scmp.eq.s32.totalorder %s38, 1
      %p413 = por %p411, %p412
      %p415 = scmp.ne.s32.totalorder %s400, %s414
      %p416 = scmp.eq.s32.totalorder %s38, 0
      %p417 = por %p415, %p416
      %s419 = sadd.s32 %s418, 1
      %p422 = scmp.eq.s32.totalorder %s32, 1
      %p423 = scmp.ne.s32.totalorder %s418, %s420
      %p424 = scmp.eq.s32.totalorder %s32, 0
      %p425 = por %p423, %p424
      %p426 = scmp.ne.s32.totalorder %s418, %s420
      %p427 = scmp.eq.s32.totalorder %s37, 1
      %p428 = por %p426, %p427
      %p429 = scmp.ne.s32.totalorder %s420, %s421
      %p430 = scmp.eq.s32.totalorder %s37, 0
      %p431 = por %p429, %p430
      %p432 = scmp.ne.s32.totalorder %s420, %s421
      %p433 = scmp.eq.s32.totalorder %s38, 1
      %p434 = por %p432, %p433
      %p436 = scmp.ne.s32.totalorder %s421, %s435
      %p437 = scmp.eq.s32.totalorder %s38, 0
      %p438 = por %p436, %p437
      %s440 = sadd.s32 %s439, 1
      %p443 = scmp.eq.s32.totalorder %s32, 1
      %p444 = scmp.ne.s32.totalorder %s439, %s441
      %p445 = scmp.eq.s32.totalorder %s32, 0
      %p446 = por %p444, %p445
      %p447 = scmp.ne.s32.totalorder %s439, %s441
      %p448 = scmp.eq.s32.totalorder %s37, 1
      %p449 = por %p447, %p448
      %p450 = scmp.ne.s32.totalorder %s441, %s442
      %p451 = scmp.eq.s32.totalorder %s37, 0
      %p452 = por %p450, %p451
      %p453 = scmp.ne.s32.totalorder %s441, %s442
      %p454 = scmp.eq.s32.totalorder %s38, 1
      %p455 = por %p453, %p454
      %p457 = scmp.ne.s32.totalorder %s442, %s456
      %p458 = scmp.eq.s32.totalorder %s38, 0
      %p459 = por %p457, %p458
      %s461 = sadd.s32 %s460, 1
      %p464 = scmp.eq.s32.totalorder %s32, 1
      %p465 = scmp.ne.s32.totalorder %s460, %s462
      %p466 = scmp.eq.s32.totalorder %s32, 0
      %p467 = por %p465, %p466
      %p468 = scmp.ne.s32.totalorder %s460, %s462
      %p469 = scmp.eq.s32.totalorder %s37, 1
      %p470 = por %p468, %p469
      %p471 = scmp.ne.s32.totalorder %s462, %s463
      %p472 = scmp.eq.s32.totalorder %s37, 0
      %p473 = por %p471, %p472
      %p474 = scmp.ne.s32.totalorder %s462, %s463
      %p475 = scmp.eq.s32.totalorder %s38, 1
      %p476 = por %p474, %p475
      %p478 = scmp.ne.s32.totalorder %s463, %s477
      %p479 = scmp.eq.s32.totalorder %s38, 0
      %p480 = por %p478, %p479
      %s482 = sadd.s32 %s481, 1
      %p485 = scmp.eq.s32.totalorder %s32, 1
      %p486 = scmp.ne.s32.totalorder %s481, %s483
      %p487 = scmp.eq.s32.totalorder %s32, 0
      %p488 = por %p486, %p487
      %p489 = scmp.ne.s32.totalorder %s481, %s483
      %p490 = scmp.eq.s32.totalorder %s37, 1
      %p491 = por %p489, %p490
      %p492 = scmp.ne.s32.totalorder %s483, %s484
      %p493 = scmp.eq.s32.totalorder %s37, 0
      %p494 = por %p492, %p493
      %p495 = scmp.ne.s32.totalorder %s483, %s484
      %p496 = scmp.eq.s32.totalorder %s38, 1
      %p497 = por %p495, %p496
      %p499 = scmp.ne.s32.totalorder %s484, %s498
      %p500 = scmp.eq.s32.totalorder %s38, 0
      %p501 = por %p499, %p500
      %s502 = ssub.s32 %s32, %s39
      %p503 = scmp.eq.s32.totalorder %s502, 0
      %s505 = sadd.s32 %s504, 1
      %s506 = scalar_select %p503, %s504, %s505
      %p509 = pneg %p503
      %p510 = scmp.eq.s32.totalorder %s32, 1
      %p511 = por %p509, %p510
      %p512 = scmp.ne.s32.totalorder %s504, %s507
      %p513 = scmp.eq.s32.totalorder %s32, 0
      %p514 = por %p512, %p513
      %p515 = scmp.ne.s32.totalorder %s504, %s507
      %p516 = scmp.eq.s32.totalorder %s37, 1
      %p517 = por %p515, %p516
      %p518 = scmp.ne.s32.totalorder %s507, %s508
      %p519 = scmp.eq.s32.totalorder %s37, 0
      %p520 = por %p518, %p519
      %p521 = scmp.ne.s32.totalorder %s507, %s508
      %p522 = scmp.eq.s32.totalorder %s38, 1
      %p523 = por %p521, %p522
      %p525 = scmp.ne.s32.totalorder %s508, %s524
      %p526 = scmp.eq.s32.totalorder %s38, 0
      %p527 = por %p525, %p526
      %s528 = ssub.s32 %s32, %s39
      %p529 = scmp.eq.s32.totalorder %s528, 0
      %s531 = sadd.s32 %s530, 1
      %s532 = scalar_select %p529, %s530, %s531
      %p535 = pneg %p529
      %p536 = scmp.eq.s32.totalorder %s32, 1
      %p537 = por %p535, %p536
      %p538 = scmp.ne.s32.totalorder %s530, %s533
      %p539 = scmp.eq.s32.totalorder %s32, 0
      %p540 = por %p538, %p539
      %p541 = scmp.ne.s32.totalorder %s530, %s533
      %p542 = scmp.eq.s32.totalorder %s37, 1
      %p543 = por %p541, %p542
      %p544 = scmp.ne.s32.totalorder %s533, %s534
      %p545 = scmp.eq.s32.totalorder %s37, 0
      %p546 = por %p544, %p545
      %p547 = scmp.ne.s32.totalorder %s533, %s534
      %p548 = scmp.eq.s32.totalorder %s38, 1
      %p549 = por %p547, %p548
      %p551 = scmp.ne.s32.totalorder %s534, %s550
      %p552 = scmp.eq.s32.totalorder %s38, 0
      %p553 = por %p551, %p552
      %p554 = scmp.le.s32.totalorder 1, %s32
      %p555 = scmp.lt.s32.totalorder %s32, 3
      %p556 = pnand %p554, %p555
      %p557 = pneg %p556
      // Predicated region
      $region9: #{_lambda_.1} parent=5 // pred_check
        _
      $region10: #{_lambda_.1} parent=5 // pred_check_branch
        %559 = sbr.rel (%p556) target = $region12
      $region11: #{_lambda_.1} parent=5 // pred_region
        %s560 = ssub.s32 %s32, 1
        // Predicated region
        $region13: #{_lambda_.1} parent=11 // pred_check
          %p561 = pneg %p53
        $region14: #{_lambda_.1} parent=11 // pred_check_branch
          %563 = sbr.rel (%p561) target = $region16
        $region15: #{_lambda_.1} parent=11 // pred_region
          _
        $region16: #{_lambda_.1} parent=11 // pred_fallthru
          _
        // Predicated region
        $region17: #{_lambda_.1} parent=11 // pred_check
          %p564 = pneg %p74
        $region18: #{_lambda_.1} parent=11 // pred_check_branch
          %566 = sbr.rel (%p564) target = $region20
        $region19: #{_lambda_.1} parent=11 // pred_region
          _
        $region20: #{_lambda_.1} parent=11 // pred_fallthru
          _
        // Predicated region
        $region21: #{_lambda_.1} parent=11 // pred_check
          %p567 = pneg %p95
        $region22: #{_lambda_.1} parent=11 // pred_check_branch
          %569 = sbr.rel (%p567) target = $region24
        $region23: #{_lambda_.1} parent=11 // pred_region
          _
        $region24: #{_lambda_.1} parent=11 // pred_fallthru
          _
        // Predicated region
        $region25: #{_lambda_.1} parent=11 // pred_check
          %p570 = pneg %p116
        $region26: #{_lambda_.1} parent=11 // pred_check_branch
          %572 = sbr.rel (%p570) target = $region28
        $region27: #{_lambda_.1} parent=11 // pred_region
          _
        $region28: #{_lambda_.1} parent=11 // pred_fallthru
          _
        // Predicated region
        $region29: #{_lambda_.1} parent=11 // pred_check
          %p573 = pneg %p137
        $region30: #{_lambda_.1} parent=11 // pred_check_branch
          %575 = sbr.rel (%p573) target = $region32
        $region31: #{_lambda_.1} parent=11 // pred_region
          _
        $region32: #{_lambda_.1} parent=11 // pred_fallthru
          _
        // Predicated region
        $region33: #{_lambda_.1} parent=11 // pred_check
          %p576 = pneg %p158
        $region34: #{_lambda_.1} parent=11 // pred_check_branch
          %578 = sbr.rel (%p576) target = $region36
        $region35: #{_lambda_.1} parent=11 // pred_region
          _
        $region36: #{_lambda_.1} parent=11 // pred_fallthru
          _
        // Predicated region
        $region37: #{_lambda_.1} parent=11 // pred_check
          %p579 = pneg %p179
        $region38: #{_lambda_.1} parent=11 // pred_check_branch
          %581 = sbr.rel (%p579) target = $region40
        $region39: #{_lambda_.1} parent=11 // pred_region
          _
        $region40: #{_lambda_.1} parent=11 // pred_fallthru
          _
        // Predicated region
        $region41: #{_lambda_.1} parent=11 // pred_check
          %p582 = pneg %p200
        $region42: #{_lambda_.1} parent=11 // pred_check_branch
          %584 = sbr.rel (%p582) target = $region44
        $region43: #{_lambda_.1} parent=11 // pred_region
          _
        $region44: #{_lambda_.1} parent=11 // pred_fallthru
          _
        // Predicated region
        $region45: #{_lambda_.1} parent=11 // pred_check
          %p585 = pneg %p221
        $region46: #{_lambda_.1} parent=11 // pred_check_branch
          %587 = sbr.rel (%p585) target = $region48
        $region47: #{_lambda_.1} parent=11 // pred_region
          _
        $region48: #{_lambda_.1} parent=11 // pred_fallthru
          _
        // Predicated region
        $region49: #{_lambda_.1} parent=11 // pred_check
          %p588 = pneg %p242
        $region50: #{_lambda_.1} parent=11 // pred_check_branch
          %590 = sbr.rel (%p588) target = $region52
        $region51: #{_lambda_.1} parent=11 // pred_region
          _
        $region52: #{_lambda_.1} parent=11 // pred_fallthru
          _
        // Predicated region
        $region53: #{_lambda_.1} parent=11 // pred_check
          %p591 = pneg %p263
        $region54: #{_lambda_.1} parent=11 // pred_check_branch
          %593 = sbr.rel (%p591) target = $region56
        $region55: #{_lambda_.1} parent=11 // pred_region
          _
        $region56: #{_lambda_.1} parent=11 // pred_fallthru
          _
        // Predicated region
        $region57: #{_lambda_.1} parent=11 // pred_check
          %p594 = pneg %p284
        $region58: #{_lambda_.1} parent=11 // pred_check_branch
          %596 = sbr.rel (%p594) target = $region60
        $region59: #{_lambda_.1} parent=11 // pred_region
          _
        $region60: #{_lambda_.1} parent=11 // pred_fallthru
          _
        // Predicated region
        $region61: #{_lambda_.1} parent=11 // pred_check
          %p597 = pneg %p305
        $region62: #{_lambda_.1} parent=11 // pred_check_branch
          %599 = sbr.rel (%p597) target = $region64
        $region63: #{_lambda_.1} parent=11 // pred_region
          _
        $region64: #{_lambda_.1} parent=11 // pred_fallthru
          _
        // Predicated region
        $region65: #{_lambda_.1} parent=11 // pred_check
          %p600 = pneg %p326
        $region66: #{_lambda_.1} parent=11 // pred_check_branch
          %602 = sbr.rel (%p600) target = $region68
        $region67: #{_lambda_.1} parent=11 // pred_region
          _
        $region68: #{_lambda_.1} parent=11 // pred_fallthru
          _
        // Predicated region
        $region69: #{_lambda_.1} parent=11 // pred_check
          %p603 = pneg %p347
        $region70: #{_lambda_.1} parent=11 // pred_check_branch
          %605 = sbr.rel (%p603) target = $region72
        $region71: #{_lambda_.1} parent=11 // pred_region
          _
        $region72: #{_lambda_.1} parent=11 // pred_fallthru
          _
        // Predicated region
        $region73: #{_lambda_.1} parent=11 // pred_check
          %p606 = pneg %p368
        $region74: #{_lambda_.1} parent=11 // pred_check_branch
          %608 = sbr.rel (%p606) target = $region76
        $region75: #{_lambda_.1} parent=11 // pred_region
          _
        $region76: #{_lambda_.1} parent=11 // pred_fallthru
          _
        // Predicated region
        $region77: #{_lambda_.1} parent=11 // pred_check
          %p609 = pneg %p389
        $region78: #{_lambda_.1} parent=11 // pred_check_branch
          %611 = sbr.rel (%p609) target = $region80
        $region79: #{_lambda_.1} parent=11 // pred_region
          _
        $region80: #{_lambda_.1} parent=11 // pred_fallthru
          _
        // Predicated region
        $region81: #{_lambda_.1} parent=11 // pred_check
          %p612 = pneg %p410
        $region82: #{_lambda_.1} parent=11 // pred_check_branch
          %614 = sbr.rel (%p612) target = $region84
        $region83: #{_lambda_.1} parent=11 // pred_region
          _
        $region84: #{_lambda_.1} parent=11 // pred_fallthru
          _
        // Predicated region
        $region85: #{_lambda_.1} parent=11 // pred_check
          %p615 = pneg %p431
        $region86: #{_lambda_.1} parent=11 // pred_check_branch
          %617 = sbr.rel (%p615) target = $region88
        $region87: #{_lambda_.1} parent=11 // pred_region
          _
        $region88: #{_lambda_.1} parent=11 // pred_fallthru
          _
        // Predicated region
        $region89: #{_lambda_.1} parent=11 // pred_check
          %p618 = pneg %p452
        $region90: #{_lambda_.1} parent=11 // pred_check_branch
          %620 = sbr.rel (%p618) target = $region92
        $region91: #{_lambda_.1} parent=11 // pred_region
          _
        $region92: #{_lambda_.1} parent=11 // pred_fallthru
          _
        // Predicated region
        $region93: #{_lambda_.1} parent=11 // pred_check
          %p621 = pneg %p473
        $region94: #{_lambda_.1} parent=11 // pred_check_branch
          %623 = sbr.rel (%p621) target = $region96
        $region95: #{_lambda_.1} parent=11 // pred_region
          _
        $region96: #{_lambda_.1} parent=11 // pred_fallthru
          _
        // Predicated region
        $region97: #{_lambda_.1} parent=11 // pred_check
          %p624 = pneg %p494
        $region98: #{_lambda_.1} parent=11 // pred_check_branch
          %626 = sbr.rel (%p624) target = $region100
        $region99: #{_lambda_.1} parent=11 // pred_region
          _
        $region100: #{_lambda_.1} parent=11 // pred_fallthru
          _
      $region12: #{_lambda_.1} parent=5 // pred_fallthru
        _
      %p627 = scmp.lt.s32.totalorder %s32, 2
      // Predicated region
      $region101: #{_lambda_.1} parent=5 // pred_check
        %p628 = pneg %p627
      $region102: #{_lambda_.1} parent=5 // pred_check_branch
        %630 = sbr.rel (%p628) target = $region104
      $region103: #{_lambda_.1} parent=5 // pred_region
        // Predicated region
        $region105: #{_lambda_.1} parent=103 // pred_check
          %p631 = pneg %p514
        $region106: #{_lambda_.1} parent=103 // pred_check_branch
          %633 = sbr.rel (%p631) target = $region108
        $region107: #{_lambda_.1} parent=103 // pred_region
          %p634 = scmp.lt.s32.totalorder %s32, 1
          %s635 = scalar_select %p634, %s32, 1
          %s636 = smul.addr %s635, 8
          %s637 = scalar_lea.vmem %s22, %s636
        $region108: #{_lambda_.1} parent=103 // pred_fallthru
          _
      $region104: #{_lambda_.1} parent=5 // pred_fallthru
        _
      %p638 = scmp.le.s32.totalorder 1, %s32
      %p639 = scmp.lt.s32.totalorder %s32, 3
      %p640 = pnand %p638, %p639
      %p641 = pneg %p640
      // Predicated region
      $region109: #{_lambda_.1} parent=5 // pred_check
        _
      $region110: #{_lambda_.1} parent=5 // pred_check_branch
        %643 = sbr.rel (%p640) target = $region112
      $region111: #{_lambda_.1} parent=5 // pred_region
        %s644 = ssub.s32 %s32, 1
        %p645 = pneg %p53
        %p646 = pneg %p50
        %p647 = pneg %p74
        %p648 = pneg %p71
        %p649 = pneg %p95
        %p650 = pneg %p92
        %p651 = pneg %p116
        %p652 = pneg %p113
        %p653 = pneg %p137
        %p654 = pneg %p134
        %p655 = pneg %p158
        %p656 = pneg %p155
        %p657 = pneg %p179
        %p658 = pneg %p176
        %p659 = pneg %p200
        %p660 = pneg %p197
        %p661 = pneg %p221
        %p662 = pneg %p218
        %p663 = pneg %p242
        %p664 = pneg %p239
        %p665 = pneg %p263
        %p666 = pneg %p260
        %p667 = pneg %p284
        %p668 = pneg %p281
        %p669 = pneg %p305
        %p670 = pneg %p302
        %p671 = pneg %p326
        %p672 = pneg %p323
        %p673 = pneg %p347
        %p674 = pneg %p344
        %p675 = pneg %p368
        %p676 = pneg %p365
        %p677 = pneg %p389
        %p678 = pneg %p386
        %p679 = pneg %p410
        %p680 = pneg %p407
        %p681 = pneg %p431
        %p682 = pneg %p428
        %p683 = pneg %p452
        %p684 = pneg %p449
        %p685 = pneg %p473
        %p686 = pneg %p470
        %p687 = pneg %p494
        %p688 = pneg %p491
        %p689 = scmp.lt.s32.totalorder %s37, 1
        %s690 = scalar_select %p689, %s37, 1
        %s691 = smul.addr %s690, 8
        %s692 = scalar_lea.vmem %s22, %s691
        %p693 = pneg %p520
        %p694 = pneg %p517
        %p695 = pneg %p546
        %p696 = pneg %p543
        %s697 = sand.u32 %s533, 1
        %s698 = scalar_lea.sflag [#allocation3], %s697
        %s699 = sand.u32 %s533, 1
        %s700 = scalar_lea.vmem [#allocation2], %s699
        %p701 = scmp.lt.s32.totalorder %s37, 1
        %s702 = scalar_select %p701, %s37, 1
        %s703 = smul.addr %s702, 8
        %s704 = scalar_lea.vmem %s22, %s703
        %v705 = vld [vmem:[%s704] sm:$0xff]
        %v706 = vld [vmem:[%s0] sm:$0xff]
        %v707 = vld [vmem:[%s0 + $0x8] sm:$0xff]
        %v708 = vld [vmem:[%s0 + $0x10] sm:$0xff]
        %v709 = vld [vmem:[%s0 + $0x18] sm:$0xff]
        %v710 = vld [vmem:[%s0 + $0x20] sm:$0xff]
        %v711 = vld [vmem:[%s0 + $0x28] sm:$0xff]
        %v712 = vld [vmem:[%s0 + $0x30] sm:$0xff]
        %v713 = vld [vmem:[%s0 + $0x38] sm:$0xff]
        %v714 = vld [vmem:[%s0 + $0x40] sm:$0xff]
        %v715 = vld [vmem:[%s0 + $0x48] sm:$0xff]
        %v716 = vld [vmem:[%s0 + $0x50] sm:$0xff]
        %v717 = vld [vmem:[%s0 + $0x58] sm:$0xff]
        %v718 = vld [vmem:[%s0 + $0x60] sm:$0xff]
        %v719 = vld [vmem:[%s0 + $0x68] sm:$0xff]
        %v720 = vld [vmem:[%s0 + $0x70] sm:$0xff]
        %v721 = vld [vmem:[%s0 + $0x78] sm:$0xff]
        %v722 = vld [vmem:[%s0 + $0x80] sm:$0xff]
        %v723 = vld [vmem:[%s0 + $0x88] sm:$0xff]
        %v724 = vld [vmem:[%s0 + $0x90] sm:$0xff]
        %v725 = vld [vmem:[%s0 + $0x98] sm:$0xff]
        %v726 = vld [vmem:[%s0 + $0xa0] sm:$0xff]
        %v727 = vld [vmem:[%s0 + $0xa8] sm:$0xff]
        %v728 = vld [vmem:[%s0 + $0xb0] sm:$0xff]
        %v729 = vld [vmem:[%s0 + $0xb8] sm:$0xff]
        %v730 = vld [vmem:[%s0 + $0xc0] sm:$0xff]
        %v731 = vld [vmem:[%s0 + $0xc8] sm:$0xff]
        %v732 = vld [vmem:[%s0 + $0xd0] sm:$0xff]
        %v733 = vld [vmem:[%s0 + $0xd8] sm:$0xff]
        %v734 = vld [vmem:[%s0 + $0xe0] sm:$0xff]
        %v735 = vld [vmem:[%s0 + $0xe8] sm:$0xff]
        %v736 = vld [vmem:[%s0 + $0xf0] sm:$0xff]
        %v737 = vld [vmem:[%s0 + $0xf8] sm:$0xff]
        %v738 = vld [vmem:[%s0 + $0x100] sm:$0xff]
        %v739 = vld [vmem:[%s0 + $0x108] sm:$0xff]
        %v740 = vld [vmem:[%s0 + $0x110] sm:$0xff]
        %v741 = vld [vmem:[%s0 + $0x118] sm:$0xff]
        %v742 = vld [vmem:[%s0 + $0x120] sm:$0xff]
        %v743 = vld [vmem:[%s0 + $0x128] sm:$0xff]
        %v744 = vld [vmem:[%s0 + $0x130] sm:$0xff]
        %v745 = vld [vmem:[%s0 + $0x138] sm:$0xff]
        %v746 = vld [vmem:[%s0 + $0x140] sm:$0xff]
        %v747 = vld [vmem:[%s0 + $0x148] sm:$0xff]
        %v748 = vld [vmem:[%s0 + $0x150] sm:$0xff]
        %v749 = vld [vmem:[%s0 + $0x158] sm:$0xff]
        %v750 = vld [vmem:[%s0 + $0x160] sm:$0xff]
        %v751 = vld [vmem:[%s0 + $0x168] sm:$0xff]
        %v752 = vld [vmem:[%s0 + $0x170] sm:$0xff]
        %v753 = vld [vmem:[%s0 + $0x178] sm:$0xff]
        %v754 = vld [vmem:[%s1] sm:$0x3f]
        %v756 = vlaneseq
        %v757 = vshrl.u32 %v756, 7
        %v758 = vsub.s32 0, %v757
        %v759 = vrot.slane %v754, %v758
        %v760 = vlaneseq
        %v761 = vshrl.u32 %v760, 7
        %v762 = vsub.s32 1, %v761
        %v763 = vrot.slane %v754, %v762
        %v764 = vlaneseq
        %v765 = vshrl.u32 %v764, 7
        %v766 = vsub.s32 2, %v765
        %v767 = vrot.slane %v754, %v766
        %v768 = vlaneseq
        %v769 = vshrl.u32 %v768, 7
        %v770 = vsub.s32 3, %v769
        %v771 = vrot.slane %v754, %v770
        %v772 = vlaneseq
        %v773 = vshrl.u32 %v772, 7
        %v774 = vsub.s32 4, %v773
        %v775 = vrot.slane %v754, %v774
        %v776 = vlaneseq
        %v777 = vshrl.u32 %v776, 7
        %v778 = vsub.s32 5, %v777
        %v779 = vrot.slane %v754, %v778
        %vm786 = vcmask 523264
        %v788 = vsel %vm786, %v705, 0
        %790 = vmatprep.subr.mxu0 0.0
        %791 = vmatpush1.msra.mxu0 0.0
        %792 = vmatprep.subr.mxu0 0.0
        %793 = vmatpush1.msra.mxu0 0.0
        %794 = vmatprep.subr.mxu0 0.0
        %795 = vmatpush1.msra.mxu0 0.0
        %796 = vmatprep.subr.mxu0 0.0
        %797 = vmatpush1.msra.mxu0 0.0
        %798 = vmatprep.subr.mxu0 0.0
        %799 = vmatpush1.msra.mxu0 0.0
        %800 = vmatprep.subr.mxu0 0.0
        %801 = vmatpush1.msra.mxu0 0.0
        %802 = vmatprep.subr.mxu0 0.0
        %803 = vmatpush1.msra.mxu0 0.0
        %804 = vmatprep.subr.mxu0 0.0
        %805 = vmatpush1.msra.mxu0 0.0
        %806 = vmatprep.subr.mxu0 %v749
        %807 = vmatpush1.msra.mxu0 %v748
        %808 = vmatprep.subr.mxu0 %v743
        %809 = vmatpush1.msra.mxu0 %v742
        %810 = vmatprep.subr.mxu0 %v737
        %811 = vmatpush1.msra.mxu0 %v736
        %812 = vmatprep.subr.mxu0 %v731
        %813 = vmatpush1.msra.mxu0 %v730
        %814 = vmatprep.subr.mxu0 %v725
        %815 = vmatpush1.msra.mxu0 %v724
        %816 = vmatprep.subr.mxu0 %v719
        %817 = vmatpush1.msra.mxu0 %v718
        %818 = vmatprep.subr.mxu0 %v713
        %819 = vmatpush1.msra.mxu0 %v712
        %820 = vmatprep.subr.mxu0 %v707
        %821 = vmatpush1.msra.mxu0 %v706
        %822 = vmatprep.subr.mxu0 0.0
        %823 = vmatpush2.msra.mxu0 0.0
        %824 = vmatprep.subr.mxu0 0.0
        %825 = vmatpush2.msra.mxu0 0.0
        %826 = vmatprep.subr.mxu0 0.0
        %827 = vmatpush2.msra.mxu0 0.0
        %828 = vmatprep.subr.mxu0 0.0
        %829 = vmatpush2.msra.mxu0 0.0
        %830 = vmatprep.subr.mxu0 0.0
        %831 = vmatpush2.msra.mxu0 0.0
        %832 = vmatprep.subr.mxu0 0.0
        %833 = vmatpush2.msra.mxu0 0.0
        %834 = vmatprep.subr.mxu0 0.0
        %835 = vmatpush2.msra.mxu0 0.0
        %836 = vmatprep.subr.mxu0 0.0
        %837 = vmatpush2.msra.mxu0 0.0
        %838 = vmatprep.subr.mxu0 0.0
        %839 = vmatpush2.msra.mxu0 0.0
        %840 = vmatprep.subr.mxu0 0.0
        %841 = vmatpush2.msra.mxu0 0.0
        %842 = vmatprep.subr.mxu0 0.0
        %843 = vmatpush2.msra.mxu0 0.0
        %844 = vmatprep.subr.mxu0 0.0
        %845 = vmatpush2.msra.mxu0 0.0
        %846 = vmatprep.subr.mxu0 0.0
        %847 = vmatpush2.msra.mxu0 0.0
        %848 = vmatprep.subr.mxu0 0.0
        %849 = vmatpush2.msra.mxu0 0.0
        %850 = vmatprep.subr.mxu0 0.0
        %851 = vmatpush2.msra.mxu0 0.0
        %852 = vmatprep.subr.mxu0 0.0
        %853 = vmatpush2.msra.mxu0 0.0
        %854 = vmatprep.mubr.f32.mxu0 0.0
        %855 = vmatmul.mubr.f32.gmra.mxu0 %v788
        %v856 = vpop.f32.mrf.mxu0
        %v857 = vadd.f32 %v759, %v856
        %v858 = vpop.f32.mrf.mxu0
        %v859 = vadd.f32 %v763, %v858
        %860 = vdwg.mxu0
        %861 = vmatprep.subr.mxu0 0.0
        %862 = vmatpush1.msra.mxu0 0.0
        %863 = vmatprep.subr.mxu0 0.0
        %864 = vmatpush1.msra.mxu0 0.0
        %865 = vmatprep.subr.mxu0 0.0
        %866 = vmatpush1.msra.mxu0 0.0
        %867 = vmatprep.subr.mxu0 0.0
        %868 = vmatpush1.msra.mxu0 0.0
        %869 = vmatprep.subr.mxu0 0.0
        %870 = vmatpush1.msra.mxu0 0.0
        %871 = vmatprep.subr.mxu0 0.0
        %872 = vmatpush1.msra.mxu0 0.0
        %873 = vmatprep.subr.mxu0 0.0
        %874 = vmatpush1.msra.mxu0 0.0
        %875 = vmatprep.subr.mxu0 0.0
        %876 = vmatpush1.msra.mxu0 0.0
        %877 = vmatprep.subr.mxu0 %v751
        %878 = vmatpush1.msra.mxu0 %v750
        %879 = vmatprep.subr.mxu0 %v745
        %880 = vmatpush1.msra.mxu0 %v744
        %881 = vmatprep.subr.mxu0 %v739
        %882 = vmatpush1.msra.mxu0 %v738
        %883 = vmatprep.subr.mxu0 %v733
        %884 = vmatpush1.msra.mxu0 %v732
        %885 = vmatprep.subr.mxu0 %v727
        %886 = vmatpush1.msra.mxu0 %v726
        %887 = vmatprep.subr.mxu0 %v721
        %888 = vmatpush1.msra.mxu0 %v720
        %889 = vmatprep.subr.mxu0 %v715
        %890 = vmatpush1.msra.mxu0 %v714
        %891 = vmatprep.subr.mxu0 %v709
        %892 = vmatpush1.msra.mxu0 %v708
        %893 = vmatprep.subr.mxu0 0.0
        %894 = vmatpush2.msra.mxu0 0.0
        %895 = vmatprep.subr.mxu0 0.0
        %896 = vmatpush2.msra.mxu0 0.0
        %897 = vmatprep.subr.mxu0 0.0
        %898 = vmatpush2.msra.mxu0 0.0
        %899 = vmatprep.subr.mxu0 0.0
        %900 = vmatpush2.msra.mxu0 0.0
        %901 = vmatprep.subr.mxu0 0.0
        %902 = vmatpush2.msra.mxu0 0.0
        %903 = vmatprep.subr.mxu0 0.0
        %904 = vmatpush2.msra.mxu0 0.0
        %905 = vmatprep.subr.mxu0 0.0
        %906 = vmatpush2.msra.mxu0 0.0
        %907 = vmatprep.subr.mxu0 0.0
        %908 = vmatpush2.msra.mxu0 0.0
        %909 = vmatprep.subr.mxu0 0.0
        %910 = vmatpush2.msra.mxu0 0.0
        %911 = vmatprep.subr.mxu0 0.0
        %912 = vmatpush2.msra.mxu0 0.0
        %913 = vmatprep.subr.mxu0 0.0
        %914 = vmatpush2.msra.mxu0 0.0
        %915 = vmatprep.subr.mxu0 0.0
        %916 = vmatpush2.msra.mxu0 0.0
        %917 = vmatprep.subr.mxu0 0.0
        %918 = vmatpush2.msra.mxu0 0.0
        %919 = vmatprep.subr.mxu0 0.0
        %920 = vmatpush2.msra.mxu0 0.0
        %921 = vmatprep.subr.mxu0 0.0
        %922 = vmatpush2.msra.mxu0 0.0
        %923 = vmatprep.subr.mxu0 0.0
        %924 = vmatpush2.msra.mxu0 0.0
        %925 = vmatprep.mubr.f32.mxu0 0.0
        %926 = vmatmul.mubr.f32.gmra.mxu0 %v788
        %v927 = vpop.f32.mrf.mxu0
        %v928 = vadd.f32 %v767, %v927
        %v929 = vpop.f32.mrf.mxu0
        %v930 = vadd.f32 %v771, %v929
        %931 = vdwg.mxu0
        %932 = vmatprep.subr.mxu0 0.0
        %933 = vmatpush1.msra.mxu0 0.0
        %934 = vmatprep.subr.mxu0 0.0
        %935 = vmatpush1.msra.mxu0 0.0
        %936 = vmatprep.subr.mxu0 0.0
        %937 = vmatpush1.msra.mxu0 0.0
        %938 = vmatprep.subr.mxu0 0.0
        %939 = vmatpush1.msra.mxu0 0.0
        %940 = vmatprep.subr.mxu0 0.0
        %941 = vmatpush1.msra.mxu0 0.0
        %942 = vmatprep.subr.mxu0 0.0
        %943 = vmatpush1.msra.mxu0 0.0
        %944 = vmatprep.subr.mxu0 0.0
        %945 = vmatpush1.msra.mxu0 0.0
        %946 = vmatprep.subr.mxu0 0.0
        %947 = vmatpush1.msra.mxu0 0.0
        %948 = vmatprep.subr.mxu0 %v753
        %949 = vmatpush1.msra.mxu0 %v752
        %950 = vmatprep.subr.mxu0 %v747
        %951 = vmatpush1.msra.mxu0 %v746
        %952 = vmatprep.subr.mxu0 %v741
        %953 = vmatpush1.msra.mxu0 %v740
        %954 = vmatprep.subr.mxu0 %v735
        %955 = vmatpush1.msra.mxu0 %v734
        %956 = vmatprep.subr.mxu0 %v729
        %957 = vmatpush1.msra.mxu0 %v728
        %958 = vmatprep.subr.mxu0 %v723
        %959 = vmatpush1.msra.mxu0 %v722
        %960 = vmatprep.subr.mxu0 %v717
        %961 = vmatpush1.msra.mxu0 %v716
        %962 = vmatprep.subr.mxu0 %v711
        %963 = vmatpush1.msra.mxu0 %v710
        %964 = vmatprep.subr.mxu0 0.0
        %965 = vmatpush2.msra.mxu0 0.0
        %966 = vmatprep.subr.mxu0 0.0
        %967 = vmatpush2.msra.mxu0 0.0
        %968 = vmatprep.subr.mxu0 0.0
        %969 = vmatpush2.msra.mxu0 0.0
        %970 = vmatprep.subr.mxu0 0.0
        %971 = vmatpush2.msra.mxu0 0.0
        %972 = vmatprep.subr.mxu0 0.0
        %973 = vmatpush2.msra.mxu0 0.0
        %974 = vmatprep.subr.mxu0 0.0
        %975 = vmatpush2.msra.mxu0 0.0
        %976 = vmatprep.subr.mxu0 0.0
        %977 = vmatpush2.msra.mxu0 0.0
        %978 = vmatprep.subr.mxu0 0.0
        %979 = vmatpush2.msra.mxu0 0.0
        %980 = vmatprep.subr.mxu0 0.0
        %981 = vmatpush2.msra.mxu0 0.0
        %982 = vmatprep.subr.mxu0 0.0
        %983 = vmatpush2.msra.mxu0 0.0
        %984 = vmatprep.subr.mxu0 0.0
        %985 = vmatpush2.msra.mxu0 0.0
        %986 = vmatprep.subr.mxu0 0.0
        %987 = vmatpush2.msra.mxu0 0.0
        %988 = vmatprep.subr.mxu0 0.0
        %989 = vmatpush2.msra.mxu0 0.0
        %990 = vmatprep.subr.mxu0 0.0
        %991 = vmatpush2.msra.mxu0 0.0
        %992 = vmatprep.subr.mxu0 0.0
        %993 = vmatpush2.msra.mxu0 0.0
        %994 = vmatprep.subr.mxu0 0.0
        %995 = vmatpush2.msra.mxu0 0.0
        %996 = vmatprep.mubr.f32.mxu0 0.0
        %997 = vmatmul.mubr.f32.gmra.mxu0 %v788
        %v998 = vpop.f32.mrf.mxu0
        %v999 = vadd.f32 %v775, %v998
        %v1000 = vpop.f32.mrf.mxu0
        %v1001 = vadd.f32 %v779, %v1000
        %1002 = vdwg.mxu0
        %v1003 = vmul.f32 %v857, %v857
        %v1004 = vmul.f32 %v859, %v859
        %v1005 = vmul.f32 %v928, %v928
        %v1006 = vmul.f32 %v930, %v930
        %v1007 = vmul.f32 %v999, %v999
        %v1008 = vmul.f32 %v1001, %v1001
        %v1009 = vld [vmem:[%s2] sm:$0xff]
        %v1010 = vld [vmem:[%s2 + $0x8] sm:$0xff]
        %v1011 = vld [vmem:[%s2 + $0x10] sm:$0xff]
        %v1012 = vld [vmem:[%s2 + $0x18] sm:$0xff]
        %v1013 = vld [vmem:[%s2 + $0x20] sm:$0xff]
        %v1014 = vld [vmem:[%s2 + $0x28] sm:$0xff]
        %v1015 = vld [vmem:[%s2 + $0x30] sm:$0xff]
        %v1016 = vld [vmem:[%s2 + $0x38] sm:$0xff]
        %v1017 = vld [vmem:[%s2 + $0x40] sm:$0xff]
        %v1018 = vld [vmem:[%s2 + $0x48] sm:$0xff]
        %v1019 = vld [vmem:[%s2 + $0x50] sm:$0xff]
        %v1020 = vld [vmem:[%s2 + $0x58] sm:$0xff]
        %v1021 = vld [vmem:[%s2 + $0x60] sm:$0xff]
        %v1022 = vld [vmem:[%s2 + $0x68] sm:$0xff]
        %v1023 = vld [vmem:[%s2 + $0x70] sm:$0xff]
        %v1024 = vld [vmem:[%s2 + $0x78] sm:$0xff]
        %v1025 = vld [vmem:[%s2 + $0x80] sm:$0xff]
        %v1026 = vld [vmem:[%s2 + $0x88] sm:$0xff]
        %v1027 = vld [vmem:[%s2 + $0x90] sm:$0xff]
        %v1028 = vld [vmem:[%s2 + $0x98] sm:$0xff]
        %v1029 = vld [vmem:[%s2 + $0xa0] sm:$0xff]
        %v1030 = vld [vmem:[%s2 + $0xa8] sm:$0xff]
        %v1031 = vld [vmem:[%s2 + $0xb0] sm:$0xff]
        %v1032 = vld [vmem:[%s2 + $0xb8] sm:$0xff]
        %v1033 = vld [vmem:[%s2 + $0xc0] sm:$0xff]
        %v1034 = vld [vmem:[%s2 + $0xc8] sm:$0xff]
        %v1035 = vld [vmem:[%s2 + $0xd0] sm:$0xff]
        %v1036 = vld [vmem:[%s2 + $0xd8] sm:$0xff]
        %v1037 = vld [vmem:[%s2 + $0xe0] sm:$0xff]
        %v1038 = vld [vmem:[%s2 + $0xe8] sm:$0xff]
        %v1039 = vld [vmem:[%s2 + $0xf0] sm:$0xff]
        %v1040 = vld [vmem:[%s2 + $0xf8] sm:$0xff]
        %v1041 = vld [vmem:[%s2 + $0x100] sm:$0xff]
        %v1042 = vld [vmem:[%s2 + $0x108] sm:$0xff]
        %v1043 = vld [vmem:[%s2 + $0x110] sm:$0xff]
        %v1044 = vld [vmem:[%s2 + $0x118] sm:$0xff]
        %v1045 = vld [vmem:[%s2 + $0x120] sm:$0xff]
        %v1046 = vld [vmem:[%s2 + $0x128] sm:$0xff]
        %v1047 = vld [vmem:[%s2 + $0x130] sm:$0xff]
        %v1048 = vld [vmem:[%s2 + $0x138] sm:$0xff]
        %v1049 = vld [vmem:[%s2 + $0x140] sm:$0xff]
        %v1050 = vld [vmem:[%s2 + $0x148] sm:$0xff]
        %v1051 = vld [vmem:[%s2 + $0x150] sm:$0xff]
        %v1052 = vld [vmem:[%s2 + $0x158] sm:$0xff]
        %v1053 = vld [vmem:[%s2 + $0x160] sm:$0xff]
        %v1054 = vld [vmem:[%s2 + $0x168] sm:$0xff]
        %v1055 = vld [vmem:[%s2 + $0x170] sm:$0xff]
        %v1056 = vld [vmem:[%s2 + $0x178] sm:$0xff]
        %v1057 = vld [vmem:[%s2 + $0x180] sm:$0xff]
        %v1058 = vld [vmem:[%s2 + $0x188] sm:$0xff]
        %v1059 = vld [vmem:[%s2 + $0x190] sm:$0xff]
        %v1060 = vld [vmem:[%s2 + $0x198] sm:$0xff]
        %v1061 = vld [vmem:[%s2 + $0x1a0] sm:$0xff]
        %v1062 = vld [vmem:[%s2 + $0x1a8] sm:$0xff]
        %v1063 = vld [vmem:[%s2 + $0x1b0] sm:$0xff]
        %v1064 = vld [vmem:[%s2 + $0x1b8] sm:$0xff]
        %v1065 = vld [vmem:[%s2 + $0x1c0] sm:$0xff]
        %v1066 = vld [vmem:[%s2 + $0x1c8] sm:$0xff]
        %v1067 = vld [vmem:[%s2 + $0x1d0] sm:$0xff]
        %v1068 = vld [vmem:[%s2 + $0x1d8] sm:$0xff]
        %v1069 = vld [vmem:[%s2 + $0x1e0] sm:$0xff]
        %v1070 = vld [vmem:[%s2 + $0x1e8] sm:$0xff]
        %v1071 = vld [vmem:[%s2 + $0x1f0] sm:$0xff]
        %v1072 = vld [vmem:[%s2 + $0x1f8] sm:$0xff]
        %v1073 = vld [vmem:[%s2 + $0x200] sm:$0xff]
        %v1074 = vld [vmem:[%s2 + $0x208] sm:$0xff]
        %v1075 = vld [vmem:[%s2 + $0x210] sm:$0xff]
        %v1076 = vld [vmem:[%s2 + $0x218] sm:$0xff]
        %v1077 = vld [vmem:[%s2 + $0x220] sm:$0xff]
        %v1078 = vld [vmem:[%s2 + $0x228] sm:$0xff]
        %v1079 = vld [vmem:[%s2 + $0x230] sm:$0xff]
        %v1080 = vld [vmem:[%s2 + $0x238] sm:$0xff]
        %v1081 = vld [vmem:[%s2 + $0x240] sm:$0xff]
        %v1082 = vld [vmem:[%s2 + $0x248] sm:$0xff]
        %v1083 = vld [vmem:[%s2 + $0x250] sm:$0xff]
        %v1084 = vld [vmem:[%s2 + $0x258] sm:$0xff]
        %v1085 = vld [vmem:[%s2 + $0x260] sm:$0xff]
        %v1086 = vld [vmem:[%s2 + $0x268] sm:$0xff]
        %v1087 = vld [vmem:[%s2 + $0x270] sm:$0xff]
        %v1088 = vld [vmem:[%s2 + $0x278] sm:$0xff]
        %v1089 = vld [vmem:[%s2 + $0x280] sm:$0xff]
        %v1090 = vld [vmem:[%s2 + $0x288] sm:$0xff]
        %v1091 = vld [vmem:[%s2 + $0x290] sm:$0xff]
        %v1092 = vld [vmem:[%s2 + $0x298] sm:$0xff]
        %v1093 = vld [vmem:[%s2 + $0x2a0] sm:$0xff]
        %v1094 = vld [vmem:[%s2 + $0x2a8] sm:$0xff]
        %v1095 = vld [vmem:[%s2 + $0x2b0] sm:$0xff]
        %v1096 = vld [vmem:[%s2 + $0x2b8] sm:$0xff]
        %v1097 = vld [vmem:[%s2 + $0x2c0] sm:$0xff]
        %v1098 = vld [vmem:[%s2 + $0x2c8] sm:$0xff]
        %v1099 = vld [vmem:[%s2 + $0x2d0] sm:$0xff]
        %v1100 = vld [vmem:[%s2 + $0x2d8] sm:$0xff]
        %v1101 = vld [vmem:[%s2 + $0x2e0] sm:$0xff]
        %v1102 = vld [vmem:[%s2 + $0x2e8] sm:$0xff]
        %v1103 = vld [vmem:[%s2 + $0x2f0] sm:$0xff]
        %v1104 = vld [vmem:[%s2 + $0x2f8] sm:$0xff]
        %v1105 = vld [vmem:[%s2 + $0x300] sm:$0xff]
        %v1106 = vld [vmem:[%s2 + $0x308] sm:$0xff]
        %v1107 = vld [vmem:[%s2 + $0x310] sm:$0xff]
        %v1108 = vld [vmem:[%s2 + $0x318] sm:$0xff]
        %v1109 = vld [vmem:[%s2 + $0x320] sm:$0xff]
        %v1110 = vld [vmem:[%s2 + $0x328] sm:$0xff]
        %v1111 = vld [vmem:[%s2 + $0x330] sm:$0xff]
        %v1112 = vld [vmem:[%s2 + $0x338] sm:$0xff]
        %v1113 = vld [vmem:[%s2 + $0x340] sm:$0xff]
        %v1114 = vld [vmem:[%s2 + $0x348] sm:$0xff]
        %v1115 = vld [vmem:[%s2 + $0x350] sm:$0xff]
        %v1116 = vld [vmem:[%s2 + $0x358] sm:$0xff]
        %v1117 = vld [vmem:[%s2 + $0x360] sm:$0xff]
        %v1118 = vld [vmem:[%s2 + $0x368] sm:$0xff]
        %v1119 = vld [vmem:[%s2 + $0x370] sm:$0xff]
        %v1120 = vld [vmem:[%s2 + $0x378] sm:$0xff]
        %v1121 = vld [vmem:[%s2 + $0x380] sm:$0xff]
        %v1122 = vld [vmem:[%s2 + $0x388] sm:$0xff]
        %v1123 = vld [vmem:[%s2 + $0x390] sm:$0xff]
        %v1124 = vld [vmem:[%s2 + $0x398] sm:$0xff]
        %v1125 = vld [vmem:[%s2 + $0x3a0] sm:$0xff]
        %v1126 = vld [vmem:[%s2 + $0x3a8] sm:$0xff]
        %v1127 = vld [vmem:[%s2 + $0x3b0] sm:$0xff]
        %v1128 = vld [vmem:[%s2 + $0x3b8] sm:$0xff]
        %v1129 = vld [vmem:[%s2 + $0x3c0] sm:$0xff]
        %v1130 = vld [vmem:[%s2 + $0x3c8] sm:$0xff]
        %v1131 = vld [vmem:[%s2 + $0x3d0] sm:$0xff]
        %v1132 = vld [vmem:[%s2 + $0x3d8] sm:$0xff]
        %v1133 = vld [vmem:[%s2 + $0x3e0] sm:$0xff]
        %v1134 = vld [vmem:[%s2 + $0x3e8] sm:$0xff]
        %v1135 = vld [vmem:[%s2 + $0x3f0] sm:$0xff]
        %v1136 = vld [vmem:[%s2 + $0x3f8] sm:$0xff]
        %v1137 = vld [vmem:[%s2 + $0x400] sm:$0xff]
        %v1138 = vld [vmem:[%s2 + $0x408] sm:$0xff]
        %v1139 = vld [vmem:[%s2 + $0x410] sm:$0xff]
        %v1140 = vld [vmem:[%s2 + $0x418] sm:$0xff]
        %v1141 = vld [vmem:[%s2 + $0x420] sm:$0xff]
        %v1142 = vld [vmem:[%s2 + $0x428] sm:$0xff]
        %v1143 = vld [vmem:[%s2 + $0x430] sm:$0xff]
        %v1144 = vld [vmem:[%s2 + $0x438] sm:$0xff]
        %v1145 = vld [vmem:[%s2 + $0x440] sm:$0xff]
        %v1146 = vld [vmem:[%s2 + $0x448] sm:$0xff]
        %v1147 = vld [vmem:[%s2 + $0x450] sm:$0xff]
        %v1148 = vld [vmem:[%s2 + $0x458] sm:$0xff]
        %v1149 = vld [vmem:[%s2 + $0x460] sm:$0xff]
        %v1150 = vld [vmem:[%s2 + $0x468] sm:$0xff]
        %v1151 = vld [vmem:[%s2 + $0x470] sm:$0xff]
        %v1152 = vld [vmem:[%s2 + $0x478] sm:$0xff]
        %v1153 = vld [vmem:[%s2 + $0x480] sm:$0xff]
        %v1154 = vld [vmem:[%s2 + $0x488] sm:$0xff]
        %v1155 = vld [vmem:[%s2 + $0x490] sm:$0xff]
        %v1156 = vld [vmem:[%s2 + $0x498] sm:$0xff]
        %v1157 = vld [vmem:[%s2 + $0x4a0] sm:$0xff]
        %v1158 = vld [vmem:[%s2 + $0x4a8] sm:$0xff]
        %v1159 = vld [vmem:[%s2 + $0x4b0] sm:$0xff]
        %v1160 = vld [vmem:[%s2 + $0x4b8] sm:$0xff]
        %v1161 = vld [vmem:[%s2 + $0x4c0] sm:$0xff]
        %v1162 = vld [vmem:[%s2 + $0x4c8] sm:$0xff]
        %v1163 = vld [vmem:[%s2 + $0x4d0] sm:$0xff]
        %v1164 = vld [vmem:[%s2 + $0x4d8] sm:$0xff]
        %v1165 = vld [vmem:[%s2 + $0x4e0] sm:$0xff]
        %v1166 = vld [vmem:[%s2 + $0x4e8] sm:$0xff]
        %v1167 = vld [vmem:[%s2 + $0x4f0] sm:$0xff]
        %v1168 = vld [vmem:[%s2 + $0x4f8] sm:$0xff]
        %v1169 = vld [vmem:[%s2 + $0x500] sm:$0xff]
        %v1170 = vld [vmem:[%s2 + $0x508] sm:$0xff]
        %v1171 = vld [vmem:[%s2 + $0x510] sm:$0xff]
        %v1172 = vld [vmem:[%s2 + $0x518] sm:$0xff]
        %v1173 = vld [vmem:[%s2 + $0x520] sm:$0xff]
        %v1174 = vld [vmem:[%s2 + $0x528] sm:$0xff]
        %v1175 = vld [vmem:[%s2 + $0x530] sm:$0xff]
        %v1176 = vld [vmem:[%s2 + $0x538] sm:$0xff]
        %v1177 = vld [vmem:[%s2 + $0x540] sm:$0xff]
        %v1178 = vld [vmem:[%s2 + $0x548] sm:$0xff]
        %v1179 = vld [vmem:[%s2 + $0x550] sm:$0xff]
        %v1180 = vld [vmem:[%s2 + $0x558] sm:$0xff]
        %v1181 = vld [vmem:[%s2 + $0x560] sm:$0xff]
        %v1182 = vld [vmem:[%s2 + $0x568] sm:$0xff]
        %v1183 = vld [vmem:[%s2 + $0x570] sm:$0xff]
        %v1184 = vld [vmem:[%s2 + $0x578] sm:$0xff]
        %v1185 = vld [vmem:[%s2 + $0x580] sm:$0xff]
        %v1186 = vld [vmem:[%s2 + $0x588] sm:$0xff]
        %v1187 = vld [vmem:[%s2 + $0x590] sm:$0xff]
        %v1188 = vld [vmem:[%s2 + $0x598] sm:$0xff]
        %v1189 = vld [vmem:[%s2 + $0x5a0] sm:$0xff]
        %v1190 = vld [vmem:[%s2 + $0x5a8] sm:$0xff]
        %v1191 = vld [vmem:[%s2 + $0x5b0] sm:$0xff]
        %v1192 = vld [vmem:[%s2 + $0x5b8] sm:$0xff]
        %v1193 = vld [vmem:[%s2 + $0x5c0] sm:$0xff]
        %v1194 = vld [vmem:[%s2 + $0x5c8] sm:$0xff]
        %v1195 = vld [vmem:[%s2 + $0x5d0] sm:$0xff]
        %v1196 = vld [vmem:[%s2 + $0x5d8] sm:$0xff]
        %v1197 = vld [vmem:[%s2 + $0x5e0] sm:$0xff]
        %v1198 = vld [vmem:[%s2 + $0x5e8] sm:$0xff]
        %v1199 = vld [vmem:[%s2 + $0x5f0] sm:$0xff]
        %v1200 = vld [vmem:[%s2 + $0x5f8] sm:$0xff]
        %v1201 = vld [vmem:[%s2 + $0x600] sm:$0xff]
        %v1202 = vld [vmem:[%s2 + $0x608] sm:$0xff]
        %v1203 = vld [vmem:[%s2 + $0x610] sm:$0xff]
        %v1204 = vld [vmem:[%s2 + $0x618] sm:$0xff]
        %v1205 = vld [vmem:[%s2 + $0x620] sm:$0xff]
        %v1206 = vld [vmem:[%s2 + $0x628] sm:$0xff]
        %v1207 = vld [vmem:[%s2 + $0x630] sm:$0xff]
        %v1208 = vld [vmem:[%s2 + $0x638] sm:$0xff]
        %v1209 = vld [vmem:[%s2 + $0x640] sm:$0xff]
        %v1210 = vld [vmem:[%s2 + $0x648] sm:$0xff]
        %v1211 = vld [vmem:[%s2 + $0x650] sm:$0xff]
        %v1212 = vld [vmem:[%s2 + $0x658] sm:$0xff]
        %v1213 = vld [vmem:[%s2 + $0x660] sm:$0xff]
        %v1214 = vld [vmem:[%s2 + $0x668] sm:$0xff]
        %v1215 = vld [vmem:[%s2 + $0x670] sm:$0xff]
        %v1216 = vld [vmem:[%s2 + $0x678] sm:$0xff]
        %v1217 = vld [vmem:[%s2 + $0x680] sm:$0xff]
        %v1218 = vld [vmem:[%s2 + $0x688] sm:$0xff]
        %v1219 = vld [vmem:[%s2 + $0x690] sm:$0xff]
        %v1220 = vld [vmem:[%s2 + $0x698] sm:$0xff]
        %v1221 = vld [vmem:[%s2 + $0x6a0] sm:$0xff]
        %v1222 = vld [vmem:[%s2 + $0x6a8] sm:$0xff]
        %v1223 = vld [vmem:[%s2 + $0x6b0] sm:$0xff]
        %v1224 = vld [vmem:[%s2 + $0x6b8] sm:$0xff]
        %v1225 = vld [vmem:[%s2 + $0x6c0] sm:$0xff]
        %v1226 = vld [vmem:[%s2 + $0x6c8] sm:$0xff]
        %v1227 = vld [vmem:[%s2 + $0x6d0] sm:$0xff]
        %v1228 = vld [vmem:[%s2 + $0x6d8] sm:$0xff]
        %v1229 = vld [vmem:[%s2 + $0x6e0] sm:$0xff]
        %v1230 = vld [vmem:[%s2 + $0x6e8] sm:$0xff]
        %v1231 = vld [vmem:[%s2 + $0x6f0] sm:$0xff]
        %v1232 = vld [vmem:[%s2 + $0x6f8] sm:$0xff]
        %v1233 = vld [vmem:[%s2 + $0x700] sm:$0xff]
        %v1234 = vld [vmem:[%s2 + $0x708] sm:$0xff]
        %v1235 = vld [vmem:[%s2 + $0x710] sm:$0xff]
        %v1236 = vld [vmem:[%s2 + $0x718] sm:$0xff]
        %v1237 = vld [vmem:[%s2 + $0x720] sm:$0xff]
        %v1238 = vld [vmem:[%s2 + $0x728] sm:$0xff]
        %v1239 = vld [vmem:[%s2 + $0x730] sm:$0xff]
        %v1240 = vld [vmem:[%s2 + $0x738] sm:$0xff]
        %v1241 = vld [vmem:[%s2 + $0x740] sm:$0xff]
        %v1242 = vld [vmem:[%s2 + $0x748] sm:$0xff]
        %v1243 = vld [vmem:[%s2 + $0x750] sm:$0xff]
        %v1244 = vld [vmem:[%s2 + $0x758] sm:$0xff]
        %v1245 = vld [vmem:[%s2 + $0x760] sm:$0xff]
        %v1246 = vld [vmem:[%s2 + $0x768] sm:$0xff]
        %v1247 = vld [vmem:[%s2 + $0x770] sm:$0xff]
        %v1248 = vld [vmem:[%s2 + $0x778] sm:$0xff]
        %v1249 = vld [vmem:[%s2 + $0x780] sm:$0xff]
        %v1250 = vld [vmem:[%s2 + $0x788] sm:$0xff]
        %v1251 = vld [vmem:[%s2 + $0x790] sm:$0xff]
        %v1252 = vld [vmem:[%s2 + $0x798] sm:$0xff]
        %v1253 = vld [vmem:[%s2 + $0x7a0] sm:$0xff]
        %v1254 = vld [vmem:[%s2 + $0x7a8] sm:$0xff]
        %v1255 = vld [vmem:[%s2 + $0x7b0] sm:$0xff]
        %v1256 = vld [vmem:[%s2 + $0x7b8] sm:$0xff]
        %v1257 = vld [vmem:[%s2 + $0x7c0] sm:$0xff]
        %v1258 = vld [vmem:[%s2 + $0x7c8] sm:$0xff]
        %v1259 = vld [vmem:[%s2 + $0x7d0] sm:$0xff]
        %v1260 = vld [vmem:[%s2 + $0x7d8] sm:$0xff]
        %v1261 = vld [vmem:[%s2 + $0x7e0] sm:$0xff]
        %v1262 = vld [vmem:[%s2 + $0x7e8] sm:$0xff]
        %v1263 = vld [vmem:[%s2 + $0x7f0] sm:$0xff]
        %v1264 = vld [vmem:[%s2 + $0x7f8] sm:$0xff]
        %v1265 = vld [vmem:[%s2 + $0x800] sm:$0xff]
        %v1266 = vld [vmem:[%s2 + $0x808] sm:$0xff]
        %v1267 = vld [vmem:[%s2 + $0x810] sm:$0xff]
        %v1268 = vld [vmem:[%s2 + $0x818] sm:$0xff]
        %v1269 = vld [vmem:[%s2 + $0x820] sm:$0xff]
        %v1270 = vld [vmem:[%s2 + $0x828] sm:$0xff]
        %v1271 = vld [vmem:[%s2 + $0x830] sm:$0xff]
        %v1272 = vld [vmem:[%s2 + $0x838] sm:$0xff]
        %v1273 = vld [vmem:[%s2 + $0x840] sm:$0xff]
        %v1274 = vld [vmem:[%s2 + $0x848] sm:$0xff]
        %v1275 = vld [vmem:[%s2 + $0x850] sm:$0xff]
        %v1276 = vld [vmem:[%s2 + $0x858] sm:$0xff]
        %v1277 = vld [vmem:[%s2 + $0x860] sm:$0xff]
        %v1278 = vld [vmem:[%s2 + $0x868] sm:$0xff]
        %v1279 = vld [vmem:[%s2 + $0x870] sm:$0xf]
        %v1280 = vld [vmem:[%s2 + $0x878] sm:$0xf]
        %v1281 = vld [vmem:[%s2 + $0x880] sm:$0xf]
        %vm1282 = vcmask 687104
        %v1284 = vsel %vm1282, %v1008, 0
        %vm1286 = vcmask 1043456
        %v1288 = vsel %vm1286, %v1279, 0
        %v1291 = vsel %vm1286, %v1280, 0
        %v1294 = vsel %vm1286, %v1281, 0
        %1296 = vmatprep.subr.mxu0 %v1055
        %1297 = vmatpush1.msra.mxu0 %v1054
        %1298 = vmatprep.subr.mxu0 %v1052
        %1299 = vmatpush1.msra.mxu0 %v1051
        %1300 = vmatprep.subr.mxu0 %v1049
        %1301 = vmatpush1.msra.mxu0 %v1048
        %1302 = vmatprep.subr.mxu0 %v1046
        %1303 = vmatpush1.msra.mxu0 %v1045
        %1304 = vmatprep.subr.mxu0 %v1043
        %1305 = vmatpush1.msra.mxu0 %v1042
        %1306 = vmatprep.subr.mxu0 %v1040
        %1307 = vmatpush1.msra.mxu0 %v1039
        %1308 = vmatprep.subr.mxu0 %v1037
        %1309 = vmatpush1.msra.mxu0 %v1036
        %1310 = vmatprep.subr.mxu0 %v1034
        %1311 = vmatpush1.msra.mxu0 %v1033
        %1312 = vmatprep.subr.mxu0 %v1031
        %1313 = vmatpush1.msra.mxu0 %v1030
        %1314 = vmatprep.subr.mxu0 %v1028
        %1315 = vmatpush1.msra.mxu0 %v1027
        %1316 = vmatprep.subr.mxu0 %v1025
        %1317 = vmatpush1.msra.mxu0 %v1024
        %1318 = vmatprep.subr.mxu0 %v1022
        %1319 = vmatpush1.msra.mxu0 %v1021
        %1320 = vmatprep.subr.mxu0 %v1019
        %1321 = vmatpush1.msra.mxu0 %v1018
        %1322 = vmatprep.subr.mxu0 %v1016
        %1323 = vmatpush1.msra.mxu0 %v1015
        %1324 = vmatprep.subr.mxu0 %v1013
        %1325 = vmatpush1.msra.mxu0 %v1012
        %1326 = vmatprep.subr.mxu0 %v1010
        %1327 = vmatpush1.msra.mxu0 %v1009
        %1328 = vmatprep.subr.mxu0 %v1103
        %1329 = vmatpush2.msra.mxu0 %v1102
        %1330 = vmatprep.subr.mxu0 %v1100
        %1331 = vmatpush2.msra.mxu0 %v1099
        %1332 = vmatprep.subr.mxu0 %v1097
        %1333 = vmatpush2.msra.mxu0 %v1096
        %1334 = vmatprep.subr.mxu0 %v1094
        %1335 = vmatpush2.msra.mxu0 %v1093
        %1336 = vmatprep.subr.mxu0 %v1091
        %1337 = vmatpush2.msra.mxu0 %v1090
        %1338 = vmatprep.subr.mxu0 %v1088
        %1339 = vmatpush2.msra.mxu0 %v1087
        %1340 = vmatprep.subr.mxu0 %v1085
        %1341 = vmatpush2.msra.mxu0 %v1084
        %1342 = vmatprep.subr.mxu0 %v1082
        %1343 = vmatpush2.msra.mxu0 %v1081
        %1344 = vmatprep.subr.mxu0 %v1079
        %1345 = vmatpush2.msra.mxu0 %v1078
        %1346 = vmatprep.subr.mxu0 %v1076
        %1347 = vmatpush2.msra.mxu0 %v1075
        %1348 = vmatprep.subr.mxu0 %v1073
        %1349 = vmatpush2.msra.mxu0 %v1072
        %1350 = vmatprep.subr.mxu0 %v1070
        %1351 = vmatpush2.msra.mxu0 %v1069
        %1352 = vmatprep.subr.mxu0 %v1067
        %1353 = vmatpush2.msra.mxu0 %v1066
        %1354 = vmatprep.subr.mxu0 %v1064
        %1355 = vmatpush2.msra.mxu0 %v1063
        %1356 = vmatprep.subr.mxu0 %v1061
        %1357 = vmatpush2.msra.mxu0 %v1060
        %1358 = vmatprep.subr.mxu0 %v1058
        %1359 = vmatpush2.msra.mxu0 %v1057
        %1360 = vmatprep.mubr.f32.mxu0 %v1004
        %1361 = vmatmul.mubr.f32.gmra.mxu0 %v1003
        %v1362 = vpop.f32.mrf.mxu0
        %v1363 = vadd.f32 0.0, %v1362
        %v1364 = vpop.f32.mrf.mxu0
        %v1365 = vadd.f32 0.0, %v1364
        %1366 = vdwg.mxu0
        %1367 = vmatprep.subr.mxu0 %v1151
        %1368 = vmatpush1.msra.mxu0 %v1150
        %1369 = vmatprep.subr.mxu0 %v1148
        %1370 = vmatpush1.msra.mxu0 %v1147
        %1371 = vmatprep.subr.mxu0 %v1145
        %1372 = vmatpush1.msra.mxu0 %v1144
        %1373 = vmatprep.subr.mxu0 %v1142
        %1374 = vmatpush1.msra.mxu0 %v1141
        %1375 = vmatprep.subr.mxu0 %v1139
        %1376 = vmatpush1.msra.mxu0 %v1138
        %1377 = vmatprep.subr.mxu0 %v1136
        %1378 = vmatpush1.msra.mxu0 %v1135
        %1379 = vmatprep.subr.mxu0 %v1133
        %1380 = vmatpush1.msra.mxu0 %v1132
        %1381 = vmatprep.subr.mxu0 %v1130
        %1382 = vmatpush1.msra.mxu0 %v1129
        %1383 = vmatprep.subr.mxu0 %v1127
        %1384 = vmatpush1.msra.mxu0 %v1126
        %1385 = vmatprep.subr.mxu0 %v1124
        %1386 = vmatpush1.msra.mxu0 %v1123
        %1387 = vmatprep.subr.mxu0 %v1121
        %1388 = vmatpush1.msra.mxu0 %v1120
        %1389 = vmatprep.subr.mxu0 %v1118
        %1390 = vmatpush1.msra.mxu0 %v1117
        %1391 = vmatprep.subr.mxu0 %v1115
        %1392 = vmatpush1.msra.mxu0 %v1114
        %1393 = vmatprep.subr.mxu0 %v1112
        %1394 = vmatpush1.msra.mxu0 %v1111
        %1395 = vmatprep.subr.mxu0 %v1109
        %1396 = vmatpush1.msra.mxu0 %v1108
        %1397 = vmatprep.subr.mxu0 %v1106
        %1398 = vmatpush1.msra.mxu0 %v1105
        %1399 = vmatprep.subr.mxu0 %v1199
        %1400 = vmatpush2.msra.mxu0 %v1198
        %1401 = vmatprep.subr.mxu0 %v1196
        %1402 = vmatpush2.msra.mxu0 %v1195
        %1403 = vmatprep.subr.mxu0 %v1193
        %1404 = vmatpush2.msra.mxu0 %v1192
        %1405 = vmatprep.subr.mxu0 %v1190
        %1406 = vmatpush2.msra.mxu0 %v1189
        %1407 = vmatprep.subr.mxu0 %v1187
        %1408 = vmatpush2.msra.mxu0 %v1186
        %1409 = vmatprep.subr.mxu0 %v1184
        %1410 = vmatpush2.msra.mxu0 %v1183
        %1411 = vmatprep.subr.mxu0 %v1181
        %1412 = vmatpush2.msra.mxu0 %v1180
        %1413 = vmatprep.subr.mxu0 %v1178
        %1414 = vmatpush2.msra.mxu0 %v1177
        %1415 = vmatprep.subr.mxu0 %v1175
        %1416 = vmatpush2.msra.mxu0 %v1174
        %1417 = vmatprep.subr.mxu0 %v1172
        %1418 = vmatpush2.msra.mxu0 %v1171
        %1419 = vmatprep.subr.mxu0 %v1169
        %1420 = vmatpush2.msra.mxu0 %v1168
        %1421 = vmatprep.subr.mxu0 %v1166
        %1422 = vmatpush2.msra.mxu0 %v1165
        %1423 = vmatprep.subr.mxu0 %v1163
        %1424 = vmatpush2.msra.mxu0 %v1162
        %1425 = vmatprep.subr.mxu0 %v1160
        %1426 = vmatpush2.msra.mxu0 %v1159
        %1427 = vmatprep.subr.mxu0 %v1157
        %1428 = vmatpush2.msra.mxu0 %v1156
        %1429 = vmatprep.subr.mxu0 %v1154
        %1430 = vmatpush2.msra.mxu0 %v1153
        %1431 = vmatprep.mubr.f32.mxu0 %v1006
        %1432 = vmatmul.mubr.f32.gmra.mxu0 %v1005
        %v1433 = vpop.f32.mrf.mxu0
        %v1434 = vadd.f32 %v1363, %v1433
        %v1435 = vpop.f32.mrf.mxu0
        %v1436 = vadd.f32 %v1365, %v1435
        %1437 = vdwg.mxu0
        %1438 = vmatprep.subr.mxu0 %v1247
        %1439 = vmatpush1.msra.mxu0 %v1246
        %1440 = vmatprep.subr.mxu0 %v1244
        %1441 = vmatpush1.msra.mxu0 %v1243
        %1442 = vmatprep.subr.mxu0 %v1241
        %1443 = vmatpush1.msra.mxu0 %v1240
        %1444 = vmatprep.subr.mxu0 %v1238
        %1445 = vmatpush1.msra.mxu0 %v1237
        %1446 = vmatprep.subr.mxu0 %v1235
        %1447 = vmatpush1.msra.mxu0 %v1234
        %1448 = vmatprep.subr.mxu0 %v1232
        %1449 = vmatpush1.msra.mxu0 %v1231
        %1450 = vmatprep.subr.mxu0 %v1229
        %1451 = vmatpush1.msra.mxu0 %v1228
        %1452 = vmatprep.subr.mxu0 %v1226
        %1453 = vmatpush1.msra.mxu0 %v1225
        %1454 = vmatprep.subr.mxu0 %v1223
        %1455 = vmatpush1.msra.mxu0 %v1222
        %1456 = vmatprep.subr.mxu0 %v1220
        %1457 = vmatpush1.msra.mxu0 %v1219
        %1458 = vmatprep.subr.mxu0 %v1217
        %1459 = vmatpush1.msra.mxu0 %v1216
        %1460 = vmatprep.subr.mxu0 %v1214
        %1461 = vmatpush1.msra.mxu0 %v1213
        %1462 = vmatprep.subr.mxu0 %v1211
        %1463 = vmatpush1.msra.mxu0 %v1210
        %1464 = vmatprep.subr.mxu0 %v1208
        %1465 = vmatpush1.msra.mxu0 %v1207
        %1466 = vmatprep.subr.mxu0 %v1205
        %1467 = vmatpush1.msra.mxu0 %v1204
        %1468 = vmatprep.subr.mxu0 %v1202
        %1469 = vmatpush1.msra.mxu0 %v1201
        %1470 = vmatprep.subr.mxu0 0.0
        %1471 = vmatpush2.msra.mxu0 0.0
        %1472 = vmatprep.subr.mxu0 0.0
        %1473 = vmatpush2.msra.mxu0 0.0
        %1474 = vmatprep.subr.mxu0 0.0
        %1475 = vmatpush2.msra.mxu0 0.0
        %1476 = vmatprep.subr.mxu0 0.0
        %1477 = vmatpush2.msra.mxu0 0.0
        %1478 = vmatprep.subr.mxu0 0.0
        %1479 = vmatpush2.msra.mxu0 0.0
        %1480 = vmatprep.subr.mxu0 %v1291
        %1481 = vmatpush2.msra.mxu0 %v1288
        %1482 = vmatprep.subr.mxu0 %v1277
        %1483 = vmatpush2.msra.mxu0 %v1276
        %1484 = vmatprep.subr.mxu0 %v1274
        %1485 = vmatpush2.msra.mxu0 %v1273
        %1486 = vmatprep.subr.mxu0 %v1271
        %1487 = vmatpush2.msra.mxu0 %v1270
        %1488 = vmatprep.subr.mxu0 %v1268
        %1489 = vmatpush2.msra.mxu0 %v1267
        %1490 = vmatprep.subr.mxu0 %v1265
        %1491 = vmatpush2.msra.mxu0 %v1264
        %1492 = vmatprep.subr.mxu0 %v1262
        %1493 = vmatpush2.msra.mxu0 %v1261
        %1494 = vmatprep.subr.mxu0 %v1259
        %1495 = vmatpush2.msra.mxu0 %v1258
        %1496 = vmatprep.subr.mxu0 %v1256
        %1497 = vmatpush2.msra.mxu0 %v1255
        %1498 = vmatprep.subr.mxu0 %v1253
        %1499 = vmatpush2.msra.mxu0 %v1252
        %1500 = vmatprep.subr.mxu0 %v1250
        %1501 = vmatpush2.msra.mxu0 %v1249
        %1502 = vmatprep.mubr.f32.mxu0 %v1284
        %1503 = vmatmul.mubr.f32.gmra.mxu0 %v1007
        %v1504 = vpop.f32.mrf.mxu0
        %v1505 = vadd.f32 %v1434, %v1504
        %v1506 = vpop.f32.mrf.mxu0
        %v1507 = vadd.f32 %v1436, %v1506
        %1508 = vdwg.mxu0
        %1509 = vmatprep.subr.mxu0 0.0
        %1510 = vmatpush1.msra.mxu0 %v1056
        %1511 = vmatprep.subr.mxu0 0.0
        %1512 = vmatpush1.msra.mxu0 %v1053
        %1513 = vmatprep.subr.mxu0 0.0
        %1514 = vmatpush1.msra.mxu0 %v1050
        %1515 = vmatprep.subr.mxu0 0.0
        %1516 = vmatpush1.msra.mxu0 %v1047
        %1517 = vmatprep.subr.mxu0 0.0
        %1518 = vmatpush1.msra.mxu0 %v1044
        %1519 = vmatprep.subr.mxu0 0.0
        %1520 = vmatpush1.msra.mxu0 %v1041
        %1521 = vmatprep.subr.mxu0 0.0
        %1522 = vmatpush1.msra.mxu0 %v1038
        %1523 = vmatprep.subr.mxu0 0.0
        %1524 = vmatpush1.msra.mxu0 %v1035
        %1525 = vmatprep.subr.mxu0 0.0
        %1526 = vmatpush1.msra.mxu0 %v1032
        %1527 = vmatprep.subr.mxu0 0.0
        %1528 = vmatpush1.msra.mxu0 %v1029
        %1529 = vmatprep.subr.mxu0 0.0
        %1530 = vmatpush1.msra.mxu0 %v1026
        %1531 = vmatprep.subr.mxu0 0.0
        %1532 = vmatpush1.msra.mxu0 %v1023
        %1533 = vmatprep.subr.mxu0 0.0
        %1534 = vmatpush1.msra.mxu0 %v1020
        %1535 = vmatprep.subr.mxu0 0.0
        %1536 = vmatpush1.msra.mxu0 %v1017
        %1537 = vmatprep.subr.mxu0 0.0
        %1538 = vmatpush1.msra.mxu0 %v1014
        %1539 = vmatprep.subr.mxu0 0.0
        %1540 = vmatpush1.msra.mxu0 %v1011
        %1541 = vmatprep.subr.mxu0 0.0
        %1542 = vmatpush2.msra.mxu0 %v1104
        %1543 = vmatprep.subr.mxu0 0.0
        %1544 = vmatpush2.msra.mxu0 %v1101
        %1545 = vmatprep.subr.mxu0 0.0
        %1546 = vmatpush2.msra.mxu0 %v1098
        %1547 = vmatprep.subr.mxu0 0.0
        %1548 = vmatpush2.msra.mxu0 %v1095
        %1549 = vmatprep.subr.mxu0 0.0
        %1550 = vmatpush2.msra.mxu0 %v1092
        %1551 = vmatprep.subr.mxu0 0.0
        %1552 = vmatpush2.msra.mxu0 %v1089
        %1553 = vmatprep.subr.mxu0 0.0
        %1554 = vmatpush2.msra.mxu0 %v1086
        %1555 = vmatprep.subr.mxu0 0.0
        %1556 = vmatpush2.msra.mxu0 %v1083
        %1557 = vmatprep.subr.mxu0 0.0
        %1558 = vmatpush2.msra.mxu0 %v1080
        %1559 = vmatprep.subr.mxu0 0.0
        %1560 = vmatpush2.msra.mxu0 %v1077
        %1561 = vmatprep.subr.mxu0 0.0
        %1562 = vmatpush2.msra.mxu0 %v1074
        %1563 = vmatprep.subr.mxu0 0.0
        %1564 = vmatpush2.msra.mxu0 %v1071
        %1565 = vmatprep.subr.mxu0 0.0
        %1566 = vmatpush2.msra.mxu0 %v1068
        %1567 = vmatprep.subr.mxu0 0.0
        %1568 = vmatpush2.msra.mxu0 %v1065
        %1569 = vmatprep.subr.mxu0 0.0
        %1570 = vmatpush2.msra.mxu0 %v1062
        %1571 = vmatprep.subr.mxu0 0.0
        %1572 = vmatpush2.msra.mxu0 %v1059
        %1573 = vmatprep.mubr.f32.mxu0 %v1004
        %1574 = vmatmul.mubr.f32.gmra.mxu0 %v1003
        %v1575 = vpop.f32.mrf.mxu0
        %v1576 = vadd.f32 0.0, %v1575
        %v1577 = vpop.f32.mrf.mxu0
        %1578 = vdwg.mxu0
        %1579 = vmatprep.subr.mxu0 0.0
        %1580 = vmatpush1.msra.mxu0 %v1152
        %1581 = vmatprep.subr.mxu0 0.0
        %1582 = vmatpush1.msra.mxu0 %v1149
        %1583 = vmatprep.subr.mxu0 0.0
        %1584 = vmatpush1.msra.mxu0 %v1146
        %1585 = vmatprep.subr.mxu0 0.0
        %1586 = vmatpush1.msra.mxu0 %v1143
        %1587 = vmatprep.subr.mxu0 0.0
        %1588 = vmatpush1.msra.mxu0 %v1140
        %1589 = vmatprep.subr.mxu0 0.0
        %1590 = vmatpush1.msra.mxu0 %v1137
        %1591 = vmatprep.subr.mxu0 0.0
        %1592 = vmatpush1.msra.mxu0 %v1134
        %1593 = vmatprep.subr.mxu0 0.0
        %1594 = vmatpush1.msra.mxu0 %v1131
        %1595 = vmatprep.subr.mxu0 0.0
        %1596 = vmatpush1.msra.mxu0 %v1128
        %1597 = vmatprep.subr.mxu0 0.0
        %1598 = vmatpush1.msra.mxu0 %v1125
        %1599 = vmatprep.subr.mxu0 0.0
        %1600 = vmatpush1.msra.mxu0 %v1122
        %1601 = vmatprep.subr.mxu0 0.0
        %1602 = vmatpush1.msra.mxu0 %v1119
        %1603 = vmatprep.subr.mxu0 0.0
        %1604 = vmatpush1.msra.mxu0 %v1116
        %1605 = vmatprep.subr.mxu0 0.0
        %1606 = vmatpush1.msra.mxu0 %v1113
        %1607 = vmatprep.subr.mxu0 0.0
        %1608 = vmatpush1.msra.mxu0 %v1110
        %1609 = vmatprep.subr.mxu0 0.0
        %1610 = vmatpush1.msra.mxu0 %v1107
        %1611 = vmatprep.subr.mxu0 0.0
        %1612 = vmatpush2.msra.mxu0 %v1200
        %1613 = vmatprep.subr.mxu0 0.0
        %1614 = vmatpush2.msra.mxu0 %v1197
        %1615 = vmatprep.subr.mxu0 0.0
        %1616 = vmatpush2.msra.mxu0 %v1194
        %1617 = vmatprep.subr.mxu0 0.0
        %1618 = vmatpush2.msra.mxu0 %v1191
        %1619 = vmatprep.subr.mxu0 0.0
        %1620 = vmatpush2.msra.mxu0 %v1188
        %1621 = vmatprep.subr.mxu0 0.0
        %1622 = vmatpush2.msra.mxu0 %v1185
        %1623 = vmatprep.subr.mxu0 0.0
        %1624 = vmatpush2.msra.mxu0 %v1182
        %1625 = vmatprep.subr.mxu0 0.0
        %1626 = vmatpush2.msra.mxu0 %v1179
        %1627 = vmatprep.subr.mxu0 0.0
        %1628 = vmatpush2.msra.mxu0 %v1176
        %1629 = vmatprep.subr.mxu0 0.0
        %1630 = vmatpush2.msra.mxu0 %v1173
        %1631 = vmatprep.subr.mxu0 0.0
        %1632 = vmatpush2.msra.mxu0 %v1170
        %1633 = vmatprep.subr.mxu0 0.0
        %1634 = vmatpush2.msra.mxu0 %v1167
        %1635 = vmatprep.subr.mxu0 0.0
        %1636 = vmatpush2.msra.mxu0 %v1164
        %1637 = vmatprep.subr.mxu0 0.0
        %1638 = vmatpush2.msra.mxu0 %v1161
        %1639 = vmatprep.subr.mxu0 0.0
        %1640 = vmatpush2.msra.mxu0 %v1158
        %1641 = vmatprep.subr.mxu0 0.0
        %1642 = vmatpush2.msra.mxu0 %v1155
        %1643 = vmatprep.mubr.f32.mxu0 %v1006
        %1644 = vmatmul.mubr.f32.gmra.mxu0 %v1005
        %v1645 = vpop.f32.mrf.mxu0
        %v1646 = vadd.f32 %v1576, %v1645
        %v1647 = vpop.f32.mrf.mxu0
        %1648 = vdwg.mxu0
        %1649 = vmatprep.subr.mxu0 0.0
        %1650 = vmatpush1.msra.mxu0 %v1248
        %1651 = vmatprep.subr.mxu0 0.0
        %1652 = vmatpush1.msra.mxu0 %v1245
        %1653 = vmatprep.subr.mxu0 0.0
        %1654 = vmatpush1.msra.mxu0 %v1242
        %1655 = vmatprep.subr.mxu0 0.0
        %1656 = vmatpush1.msra.mxu0 %v1239
        %1657 = vmatprep.subr.mxu0 0.0
        %1658 = vmatpush1.msra.mxu0 %v1236
        %1659 = vmatprep.subr.mxu0 0.0
        %1660 = vmatpush1.msra.mxu0 %v1233
        %1661 = vmatprep.subr.mxu0 0.0
        %1662 = vmatpush1.msra.mxu0 %v1230
        %1663 = vmatprep.subr.mxu0 0.0
        %1664 = vmatpush1.msra.mxu0 %v1227
        %1665 = vmatprep.subr.mxu0 0.0
        %1666 = vmatpush1.msra.mxu0 %v1224
        %1667 = vmatprep.subr.mxu0 0.0
        %1668 = vmatpush1.msra.mxu0 %v1221
        %1669 = vmatprep.subr.mxu0 0.0
        %1670 = vmatpush1.msra.mxu0 %v1218
        %1671 = vmatprep.subr.mxu0 0.0
        %1672 = vmatpush1.msra.mxu0 %v1215
        %1673 = vmatprep.subr.mxu0 0.0
        %1674 = vmatpush1.msra.mxu0 %v1212
        %1675 = vmatprep.subr.mxu0 0.0
        %1676 = vmatpush1.msra.mxu0 %v1209
        %1677 = vmatprep.subr.mxu0 0.0
        %1678 = vmatpush1.msra.mxu0 %v1206
        %1679 = vmatprep.subr.mxu0 0.0
        %1680 = vmatpush1.msra.mxu0 %v1203
        %1681 = vmatprep.subr.mxu0 0.0
        %1682 = vmatpush2.msra.mxu0 0.0
        %1683 = vmatprep.subr.mxu0 0.0
        %1684 = vmatpush2.msra.mxu0 0.0
        %1685 = vmatprep.subr.mxu0 0.0
        %1686 = vmatpush2.msra.mxu0 0.0
        %1687 = vmatprep.subr.mxu0 0.0
        %1688 = vmatpush2.msra.mxu0 0.0
        %1689 = vmatprep.subr.mxu0 0.0
        %1690 = vmatpush2.msra.mxu0 0.0
        %1691 = vmatprep.subr.mxu0 0.0
        %1692 = vmatpush2.msra.mxu0 %v1294
        %1693 = vmatprep.subr.mxu0 0.0
        %1694 = vmatpush2.msra.mxu0 %v1278
        %1695 = vmatprep.subr.mxu0 0.0
        %1696 = vmatpush2.msra.mxu0 %v1275
        %1697 = vmatprep.subr.mxu0 0.0
        %1698 = vmatpush2.msra.mxu0 %v1272
        %1699 = vmatprep.subr.mxu0 0.0
        %1700 = vmatpush2.msra.mxu0 %v1269
        %1701 = vmatprep.subr.mxu0 0.0
        %1702 = vmatpush2.msra.mxu0 %v1266
        %1703 = vmatprep.subr.mxu0 0.0
        %1704 = vmatpush2.msra.mxu0 %v1263
        %1705 = vmatprep.subr.mxu0 0.0
        %1706 = vmatpush2.msra.mxu0 %v1260
        %1707 = vmatprep.subr.mxu0 0.0
        %1708 = vmatpush2.msra.mxu0 %v1257
        %1709 = vmatprep.subr.mxu0 0.0
        %1710 = vmatpush2.msra.mxu0 %v1254
        %1711 = vmatprep.subr.mxu0 0.0
        %1712 = vmatpush2.msra.mxu0 %v1251
        %1713 = vmatprep.mubr.f32.mxu0 %v1284
        %1714 = vmatmul.mubr.f32.gmra.mxu0 %v1007
        %v1715 = vpop.f32.mrf.mxu0
        %v1716 = vadd.f32 %v1646, %v1715
        %v1717 = vpop.f32.mrf.mxu0
        %1718 = vdwg.mxu0
        %v1719 = vlog2.pop %v1505
        %v1720 = vmul.f32 %v1719, 0.6931472
        %v1721 = vlog2.pop %v1507
        %v1722 = vmul.f32 %v1721, 0.6931472
        %v1723 = vlog2.pop %v1716
        %v1724 = vmul.f32 %v1723, 0.6931472
        %v1725 = vld [vmem:[%s3] sm:$0xff]
        %v1726 = vld [vmem:[%s3 + $0x8] sm:$0xff]
        %v1727 = vld [vmem:[%s3 + $0x10] sm:$0xff]
        %v1728 = vld [vmem:[%s3 + $0x18] sm:$0xff]
        %v1729 = vld [vmem:[%s3 + $0x20] sm:$0xff]
        %v1730 = vld [vmem:[%s3 + $0x28] sm:$0xff]
        %v1731 = vld [vmem:[%s3 + $0x30] sm:$0xff]
        %v1732 = vld [vmem:[%s3 + $0x38] sm:$0xff]
        %v1733 = vld [vmem:[%s3 + $0x40] sm:$0xff]
        %v1734 = vld [vmem:[%s3 + $0x48] sm:$0xff]
        %v1735 = vld [vmem:[%s3 + $0x50] sm:$0xff]
        %v1736 = vld [vmem:[%s3 + $0x58] sm:$0xff]
        %v1737 = vld [vmem:[%s3 + $0x60] sm:$0xff]
        %v1738 = vld [vmem:[%s3 + $0x68] sm:$0xff]
        %v1739 = vld [vmem:[%s3 + $0x70] sm:$0xff]
        %v1740 = vld [vmem:[%s3 + $0x78] sm:$0xff]
        %v1741 = vld [vmem:[%s3 + $0x80] sm:$0xff]
        %v1742 = vld [vmem:[%s3 + $0x88] sm:$0xff]
        %v1743 = vld [vmem:[%s3 + $0x90] sm:$0xff]
        %v1744 = vld [vmem:[%s3 + $0x98] sm:$0xff]
        %v1745 = vld [vmem:[%s3 + $0xa0] sm:$0xff]
        %v1746 = vld [vmem:[%s3 + $0xa8] sm:$0xff]
        %v1747 = vld [vmem:[%s3 + $0xb0] sm:$0xff]
        %v1748 = vld [vmem:[%s3 + $0xb8] sm:$0xff]
        %v1749 = vld [vmem:[%s3 + $0xc0] sm:$0xff]
        %v1750 = vld [vmem:[%s3 + $0xc8] sm:$0xff]
        %v1751 = vld [vmem:[%s3 + $0xd0] sm:$0xff]
        %v1752 = vld [vmem:[%s3 + $0xd8] sm:$0xff]
        %v1753 = vld [vmem:[%s3 + $0xe0] sm:$0xff]
        %v1754 = vld [vmem:[%s3 + $0xe8] sm:$0xff]
        %v1755 = vld [vmem:[%s3 + $0xf0] sm:$0xff]
        %v1756 = vld [vmem:[%s3 + $0xf8] sm:$0xff]
        %v1757 = vld [vmem:[%s3 + $0x100] sm:$0xff]
        %v1758 = vld [vmem:[%s3 + $0x108] sm:$0xff]
        %v1759 = vld [vmem:[%s3 + $0x110] sm:$0xff]
        %v1760 = vld [vmem:[%s3 + $0x118] sm:$0xff]
        %v1761 = vld [vmem:[%s3 + $0x120] sm:$0xff]
        %v1762 = vld [vmem:[%s3 + $0x128] sm:$0xff]
        %v1763 = vld [vmem:[%s3 + $0x130] sm:$0xff]
        %v1764 = vld [vmem:[%s3 + $0x138] sm:$0xff]
        %v1765 = vld [vmem:[%s3 + $0x140] sm:$0xff]
        %v1766 = vld [vmem:[%s3 + $0x148] sm:$0xff]
        %v1767 = vld [vmem:[%s3 + $0x150] sm:$0xff]
        %v1768 = vld [vmem:[%s3 + $0x158] sm:$0xff]
        %v1769 = vld [vmem:[%s3 + $0x160] sm:$0xff]
        %v1770 = vld [vmem:[%s3 + $0x168] sm:$0xff]
        %v1771 = vld [vmem:[%s3 + $0x170] sm:$0xff]
        %v1772 = vld [vmem:[%s3 + $0x178] sm:$0xff]
        %v1773 = vld [vmem:[%s3 + $0x180] sm:$0xff]
        %v1774 = vld [vmem:[%s3 + $0x188] sm:$0xff]
        %v1775 = vld [vmem:[%s3 + $0x190] sm:$0xff]
        %v1776 = vld [vmem:[%s3 + $0x198] sm:$0xff]
        %v1777 = vld [vmem:[%s3 + $0x1a0] sm:$0xff]
        %v1778 = vld [vmem:[%s3 + $0x1a8] sm:$0xff]
        %v1779 = vld [vmem:[%s3 + $0x1b0] sm:$0xff]
        %v1780 = vld [vmem:[%s3 + $0x1b8] sm:$0xff]
        %v1781 = vld [vmem:[%s3 + $0x1c0] sm:$0xff]
        %v1782 = vld [vmem:[%s3 + $0x1c8] sm:$0xff]
        %v1783 = vld [vmem:[%s3 + $0x1d0] sm:$0xff]
        %v1784 = vld [vmem:[%s3 + $0x1d8] sm:$0xff]
        %v1785 = vld [vmem:[%s3 + $0x1e0] sm:$0xff]
        %v1786 = vld [vmem:[%s3 + $0x1e8] sm:$0xff]
        %v1787 = vld [vmem:[%s3 + $0x1f0] sm:$0xff]
        %v1788 = vld [vmem:[%s3 + $0x1f8] sm:$0xff]
        %v1789 = vld [vmem:[%s3 + $0x200] sm:$0xff]
        %v1790 = vld [vmem:[%s3 + $0x208] sm:$0xff]
        %v1791 = vld [vmem:[%s3 + $0x210] sm:$0xff]
        %v1792 = vld [vmem:[%s3 + $0x218] sm:$0xff]
        %v1793 = vld [vmem:[%s3 + $0x220] sm:$0xff]
        %v1794 = vld [vmem:[%s3 + $0x228] sm:$0xff]
        %v1795 = vld [vmem:[%s3 + $0x230] sm:$0xff]
        %v1796 = vld [vmem:[%s3 + $0x238] sm:$0xff]
        %v1797 = vld [vmem:[%s3 + $0x240] sm:$0xff]
        %v1798 = vld [vmem:[%s3 + $0x248] sm:$0xff]
        %v1799 = vld [vmem:[%s3 + $0x250] sm:$0xff]
        %v1800 = vld [vmem:[%s3 + $0x258] sm:$0xff]
        %v1801 = vld [vmem:[%s3 + $0x260] sm:$0xff]
        %v1802 = vld [vmem:[%s3 + $0x268] sm:$0xff]
        %v1803 = vld [vmem:[%s3 + $0x270] sm:$0xff]
        %v1804 = vld [vmem:[%s3 + $0x278] sm:$0xff]
        %v1805 = vld [vmem:[%s3 + $0x280] sm:$0xff]
        %v1806 = vld [vmem:[%s3 + $0x288] sm:$0xff]
        %v1807 = vld [vmem:[%s3 + $0x290] sm:$0xff]
        %v1808 = vld [vmem:[%s3 + $0x298] sm:$0xff]
        %v1809 = vld [vmem:[%s3 + $0x2a0] sm:$0xff]
        %v1810 = vld [vmem:[%s3 + $0x2a8] sm:$0xff]
        %v1811 = vld [vmem:[%s3 + $0x2b0] sm:$0xff]
        %v1812 = vld [vmem:[%s3 + $0x2b8] sm:$0xff]
        %v1813 = vld [vmem:[%s3 + $0x2c0] sm:$0xff]
        %v1814 = vld [vmem:[%s3 + $0x2c8] sm:$0xff]
        %v1815 = vld [vmem:[%s3 + $0x2d0] sm:$0xff]
        %v1816 = vld [vmem:[%s3 + $0x2d8] sm:$0xff]
        %v1817 = vld [vmem:[%s3 + $0x2e0] sm:$0xff]
        %v1818 = vld [vmem:[%s3 + $0x2e8] sm:$0xff]
        %v1819 = vld [vmem:[%s3 + $0x2f0] sm:$0xff]
        %v1820 = vld [vmem:[%s3 + $0x2f8] sm:$0xff]
        %v1821 = vld [vmem:[%s3 + $0x300] sm:$0xff]
        %v1822 = vld [vmem:[%s3 + $0x308] sm:$0xff]
        %v1823 = vld [vmem:[%s3 + $0x310] sm:$0xff]
        %v1824 = vld [vmem:[%s3 + $0x318] sm:$0xff]
        %v1825 = vld [vmem:[%s3 + $0x320] sm:$0xff]
        %v1826 = vld [vmem:[%s3 + $0x328] sm:$0xff]
        %v1827 = vld [vmem:[%s3 + $0x330] sm:$0xff]
        %v1828 = vld [vmem:[%s3 + $0x338] sm:$0xff]
        %v1829 = vld [vmem:[%s3 + $0x340] sm:$0xff]
        %v1830 = vld [vmem:[%s3 + $0x348] sm:$0xff]
        %v1831 = vld [vmem:[%s3 + $0x350] sm:$0xff]
        %v1832 = vld [vmem:[%s3 + $0x358] sm:$0xff]
        %v1833 = vld [vmem:[%s3 + $0x360] sm:$0xff]
        %v1834 = vld [vmem:[%s3 + $0x368] sm:$0xff]
        %v1835 = vld [vmem:[%s3 + $0x370] sm:$0xff]
        %v1836 = vld [vmem:[%s3 + $0x378] sm:$0xff]
        %v1837 = vld [vmem:[%s3 + $0x380] sm:$0xff]
        %v1838 = vld [vmem:[%s3 + $0x388] sm:$0xff]
        %v1839 = vld [vmem:[%s3 + $0x390] sm:$0xff]
        %v1840 = vld [vmem:[%s3 + $0x398] sm:$0xff]
        %v1841 = vld [vmem:[%s3 + $0x3a0] sm:$0xff]
        %v1842 = vld [vmem:[%s3 + $0x3a8] sm:$0xff]
        %v1843 = vld [vmem:[%s3 + $0x3b0] sm:$0xff]
        %v1844 = vld [vmem:[%s3 + $0x3b8] sm:$0xff]
        %v1845 = vld [vmem:[%s3 + $0x3c0] sm:$0xff]
        %v1846 = vld [vmem:[%s3 + $0x3c8] sm:$0xff]
        %v1847 = vld [vmem:[%s3 + $0x3d0] sm:$0xff]
        %v1848 = vld [vmem:[%s3 + $0x3d8] sm:$0xff]
        %v1849 = vld [vmem:[%s3 + $0x3e0] sm:$0xff]
        %v1850 = vld [vmem:[%s3 + $0x3e8] sm:$0xff]
        %v1851 = vld [vmem:[%s3 + $0x3f0] sm:$0xff]
        %v1852 = vld [vmem:[%s3 + $0x3f8] sm:$0xff]
        %v1853 = vld [vmem:[%s3 + $0x400] sm:$0xff]
        %v1854 = vld [vmem:[%s4] sm:$0x7]
        %v1856 = vlaneseq
        %v1857 = vshrl.u32 %v1856, 7
        %v1858 = vsub.s32 0, %v1857
        %v1859 = vrot.slane %v1854, %v1858
        %v1860 = vlaneseq
        %v1861 = vshrl.u32 %v1860, 7
        %v1862 = vsub.s32 1, %v1861
        %v1863 = vrot.slane %v1854, %v1862
        %v1864 = vlaneseq
        %v1865 = vshrl.u32 %v1864, 7
        %v1866 = vsub.s32 2, %v1865
        %v1867 = vrot.slane %v1854, %v1866
        %vm1871 = vcmask 719872
        %v1873 = vsel %vm1871, %v1724, 0
        %1875 = vmatprep.subr.mxu0 %v1771
        %1876 = vmatpush1.msra.mxu0 %v1770
        %1877 = vmatprep.subr.mxu0 %v1768
        %1878 = vmatpush1.msra.mxu0 %v1767
        %1879 = vmatprep.subr.mxu0 %v1765
        %1880 = vmatpush1.msra.mxu0 %v1764
        %1881 = vmatprep.subr.mxu0 %v1762
        %1882 = vmatpush1.msra.mxu0 %v1761
        %1883 = vmatprep.subr.mxu0 %v1759
        %1884 = vmatpush1.msra.mxu0 %v1758
        %1885 = vmatprep.subr.mxu0 %v1756
        %1886 = vmatpush1.msra.mxu0 %v1755
        %1887 = vmatprep.subr.mxu0 %v1753
        %1888 = vmatpush1.msra.mxu0 %v1752
        %1889 = vmatprep.subr.mxu0 %v1750
        %1890 = vmatpush1.msra.mxu0 %v1749
        %1891 = vmatprep.subr.mxu0 %v1747
        %1892 = vmatpush1.msra.mxu0 %v1746
        %1893 = vmatprep.subr.mxu0 %v1744
        %1894 = vmatpush1.msra.mxu0 %v1743
        %1895 = vmatprep.subr.mxu0 %v1741
        %1896 = vmatpush1.msra.mxu0 %v1740
        %1897 = vmatprep.subr.mxu0 %v1738
        %1898 = vmatpush1.msra.mxu0 %v1737
        %1899 = vmatprep.subr.mxu0 %v1735
        %1900 = vmatpush1.msra.mxu0 %v1734
        %1901 = vmatprep.subr.mxu0 %v1732
        %1902 = vmatpush1.msra.mxu0 %v1731
        %1903 = vmatprep.subr.mxu0 %v1729
        %1904 = vmatpush1.msra.mxu0 %v1728
        %1905 = vmatprep.subr.mxu0 %v1726
        %1906 = vmatpush1.msra.mxu0 %v1725
        %1907 = vmatprep.subr.mxu0 %v1819
        %1908 = vmatpush2.msra.mxu0 %v1818
        %1909 = vmatprep.subr.mxu0 %v1816
        %1910 = vmatpush2.msra.mxu0 %v1815
        %1911 = vmatprep.subr.mxu0 %v1813
        %1912 = vmatpush2.msra.mxu0 %v1812
        %1913 = vmatprep.subr.mxu0 %v1810
        %1914 = vmatpush2.msra.mxu0 %v1809
        %1915 = vmatprep.subr.mxu0 %v1807
        %1916 = vmatpush2.msra.mxu0 %v1806
        %1917 = vmatprep.subr.mxu0 %v1804
        %1918 = vmatpush2.msra.mxu0 %v1803
        %1919 = vmatprep.subr.mxu0 %v1801
        %1920 = vmatpush2.msra.mxu0 %v1800
        %1921 = vmatprep.subr.mxu0 %v1798
        %1922 = vmatpush2.msra.mxu0 %v1797
        %1923 = vmatprep.subr.mxu0 %v1795
        %1924 = vmatpush2.msra.mxu0 %v1794
        %1925 = vmatprep.subr.mxu0 %v1792
        %1926 = vmatpush2.msra.mxu0 %v1791
        %1927 = vmatprep.subr.mxu0 %v1789
        %1928 = vmatpush2.msra.mxu0 %v1788
        %1929 = vmatprep.subr.mxu0 %v1786
        %1930 = vmatpush2.msra.mxu0 %v1785
        %1931 = vmatprep.subr.mxu0 %v1783
        %1932 = vmatpush2.msra.mxu0 %v1782
        %1933 = vmatprep.subr.mxu0 %v1780
        %1934 = vmatpush2.msra.mxu0 %v1779
        %1935 = vmatprep.subr.mxu0 %v1777
        %1936 = vmatpush2.msra.mxu0 %v1776
        %1937 = vmatprep.subr.mxu0 %v1774
        %1938 = vmatpush2.msra.mxu0 %v1773
        %1939 = vmatprep.mubr.f32.mxu0 %v1722
        %1940 = vmatmul.mubr.f32.gmra.mxu0 %v1720
        %v1941 = vpop.f32.mrf.mxu0
        %v1942 = vadd.f32 %v1859, %v1941
        %v1943 = vpop.f32.mrf.mxu0
        %v1944 = vadd.f32 %v1863, %v1943
        %1945 = vdwg.mxu0
        %1946 = vmatprep.subr.mxu0 0.0
        %1947 = vmatpush1.msra.mxu0 0.0
        %1948 = vmatprep.subr.mxu0 0.0
        %1949 = vmatpush1.msra.mxu0 0.0
        %1950 = vmatprep.subr.mxu0 0.0
        %1951 = vmatpush1.msra.mxu0 0.0
        %1952 = vmatprep.subr.mxu0 0.0
        %1953 = vmatpush1.msra.mxu0 0.0
        %1954 = vmatprep.subr.mxu0 0.0
        %1955 = vmatpush1.msra.mxu0 0.0
        %1956 = vmatprep.subr.mxu0 %v1852
        %1957 = vmatpush1.msra.mxu0 %v1851
        %1958 = vmatprep.subr.mxu0 %v1849
        %1959 = vmatpush1.msra.mxu0 %v1848
        %1960 = vmatprep.subr.mxu0 %v1846
        %1961 = vmatpush1.msra.mxu0 %v1845
        %1962 = vmatprep.subr.mxu0 %v1843
        %1963 = vmatpush1.msra.mxu0 %v1842
        %1964 = vmatprep.subr.mxu0 %v1840
        %1965 = vmatpush1.msra.mxu0 %v1839
        %1966 = vmatprep.subr.mxu0 %v1837
        %1967 = vmatpush1.msra.mxu0 %v1836
        %1968 = vmatprep.subr.mxu0 %v1834
        %1969 = vmatpush1.msra.mxu0 %v1833
        %1970 = vmatprep.subr.mxu0 %v1831
        %1971 = vmatpush1.msra.mxu0 %v1830
        %1972 = vmatprep.subr.mxu0 %v1828
        %1973 = vmatpush1.msra.mxu0 %v1827
        %1974 = vmatprep.subr.mxu0 %v1825
        %1975 = vmatpush1.msra.mxu0 %v1824
        %1976 = vmatprep.subr.mxu0 %v1822
        %1977 = vmatpush1.msra.mxu0 %v1821
        %1978 = vmatprep.subr.mxu0 0.0
        %1979 = vmatpush2.msra.mxu0 0.0
        %1980 = vmatprep.subr.mxu0 0.0
        %1981 = vmatpush2.msra.mxu0 0.0
        %1982 = vmatprep.subr.mxu0 0.0
        %1983 = vmatpush2.msra.mxu0 0.0
        %1984 = vmatprep.subr.mxu0 0.0
        %1985 = vmatpush2.msra.mxu0 0.0
        %1986 = vmatprep.subr.mxu0 0.0
        %1987 = vmatpush2.msra.mxu0 0.0
        %1988 = vmatprep.subr.mxu0 0.0
        %1989 = vmatpush2.msra.mxu0 0.0
        %1990 = vmatprep.subr.mxu0 0.0
        %1991 = vmatpush2.msra.mxu0 0.0
        %1992 = vmatprep.subr.mxu0 0.0
        %1993 = vmatpush2.msra.mxu0 0.0
        %1994 = vmatprep.subr.mxu0 0.0
        %1995 = vmatpush2.msra.mxu0 0.0
        %1996 = vmatprep.subr.mxu0 0.0
        %1997 = vmatpush2.msra.mxu0 0.0
        %1998 = vmatprep.subr.mxu0 0.0
        %1999 = vmatpush2.msra.mxu0 0.0
        %2000 = vmatprep.subr.mxu0 0.0
        %2001 = vmatpush2.msra.mxu0 0.0
        %2002 = vmatprep.subr.mxu0 0.0
        %2003 = vmatpush2.msra.mxu0 0.0
        %2004 = vmatprep.subr.mxu0 0.0
        %2005 = vmatpush2.msra.mxu0 0.0
        %2006 = vmatprep.subr.mxu0 0.0
        %2007 = vmatpush2.msra.mxu0 0.0
        %2008 = vmatprep.subr.mxu0 0.0
        %2009 = vmatpush2.msra.mxu0 0.0
        %2010 = vmatprep.mubr.f32.mxu0 0.0
        %2011 = vmatmul.mubr.f32.gmra.mxu0 %v1873
        %v2012 = vpop.f32.mrf.mxu0
        %v2013 = vadd.f32 %v1942, %v2012
        %v2014 = vpop.f32.mrf.mxu0
        %v2015 = vadd.f32 %v1944, %v2014
        %2016 = vdwg.mxu0
        %2017 = vmatprep.subr.mxu0 0.0
        %2018 = vmatpush1.msra.mxu0 %v1772
        %2019 = vmatprep.subr.mxu0 0.0
        %2020 = vmatpush1.msra.mxu0 %v1769
        %2021 = vmatprep.subr.mxu0 0.0
        %2022 = vmatpush1.msra.mxu0 %v1766
        %2023 = vmatprep.subr.mxu0 0.0
        %2024 = vmatpush1.msra.mxu0 %v1763
        %2025 = vmatprep.subr.mxu0 0.0
        %2026 = vmatpush1.msra.mxu0 %v1760
        %2027 = vmatprep.subr.mxu0 0.0
        %2028 = vmatpush1.msra.mxu0 %v1757
        %2029 = vmatprep.subr.mxu0 0.0
        %2030 = vmatpush1.msra.mxu0 %v1754
        %2031 = vmatprep.subr.mxu0 0.0
        %2032 = vmatpush1.msra.mxu0 %v1751
        %2033 = vmatprep.subr.mxu0 0.0
        %2034 = vmatpush1.msra.mxu0 %v1748
        %2035 = vmatprep.subr.mxu0 0.0
        %2036 = vmatpush1.msra.mxu0 %v1745
        %2037 = vmatprep.subr.mxu0 0.0
        %2038 = vmatpush1.msra.mxu0 %v1742
        %2039 = vmatprep.subr.mxu0 0.0
        %2040 = vmatpush1.msra.mxu0 %v1739
        %2041 = vmatprep.subr.mxu0 0.0
        %2042 = vmatpush1.msra.mxu0 %v1736
        %2043 = vmatprep.subr.mxu0 0.0
        %2044 = vmatpush1.msra.mxu0 %v1733
        %2045 = vmatprep.subr.mxu0 0.0
        %2046 = vmatpush1.msra.mxu0 %v1730
        %2047 = vmatprep.subr.mxu0 0.0
        %2048 = vmatpush1.msra.mxu0 %v1727
        %2049 = vmatprep.subr.mxu0 0.0
        %2050 = vmatpush2.msra.mxu0 %v1820
        %2051 = vmatprep.subr.mxu0 0.0
        %2052 = vmatpush2.msra.mxu0 %v1817
        %2053 = vmatprep.subr.mxu0 0.0
        %2054 = vmatpush2.msra.mxu0 %v1814
        %2055 = vmatprep.subr.mxu0 0.0
        %2056 = vmatpush2.msra.mxu0 %v1811
        %2057 = vmatprep.subr.mxu0 0.0
        %2058 = vmatpush2.msra.mxu0 %v1808
        %2059 = vmatprep.subr.mxu0 0.0
        %2060 = vmatpush2.msra.mxu0 %v1805
        %2061 = vmatprep.subr.mxu0 0.0
        %2062 = vmatpush2.msra.mxu0 %v1802
        %2063 = vmatprep.subr.mxu0 0.0
        %2064 = vmatpush2.msra.mxu0 %v1799
        %2065 = vmatprep.subr.mxu0 0.0
        %2066 = vmatpush2.msra.mxu0 %v1796
        %2067 = vmatprep.subr.mxu0 0.0
        %2068 = vmatpush2.msra.mxu0 %v1793
        %2069 = vmatprep.subr.mxu0 0.0
        %2070 = vmatpush2.msra.mxu0 %v1790
        %2071 = vmatprep.subr.mxu0 0.0
        %2072 = vmatpush2.msra.mxu0 %v1787
        %2073 = vmatprep.subr.mxu0 0.0
        %2074 = vmatpush2.msra.mxu0 %v1784
        %2075 = vmatprep.subr.mxu0 0.0
        %2076 = vmatpush2.msra.mxu0 %v1781
        %2077 = vmatprep.subr.mxu0 0.0
        %2078 = vmatpush2.msra.mxu0 %v1778
        %2079 = vmatprep.subr.mxu0 0.0
        %2080 = vmatpush2.msra.mxu0 %v1775
        %2081 = vmatprep.mubr.f32.mxu0 %v1722
        %2082 = vmatmul.mubr.f32.gmra.mxu0 %v1720
        %v2083 = vpop.f32.mrf.mxu0
        %v2084 = vadd.f32 %v1867, %v2083
        %v2085 = vpop.f32.mrf.mxu0
        %2086 = vdwg.mxu0
        %2087 = vmatprep.subr.mxu0 0.0
        %2088 = vmatpush1.msra.mxu0 0.0
        %2089 = vmatprep.subr.mxu0 0.0
        %2090 = vmatpush1.msra.mxu0 0.0
        %2091 = vmatprep.subr.mxu0 0.0
        %2092 = vmatpush1.msra.mxu0 0.0
        %2093 = vmatprep.subr.mxu0 0.0
        %2094 = vmatpush1.msra.mxu0 0.0
        %2095 = vmatprep.subr.mxu0 0.0
        %2096 = vmatpush1.msra.mxu0 0.0
        %2097 = vmatprep.subr.mxu0 0.0
        %2098 = vmatpush1.msra.mxu0 %v1853
        %2099 = vmatprep.subr.mxu0 0.0
        %2100 = vmatpush1.msra.mxu0 %v1850
        %2101 = vmatprep.subr.mxu0 0.0
        %2102 = vmatpush1.msra.mxu0 %v1847
        %2103 = vmatprep.subr.mxu0 0.0
        %2104 = vmatpush1.msra.mxu0 %v1844
        %2105 = vmatprep.subr.mxu0 0.0
        %2106 = vmatpush1.msra.mxu0 %v1841
        %2107 = vmatprep.subr.mxu0 0.0
        %2108 = vmatpush1.msra.mxu0 %v1838
        %2109 = vmatprep.subr.mxu0 0.0
        %2110 = vmatpush1.msra.mxu0 %v1835
        %2111 = vmatprep.subr.mxu0 0.0
        %2112 = vmatpush1.msra.mxu0 %v1832
        %2113 = vmatprep.subr.mxu0 0.0
        %2114 = vmatpush1.msra.mxu0 %v1829
        %2115 = vmatprep.subr.mxu0 0.0
        %2116 = vmatpush1.msra.mxu0 %v1826
        %2117 = vmatprep.subr.mxu0 0.0
        %2118 = vmatpush1.msra.mxu0 %v1823
        %2119 = vmatprep.subr.mxu0 0.0
        %2120 = vmatpush2.msra.mxu0 0.0
        %2121 = vmatprep.subr.mxu0 0.0
        %2122 = vmatpush2.msra.mxu0 0.0
        %2123 = vmatprep.subr.mxu0 0.0
        %2124 = vmatpush2.msra.mxu0 0.0
        %2125 = vmatprep.subr.mxu0 0.0
        %2126 = vmatpush2.msra.mxu0 0.0
        %2127 = vmatprep.subr.mxu0 0.0
        %2128 = vmatpush2.msra.mxu0 0.0
        %2129 = vmatprep.subr.mxu0 0.0
        %2130 = vmatpush2.msra.mxu0 0.0
        %2131 = vmatprep.subr.mxu0 0.0
        %2132 = vmatpush2.msra.mxu0 0.0
        %2133 = vmatprep.subr.mxu0 0.0
        %2134 = vmatpush2.msra.mxu0 0.0
        %2135 = vmatprep.subr.mxu0 0.0
        %2136 = vmatpush2.msra.mxu0 0.0
        %2137 = vmatprep.subr.mxu0 0.0
        %2138 = vmatpush2.msra.mxu0 0.0
        %2139 = vmatprep.subr.mxu0 0.0
        %2140 = vmatpush2.msra.mxu0 0.0
        %2141 = vmatprep.subr.mxu0 0.0
        %2142 = vmatpush2.msra.mxu0 0.0
        %2143 = vmatprep.subr.mxu0 0.0
        %2144 = vmatpush2.msra.mxu0 0.0
        %2145 = vmatprep.subr.mxu0 0.0
        %2146 = vmatpush2.msra.mxu0 0.0
        %2147 = vmatprep.subr.mxu0 0.0
        %2148 = vmatpush2.msra.mxu0 0.0
        %2149 = vmatprep.subr.mxu0 0.0
        %2150 = vmatpush2.msra.mxu0 0.0
        %2151 = vmatprep.mubr.f32.mxu0 0.0
        %2152 = vmatmul.mubr.f32.gmra.mxu0 %v1873
        %v2153 = vpop.f32.mrf.mxu0
        %v2154 = vadd.f32 %v2084, %v2153
        %v2155 = vpop.f32.mrf.mxu0
        %2156 = vdwg.mxu0
        %vm2157 = vcmp.gt.f32.partialorder %v2013, 0.0
        %vm2158 = vcmp.gt.f32.partialorder %v2015, 0.0
        %vm2159 = vcmp.gt.f32.partialorder %v2154, 0.0
        %v2160 = vmul.f32 %v2013, 0.01
        %v2161 = vmul.f32 %v2015, 0.01
        %v2162 = vmul.f32 %v2154, 0.01
        %v2163 = vsel %vm2157, %v2013, %v2160
        %v2164 = vsel %vm2158, %v2015, %v2161
        %v2165 = vsel %vm2159, %v2154, %v2162
        %v2166 = vld [vmem:[%s5] sm:$0xff]
        %v2167 = vld [vmem:[%s5 + $0x8] sm:$0xff]
        %v2168 = vld [vmem:[%s5 + $0x10] sm:$0xff]
        %v2169 = vld [vmem:[%s5 + $0x18] sm:$0xff]
        %v2170 = vld [vmem:[%s5 + $0x20] sm:$0xff]
        %v2171 = vld [vmem:[%s5 + $0x28] sm:$0xff]
        %v2172 = vld [vmem:[%s5 + $0x30] sm:$0xff]
        %v2173 = vld [vmem:[%s5 + $0x38] sm:$0xff]
        %v2174 = vld [vmem:[%s5 + $0x40] sm:$0xff]
        %v2175 = vld [vmem:[%s5 + $0x48] sm:$0xff]
        %v2176 = vld [vmem:[%s5 + $0x50] sm:$0xff]
        %v2177 = vld [vmem:[%s5 + $0x58] sm:$0xff]
        %v2178 = vld [vmem:[%s5 + $0x60] sm:$0xff]
        %v2179 = vld [vmem:[%s5 + $0x68] sm:$0xff]
        %v2180 = vld [vmem:[%s5 + $0x70] sm:$0xff]
        %v2181 = vld [vmem:[%s5 + $0x78] sm:$0xff]
        %v2182 = vld [vmem:[%s5 + $0x80] sm:$0xff]
        %v2183 = vld [vmem:[%s5 + $0x88] sm:$0xff]
        %v2184 = vld [vmem:[%s5 + $0x90] sm:$0xff]
        %v2185 = vld [vmem:[%s5 + $0x98] sm:$0xff]
        %v2186 = vld [vmem:[%s5 + $0xa0] sm:$0xff]
        %v2187 = vld [vmem:[%s5 + $0xa8] sm:$0xff]
        %v2188 = vld [vmem:[%s5 + $0xb0] sm:$0xff]
        %v2189 = vld [vmem:[%s5 + $0xb8] sm:$0xff]
        %v2190 = vld [vmem:[%s5 + $0xc0] sm:$0xff]
        %v2191 = vld [vmem:[%s5 + $0xc8] sm:$0xff]
        %v2192 = vld [vmem:[%s5 + $0xd0] sm:$0xff]
        %v2193 = vld [vmem:[%s5 + $0xd8] sm:$0xff]
        %v2194 = vld [vmem:[%s5 + $0xe0] sm:$0xff]
        %v2195 = vld [vmem:[%s5 + $0xe8] sm:$0xff]
        %v2196 = vld [vmem:[%s5 + $0xf0] sm:$0xff]
        %v2197 = vld [vmem:[%s5 + $0xf8] sm:$0xff]
        %v2198 = vld [vmem:[%s5 + $0x100] sm:$0xff]
        %v2199 = vld [vmem:[%s5 + $0x108] sm:$0xff]
        %v2200 = vld [vmem:[%s5 + $0x110] sm:$0xff]
        %v2201 = vld [vmem:[%s5 + $0x118] sm:$0xff]
        %v2202 = vld [vmem:[%s5 + $0x120] sm:$0xff]
        %v2203 = vld [vmem:[%s5 + $0x128] sm:$0xff]
        %v2204 = vld [vmem:[%s5 + $0x130] sm:$0xff]
        %v2205 = vld [vmem:[%s5 + $0x138] sm:$0xff]
        %v2206 = vld [vmem:[%s5 + $0x140] sm:$0xff]
        %v2207 = vld [vmem:[%s5 + $0x148] sm:$0xff]
        %v2208 = vld [vmem:[%s5 + $0x150] sm:$0xff]
        %v2209 = vld [vmem:[%s5 + $0x158] sm:$0xff]
        %v2210 = vld [vmem:[%s5 + $0x160] sm:$0xff]
        %v2211 = vld [vmem:[%s5 + $0x168] sm:$0xff]
        %v2212 = vld [vmem:[%s5 + $0x170] sm:$0xff]
        %v2213 = vld [vmem:[%s5 + $0x178] sm:$0xff]
        %v2214 = vld [vmem:[%s5 + $0x180] sm:$0xff]
        %v2215 = vld [vmem:[%s5 + $0x188] sm:$0xff]
        %v2216 = vld [vmem:[%s5 + $0x190] sm:$0xff]
        %v2217 = vld [vmem:[%s5 + $0x198] sm:$0xff]
        %v2218 = vld [vmem:[%s5 + $0x1a0] sm:$0xff]
        %v2219 = vld [vmem:[%s5 + $0x1a8] sm:$0xff]
        %v2220 = vld [vmem:[%s5 + $0x1b0] sm:$0xff]
        %v2221 = vld [vmem:[%s5 + $0x1b8] sm:$0xff]
        %v2222 = vld [vmem:[%s5 + $0x1c0] sm:$0xff]
        %v2223 = vld [vmem:[%s5 + $0x1c8] sm:$0xff]
        %v2224 = vld [vmem:[%s5 + $0x1d0] sm:$0xff]
        %v2225 = vld [vmem:[%s5 + $0x1d8] sm:$0xff]
        %v2226 = vld [vmem:[%s5 + $0x1e0] sm:$0xff]
        %v2227 = vld [vmem:[%s5 + $0x1e8] sm:$0xff]
        %v2228 = vld [vmem:[%s5 + $0x1f0] sm:$0xff]
        %v2229 = vld [vmem:[%s5 + $0x1f8] sm:$0xff]
        %v2230 = vld [vmem:[%s5 + $0x200] sm:$0xff]
        %v2231 = vld [vmem:[%s5 + $0x208] sm:$0xff]
        %v2232 = vld [vmem:[%s5 + $0x210] sm:$0xff]
        %v2233 = vld [vmem:[%s5 + $0x218] sm:$0xff]
        %v2234 = vld [vmem:[%s5 + $0x220] sm:$0xff]
        %v2235 = vld [vmem:[%s5 + $0x228] sm:$0xff]
        %v2236 = vld [vmem:[%s5 + $0x230] sm:$0xff]
        %v2237 = vld [vmem:[%s5 + $0x238] sm:$0xff]
        %v2238 = vld [vmem:[%s5 + $0x240] sm:$0xff]
        %v2239 = vld [vmem:[%s5 + $0x248] sm:$0xff]
        %v2240 = vld [vmem:[%s5 + $0x250] sm:$0xff]
        %v2241 = vld [vmem:[%s5 + $0x258] sm:$0xff]
        %v2242 = vld [vmem:[%s5 + $0x260] sm:$0xff]
        %v2243 = vld [vmem:[%s5 + $0x268] sm:$0xff]
        %v2244 = vld [vmem:[%s5 + $0x270] sm:$0xff]
        %v2245 = vld [vmem:[%s5 + $0x278] sm:$0xff]
        %v2246 = vld [vmem:[%s5 + $0x280] sm:$0xff]
        %v2247 = vld [vmem:[%s5 + $0x288] sm:$0xff]
        %v2248 = vld [vmem:[%s5 + $0x290] sm:$0xff]
        %v2249 = vld [vmem:[%s5 + $0x298] sm:$0xff]
        %v2250 = vld [vmem:[%s5 + $0x2a0] sm:$0xff]
        %v2251 = vld [vmem:[%s5 + $0x2a8] sm:$0xff]
        %v2252 = vld [vmem:[%s6] sm:$0x3]
        %v2254 = vlaneseq
        %v2255 = vshrl.u32 %v2254, 7
        %v2256 = vsub.s32 0, %v2255
        %v2257 = vrot.slane %v2252, %v2256
        %v2258 = vlaneseq
        %v2259 = vshrl.u32 %v2258, 7
        %v2260 = vsub.s32 1, %v2259
        %v2261 = vrot.slane %v2252, %v2260
        %v2265 = vsel %vm1871, %v2165, 0
        %2267 = vmatprep.subr.mxu0 %v2197
        %2268 = vmatpush1.msra.mxu0 %v2196
        %2269 = vmatprep.subr.mxu0 %v2195
        %2270 = vmatpush1.msra.mxu0 %v2194
        %2271 = vmatprep.subr.mxu0 %v2193
        %2272 = vmatpush1.msra.mxu0 %v2192
        %2273 = vmatprep.subr.mxu0 %v2191
        %2274 = vmatpush1.msra.mxu0 %v2190
        %2275 = vmatprep.subr.mxu0 %v2189
        %2276 = vmatpush1.msra.mxu0 %v2188
        %2277 = vmatprep.subr.mxu0 %v2187
        %2278 = vmatpush1.msra.mxu0 %v2186
        %2279 = vmatprep.subr.mxu0 %v2185
        %2280 = vmatpush1.msra.mxu0 %v2184
        %2281 = vmatprep.subr.mxu0 %v2183
        %2282 = vmatpush1.msra.mxu0 %v2182
        %2283 = vmatprep.subr.mxu0 %v2181
        %2284 = vmatpush1.msra.mxu0 %v2180
        %2285 = vmatprep.subr.mxu0 %v2179
        %2286 = vmatpush1.msra.mxu0 %v2178
        %2287 = vmatprep.subr.mxu0 %v2177
        %2288 = vmatpush1.msra.mxu0 %v2176
        %2289 = vmatprep.subr.mxu0 %v2175
        %2290 = vmatpush1.msra.mxu0 %v2174
        %2291 = vmatprep.subr.mxu0 %v2173
        %2292 = vmatpush1.msra.mxu0 %v2172
        %2293 = vmatprep.subr.mxu0 %v2171
        %2294 = vmatpush1.msra.mxu0 %v2170
        %2295 = vmatprep.subr.mxu0 %v2169
        %2296 = vmatpush1.msra.mxu0 %v2168
        %2297 = vmatprep.subr.mxu0 %v2167
        %2298 = vmatpush1.msra.mxu0 %v2166
        %2299 = vmatprep.subr.mxu0 %v2229
        %2300 = vmatpush2.msra.mxu0 %v2228
        %2301 = vmatprep.subr.mxu0 %v2227
        %2302 = vmatpush2.msra.mxu0 %v2226
        %2303 = vmatprep.subr.mxu0 %v2225
        %2304 = vmatpush2.msra.mxu0 %v2224
        %2305 = vmatprep.subr.mxu0 %v2223
        %2306 = vmatpush2.msra.mxu0 %v2222
        %2307 = vmatprep.subr.mxu0 %v2221
        %2308 = vmatpush2.msra.mxu0 %v2220
        %2309 = vmatprep.subr.mxu0 %v2219
        %2310 = vmatpush2.msra.mxu0 %v2218
        %2311 = vmatprep.subr.mxu0 %v2217
        %2312 = vmatpush2.msra.mxu0 %v2216
        %2313 = vmatprep.subr.mxu0 %v2215
        %2314 = vmatpush2.msra.mxu0 %v2214
        %2315 = vmatprep.subr.mxu0 %v2213
        %2316 = vmatpush2.msra.mxu0 %v2212
        %2317 = vmatprep.subr.mxu0 %v2211
        %2318 = vmatpush2.msra.mxu0 %v2210
        %2319 = vmatprep.subr.mxu0 %v2209
        %2320 = vmatpush2.msra.mxu0 %v2208
        %2321 = vmatprep.subr.mxu0 %v2207
        %2322 = vmatpush2.msra.mxu0 %v2206
        %2323 = vmatprep.subr.mxu0 %v2205
        %2324 = vmatpush2.msra.mxu0 %v2204
        %2325 = vmatprep.subr.mxu0 %v2203
        %2326 = vmatpush2.msra.mxu0 %v2202
        %2327 = vmatprep.subr.mxu0 %v2201
        %2328 = vmatpush2.msra.mxu0 %v2200
        %2329 = vmatprep.subr.mxu0 %v2199
        %2330 = vmatpush2.msra.mxu0 %v2198
        %2331 = vmatprep.mubr.f32.mxu0 %v2164
        %2332 = vmatmul.mubr.f32.gmra.mxu0 %v2163
        %v2333 = vpop.f32.mrf.mxu0
        %v2334 = vadd.f32 %v2257, %v2333
        %v2335 = vpop.f32.mrf.mxu0
        %v2336 = vadd.f32 %v2261, %v2335
        %2337 = vdwg.mxu0
        %2338 = vmatprep.subr.mxu0 0.0
        %2339 = vmatpush1.msra.mxu0 0.0
        %2340 = vmatprep.subr.mxu0 0.0
        %2341 = vmatpush1.msra.mxu0 0.0
        %2342 = vmatprep.subr.mxu0 0.0
        %2343 = vmatpush1.msra.mxu0 0.0
        %2344 = vmatprep.subr.mxu0 0.0
        %2345 = vmatpush1.msra.mxu0 0.0
        %2346 = vmatprep.subr.mxu0 0.0
        %2347 = vmatpush1.msra.mxu0 0.0
        %2348 = vmatprep.subr.mxu0 %v2251
        %2349 = vmatpush1.msra.mxu0 %v2250
        %2350 = vmatprep.subr.mxu0 %v2249
        %2351 = vmatpush1.msra.mxu0 %v2248
        %2352 = vmatprep.subr.mxu0 %v2247
        %2353 = vmatpush1.msra.mxu0 %v2246
        %2354 = vmatprep.subr.mxu0 %v2245
        %2355 = vmatpush1.msra.mxu0 %v2244
        %2356 = vmatprep.subr.mxu0 %v2243
        %2357 = vmatpush1.msra.mxu0 %v2242
        %2358 = vmatprep.subr.mxu0 %v2241
        %2359 = vmatpush1.msra.mxu0 %v2240
        %2360 = vmatprep.subr.mxu0 %v2239
        %2361 = vmatpush1.msra.mxu0 %v2238
        %2362 = vmatprep.subr.mxu0 %v2237
        %2363 = vmatpush1.msra.mxu0 %v2236
        %2364 = vmatprep.subr.mxu0 %v2235
        %2365 = vmatpush1.msra.mxu0 %v2234
        %2366 = vmatprep.subr.mxu0 %v2233
        %2367 = vmatpush1.msra.mxu0 %v2232
        %2368 = vmatprep.subr.mxu0 %v2231
        %2369 = vmatpush1.msra.mxu0 %v2230
        %2370 = vmatprep.subr.mxu0 0.0
        %2371 = vmatpush2.msra.mxu0 0.0
        %2372 = vmatprep.subr.mxu0 0.0
        %2373 = vmatpush2.msra.mxu0 0.0
        %2374 = vmatprep.subr.mxu0 0.0
        %2375 = vmatpush2.msra.mxu0 0.0
        %2376 = vmatprep.subr.mxu0 0.0
        %2377 = vmatpush2.msra.mxu0 0.0
        %2378 = vmatprep.subr.mxu0 0.0
        %2379 = vmatpush2.msra.mxu0 0.0
        %2380 = vmatprep.subr.mxu0 0.0
        %2381 = vmatpush2.msra.mxu0 0.0
        %2382 = vmatprep.subr.mxu0 0.0
        %2383 = vmatpush2.msra.mxu0 0.0
        %2384 = vmatprep.subr.mxu0 0.0
        %2385 = vmatpush2.msra.mxu0 0.0
        %2386 = vmatprep.subr.mxu0 0.0
        %2387 = vmatpush2.msra.mxu0 0.0
        %2388 = vmatprep.subr.mxu0 0.0
        %2389 = vmatpush2.msra.mxu0 0.0
        %2390 = vmatprep.subr.mxu0 0.0
        %2391 = vmatpush2.msra.mxu0 0.0
        %2392 = vmatprep.subr.mxu0 0.0
        %2393 = vmatpush2.msra.mxu0 0.0
        %2394 = vmatprep.subr.mxu0 0.0
        %2395 = vmatpush2.msra.mxu0 0.0
        %2396 = vmatprep.subr.mxu0 0.0
        %2397 = vmatpush2.msra.mxu0 0.0
        %2398 = vmatprep.subr.mxu0 0.0
        %2399 = vmatpush2.msra.mxu0 0.0
        %2400 = vmatprep.subr.mxu0 0.0
        %2401 = vmatpush2.msra.mxu0 0.0
        %2402 = vmatprep.mubr.f32.mxu0 0.0
        %2403 = vmatmul.mubr.f32.gmra.mxu0 %v2265
        %v2404 = vpop.f32.mrf.mxu0
        %v2405 = vadd.f32 %v2334, %v2404
        %v2406 = vpop.f32.mrf.mxu0
        %v2407 = vadd.f32 %v2336, %v2406
        %2408 = vdwg.mxu0
        %v2409 = vld [vmem:[%s7] sm:$0xff]
        %v2410 = vld [vmem:[%s7 + $0x8] sm:$0xff]
        %v2411 = vmul.f32 %v2405, %v2409
        %v2412 = vmul.f32 %v2407, %v2410
        %v2413 = vld [vmem:[%s8] sm:$0xff]
        %2415 = vset.pattern.permute.xlu0 0
        %2416 = vperm.xlu0 %2415, %v2413
        %v2417 = vpop.permute.xlu0 %2416
        %v2419 = vsub.f32 %v2411, %v2417
        %v2420 = vsub.f32 %v2412, %v2417
        %v2421 = vmax.f32 %v2419, 0.0
        %v2422 = vmax.f32 %v2420, 0.0
        %v2423 = vld [vmem:[%s9] sm:$0x7]
        %vm2424 = vcmask 64512
        %v2426 = vsel %vm2424, %v2423, 0
        %2428 = vmatprep.subr.mxu0 0.0
        %2429 = vmatpush1.msra.mxu0 0.0
        %2430 = vmatprep.subr.mxu0 0.0
        %2431 = vmatpush1.msra.mxu0 0.0
        %2432 = vmatprep.subr.mxu0 0.0
        %2433 = vmatpush1.msra.mxu0 0.0
        %2434 = vmatprep.subr.mxu0 0.0
        %2435 = vmatpush1.msra.mxu0 0.0
        %2436 = vmatprep.subr.mxu0 0.0
        %2437 = vmatpush1.msra.mxu0 0.0
        %2438 = vmatprep.subr.mxu0 0.0
        %2439 = vmatpush1.msra.mxu0 0.0
        %2440 = vmatprep.subr.mxu0 0.0
        %2441 = vmatpush1.msra.mxu0 0.0
        %2442 = vmatprep.subr.mxu0 0.0
        %2443 = vmatpush1.msra.mxu0 0.0
        %2444 = vmatprep.subr.mxu0 0.0
        %2445 = vmatpush1.msra.mxu0 0.0
        %2446 = vmatprep.subr.mxu0 0.0
        %2447 = vmatpush1.msra.mxu0 0.0
        %2448 = vmatprep.subr.mxu0 0.0
        %2449 = vmatpush1.msra.mxu0 0.0
        %2450 = vmatprep.subr.mxu0 0.0
        %2451 = vmatpush1.msra.mxu0 0.0
        %2452 = vmatprep.subr.mxu0 0.0
        %2453 = vmatpush1.msra.mxu0 0.0
        %2454 = vmatprep.subr.mxu0 0.0
        %2455 = vmatpush1.msra.mxu0 0.0
        %2456 = vmatprep.subr.mxu0 0.0
        %2457 = vmatpush1.msra.mxu0 0.0
        %2458 = vmatprep.subr.mxu0 %v2422
        %2459 = vmatpush1.msra.mxu0 %v2421
        %2460 = vmatprep.subr.mxu0 0.0
        %2461 = vmatpush2.msra.mxu0 0.0
        %2462 = vmatprep.subr.mxu0 0.0
        %2463 = vmatpush2.msra.mxu0 0.0
        %2464 = vmatprep.subr.mxu0 0.0
        %2465 = vmatpush2.msra.mxu0 0.0
        %2466 = vmatprep.subr.mxu0 0.0
        %2467 = vmatpush2.msra.mxu0 0.0
        %2468 = vmatprep.subr.mxu0 0.0
        %2469 = vmatpush2.msra.mxu0 0.0
        %2470 = vmatprep.subr.mxu0 0.0
        %2471 = vmatpush2.msra.mxu0 0.0
        %2472 = vmatprep.subr.mxu0 0.0
        %2473 = vmatpush2.msra.mxu0 0.0
        %2474 = vmatprep.subr.mxu0 0.0
        %2475 = vmatpush2.msra.mxu0 0.0
        %2476 = vmatprep.subr.mxu0 0.0
        %2477 = vmatpush2.msra.mxu0 0.0
        %2478 = vmatprep.subr.mxu0 0.0
        %2479 = vmatpush2.msra.mxu0 0.0
        %2480 = vmatprep.subr.mxu0 0.0
        %2481 = vmatpush2.msra.mxu0 0.0
        %2482 = vmatprep.subr.mxu0 0.0
        %2483 = vmatpush2.msra.mxu0 0.0
        %2484 = vmatprep.subr.mxu0 0.0
        %2485 = vmatpush2.msra.mxu0 0.0
        %2486 = vmatprep.subr.mxu0 0.0
        %2487 = vmatpush2.msra.mxu0 0.0
        %2488 = vmatprep.subr.mxu0 0.0
        %2489 = vmatpush2.msra.mxu0 0.0
        %2490 = vmatprep.subr.mxu0 0.0
        %2491 = vmatpush2.msra.mxu0 0.0
        %2492 = vmatprep.mubr.f32.mxu0 0.0
        %2493 = vmatmul.mubr.f32.gmra.mxu0 %v2426
        %v2494 = vpop.f32.mrf.mxu0
        %v2495 = vadd.f32 0.0, %v2494
        %v2496 = vpop.f32.mrf.mxu0
        %v2497 = vadd.f32 0.0, %v2496
        %2498 = vdwg.mxu0
        %vm2499 = vcmask 359424
        %v2501 = vsel %vm2499, %v2497, 0
        %2503 = vmatprep.subr.mxu0 0.0
        %2504 = vmatpush1.xpose.msra.mxu0 0.0
        %2505 = vmatprep.subr.mxu0 0.0
        %2506 = vmatpush1.xpose.msra.mxu0 0.0
        %2507 = vmatprep.subr.mxu0 0.0
        %2508 = vmatpush1.xpose.msra.mxu0 0.0
        %2509 = vmatprep.subr.mxu0 0.0
        %2510 = vmatpush1.xpose.msra.mxu0 0.0
        %2511 = vmatprep.subr.mxu0 0.0
        %2512 = vmatpush1.xpose.msra.mxu0 0.0
        %2513 = vmatprep.subr.mxu0 0.0
        %2514 = vmatpush1.xpose.msra.mxu0 0.0
        %2515 = vmatprep.subr.mxu0 0.0
        %2516 = vmatpush1.xpose.msra.mxu0 0.0
        %2517 = vmatprep.subr.mxu0 0.0
        %2518 = vmatpush1.xpose.msra.mxu0 0.0
        %2519 = vmatprep.subr.mxu0 0.0
        %2520 = vmatpush1.xpose.msra.mxu0 0.0
        %2521 = vmatprep.subr.mxu0 0.0
        %2522 = vmatpush1.xpose.msra.mxu0 0.0
        %2523 = vmatprep.subr.mxu0 0.0
        %2524 = vmatpush1.xpose.msra.mxu0 0.0
        %2525 = vmatprep.subr.mxu0 0.0
        %2526 = vmatpush1.xpose.msra.mxu0 0.0
        %2527 = vmatprep.subr.mxu0 0.0
        %2528 = vmatpush1.xpose.msra.mxu0 0.0
        %2529 = vmatprep.subr.mxu0 0.0
        %2530 = vmatpush1.xpose.msra.mxu0 0.0
        %2531 = vmatprep.subr.mxu0 0.0
        %2532 = vmatpush1.xpose.msra.mxu0 0.0
        %2533 = vmatprep.subr.mxu0 %v2501
        %2534 = vmatpush1.xpose.msra.mxu0 %v2495
        %2535 = vmatprep.subr.mxu0 0.0
        %2536 = vmatpush2.xpose.msra.mxu0 0.0
        %2537 = vmatprep.subr.mxu0 0.0
        %2538 = vmatpush2.xpose.msra.mxu0 0.0
        %2539 = vmatprep.subr.mxu0 0.0
        %2540 = vmatpush2.xpose.msra.mxu0 0.0
        %2541 = vmatprep.subr.mxu0 0.0
        %2542 = vmatpush2.xpose.msra.mxu0 0.0
        %2543 = vmatprep.subr.mxu0 0.0
        %2544 = vmatpush2.xpose.msra.mxu0 0.0
        %2545 = vmatprep.subr.mxu0 0.0
        %2546 = vmatpush2.xpose.msra.mxu0 0.0
        %2547 = vmatprep.subr.mxu0 0.0
        %2548 = vmatpush2.xpose.msra.mxu0 0.0
        %2549 = vmatprep.subr.mxu0 0.0
        %2550 = vmatpush2.xpose.msra.mxu0 0.0
        %2551 = vmatprep.subr.mxu0 0.0
        %2552 = vmatpush2.xpose.msra.mxu0 0.0
        %2553 = vmatprep.subr.mxu0 0.0
        %2554 = vmatpush2.xpose.msra.mxu0 0.0
        %2555 = vmatprep.subr.mxu0 0.0
        %2556 = vmatpush2.xpose.msra.mxu0 0.0
        %2557 = vmatprep.subr.mxu0 0.0
        %2558 = vmatpush2.xpose.msra.mxu0 0.0
        %2559 = vmatprep.subr.mxu0 0.0
        %2560 = vmatpush2.xpose.msra.mxu0 0.0
        %2561 = vmatprep.subr.mxu0 0.0
        %2562 = vmatpush2.xpose.msra.mxu0 0.0
        %2563 = vmatprep.subr.mxu0 0.0
        %2564 = vmatpush2.xpose.msra.mxu0 0.0
        %2565 = vmatprep.subr.mxu0 0.0
        %2566 = vmatpush2.xpose.msra.mxu0 0.0
        %2567 = vmatprep.mubr.f32.mxu0 %v2501
        %2568 = vmatmul.mubr.f32.gmra.mxu0 %v2495
        %v2569 = vpop.f32.mrf.mxu0
        %v2570 = vadd.f32 0.0, %v2569
        %v2571 = vpop.f32.mrf.mxu0
        %2572 = vdwg.mxu0
        %v2573 = vld [vmem:[%s10] sm:$0x7]
        %v2574 = vmul.f32 %v2570, %v2573
        %v2575 = vmax.f32 %v2574, 0.0
        %v2576 = vlaneseq
        %v2577 = vshrl.u32 %v2576, 7
        %v2578 = vlaneseq
        %v2579 = vand.u32 %v2578, 127
        %vm2580 = vcmp.eq.s32.totalorder %v2577, %v2579
        %v2581 = vsel %vm2580, 1, 0
        %v2582 = vcvt.s32.f32 %v2581
        %v2583 = vadd.f32 %v2575, %v2582
        %vm2584 = vcmask 18432
        %v2585 = vsel %vm2584, %v2583, 0.0
        %2586 = vadd.xlane.f32.xlu0 %v2585
        %v2587 = vpop.xlane.xlu0 %2586
        %vm2588 = vcmp.eq.f32.partialorder %v2587, 0.0
        %v2589 = vsel %vm2588, 1, 0
        %v2590 = vcvt.s32.f32 %v2589
        %v2591 = vadd.f32 %v2587, %v2590
        %v2592 = vrot.slane %v2585, 4
        %v2593 = vadd.f32 %v2585, %v2592
        %v2594 = vrot.slane %v2593, 2
        %v2595 = vadd.f32 %v2593, %v2594
        %v2596 = vrot.slane %v2595, 1
        %v2597 = vadd.f32 %v2595, %v2596
        %vm2598 = vcmp.eq.f32.partialorder %v2597, 0.0
        %v2599 = vsel %vm2598, 1, 0
        %v2600 = vcvt.s32.f32 %v2599
        %v2601 = vadd.f32 %v2597, %v2600
        %v2602 = vrsqrt.pop %v2591
        %v2603 = vmul.f32 %v2583, %v2602
        %v2604 = vrsqrt.pop %v2601
        %v2605 = vmul.f32 %v2603, %v2604
        %v2606 = vld [vmem:[%s11] sm:$0x7]
        %2608 = vset.pattern.permute.xlu0 0
        %2609 = vperm.xlu0 %2608, %v2606
        %v2610 = vpop.permute.xlu0 %2609
        %v2612 = vmul.f32 %v2495, %v2610
        %v2613 = vmul.f32 %v2497, %v2610
        %v2614 = vld [vmem:[%s12] sm:$0x7]
        %2616 = vset.pattern.permute.xlu0 0
        %2617 = vperm.xlu0 %2616, %v2614
        %v2618 = vpop.permute.xlu0 %2617
        %v2620 = vadd.f32 %v2612, %v2618
        %v2621 = vadd.f32 %v2613, %v2618
        %v2622 = vld [vmem:[%s13] sm:$0xff]
        %v2623 = vld [vmem:[%s13 + $0x8] sm:$0xff]
        %v2624 = vld [vmem:[%s13 + $0x10] sm:$0xff]
        %v2625 = vld [vmem:[%s13 + $0x18] sm:$0xff]
        %v2626 = vld [vmem:[%s13 + $0x20] sm:$0xff]
        %v2627 = vld [vmem:[%s13 + $0x28] sm:$0xff]
        %v2628 = vld [vmem:[%s13 + $0x30] sm:$0xff]
        %v2629 = vld [vmem:[%s13 + $0x38] sm:$0xff]
        %v2630 = vld [vmem:[%s13 + $0x40] sm:$0xff]
        %v2631 = vld [vmem:[%s13 + $0x48] sm:$0xff]
        %v2632 = vld [vmem:[%s13 + $0x50] sm:$0xff]
        %v2633 = vld [vmem:[%s13 + $0x58] sm:$0xff]
        %v2634 = vld [vmem:[%s13 + $0x60] sm:$0xff]
        %v2635 = vld [vmem:[%s13 + $0x68] sm:$0xff]
        %v2636 = vld [vmem:[%s13 + $0x70] sm:$0xff]
        %v2637 = vld [vmem:[%s13 + $0x78] sm:$0xff]
        %v2638 = vld [vmem:[%s13 + $0x80] sm:$0xff]
        %v2639 = vld [vmem:[%s13 + $0x88] sm:$0xff]
        %v2640 = vld [vmem:[%s13 + $0x90] sm:$0xff]
        %v2641 = vld [vmem:[%s13 + $0x98] sm:$0xff]
        %v2642 = vld [vmem:[%s13 + $0xa0] sm:$0xff]
        %v2643 = vld [vmem:[%s13 + $0xa8] sm:$0xf]
        %v2645 = vsel %vm2499, %v2621, 0
        %v2648 = vsel %vm1286, %v2643, 0
        %2650 = vmatprep.subr.mxu0 0.0
        %2651 = vmatpush1.msra.mxu0 %v2637
        %2652 = vmatprep.subr.mxu0 0.0
        %2653 = vmatpush1.msra.mxu0 %v2636
        %2654 = vmatprep.subr.mxu0 0.0
        %2655 = vmatpush1.msra.mxu0 %v2635
        %2656 = vmatprep.subr.mxu0 0.0
        %2657 = vmatpush1.msra.mxu0 %v2634
        %2658 = vmatprep.subr.mxu0 0.0
        %2659 = vmatpush1.msra.mxu0 %v2633
        %2660 = vmatprep.subr.mxu0 0.0
        %2661 = vmatpush1.msra.mxu0 %v2632
        %2662 = vmatprep.subr.mxu0 0.0
        %2663 = vmatpush1.msra.mxu0 %v2631
        %2664 = vmatprep.subr.mxu0 0.0
        %2665 = vmatpush1.msra.mxu0 %v2630
        %2666 = vmatprep.subr.mxu0 0.0
        %2667 = vmatpush1.msra.mxu0 %v2629
        %2668 = vmatprep.subr.mxu0 0.0
        %2669 = vmatpush1.msra.mxu0 %v2628
        %2670 = vmatprep.subr.mxu0 0.0
        %2671 = vmatpush1.msra.mxu0 %v2627
        %2672 = vmatprep.subr.mxu0 0.0
        %2673 = vmatpush1.msra.mxu0 %v2626
        %2674 = vmatprep.subr.mxu0 0.0
        %2675 = vmatpush1.msra.mxu0 %v2625
        %2676 = vmatprep.subr.mxu0 0.0
        %2677 = vmatpush1.msra.mxu0 %v2624
        %2678 = vmatprep.subr.mxu0 0.0
        %2679 = vmatpush1.msra.mxu0 %v2623
        %2680 = vmatprep.subr.mxu0 0.0
        %2681 = vmatpush1.msra.mxu0 %v2622
        %2682 = vmatprep.subr.mxu0 0.0
        %2683 = vmatpush2.msra.mxu0 0.0
        %2684 = vmatprep.subr.mxu0 0.0
        %2685 = vmatpush2.msra.mxu0 0.0
        %2686 = vmatprep.subr.mxu0 0.0
        %2687 = vmatpush2.msra.mxu0 0.0
        %2688 = vmatprep.subr.mxu0 0.0
        %2689 = vmatpush2.msra.mxu0 0.0
        %2690 = vmatprep.subr.mxu0 0.0
        %2691 = vmatpush2.msra.mxu0 0.0
        %2692 = vmatprep.subr.mxu0 0.0
        %2693 = vmatpush2.msra.mxu0 0.0
        %2694 = vmatprep.subr.mxu0 0.0
        %2695 = vmatpush2.msra.mxu0 0.0
        %2696 = vmatprep.subr.mxu0 0.0
        %2697 = vmatpush2.msra.mxu0 0.0
        %2698 = vmatprep.subr.mxu0 0.0
        %2699 = vmatpush2.msra.mxu0 0.0
        %2700 = vmatprep.subr.mxu0 0.0
        %2701 = vmatpush2.msra.mxu0 0.0
        %2702 = vmatprep.subr.mxu0 0.0
        %2703 = vmatpush2.msra.mxu0 %v2648
        %2704 = vmatprep.subr.mxu0 0.0
        %2705 = vmatpush2.msra.mxu0 %v2642
        %2706 = vmatprep.subr.mxu0 0.0
        %2707 = vmatpush2.msra.mxu0 %v2641
        %2708 = vmatprep.subr.mxu0 0.0
        %2709 = vmatpush2.msra.mxu0 %v2640
        %2710 = vmatprep.subr.mxu0 0.0
        %2711 = vmatpush2.msra.mxu0 %v2639
        %2712 = vmatprep.subr.mxu0 0.0
        %2713 = vmatpush2.msra.mxu0 %v2638
        %2714 = vmatprep.mubr.f32.mxu0 %v2645
        %2715 = vmatmul.mubr.f32.gmra.mxu0 %v2620
        %v2716 = vpop.f32.mrf.mxu0
        %v2717 = vadd.f32 0.0, %v2716
        %v2718 = vpop.f32.mrf.mxu0
        %2719 = vdwg.mxu0
        %v2720 = vld [vmem:[%s14] sm:$0x1]
        %v2722 = vlaneseq
        %v2723 = vshrl.u32 %v2722, 7
        %v2724 = vsub.s32 0, %v2723
        %v2725 = vrot.slane %v2720, %v2724
        %v2727 = vsub.f32 %v2717, %v2725
        %vm2728 = vcmask 23552
        %v2730 = vsel %vm2728, %v2605, 0
        %vm2732 = vcmask 1042432
        %v2734 = vsel %vm2732, %v2727, 0
        %2736 = vmatprep.subr.mxu0 0.0
        %2737 = vmatpush1.msra.mxu0 0.0
        %2738 = vmatprep.subr.mxu0 0.0
        %2739 = vmatpush1.msra.mxu0 0.0
        %2740 = vmatprep.subr.mxu0 0.0
        %2741 = vmatpush1.msra.mxu0 0.0
        %2742 = vmatprep.subr.mxu0 0.0
        %2743 = vmatpush1.msra.mxu0 0.0
        %2744 = vmatprep.subr.mxu0 0.0
        %2745 = vmatpush1.msra.mxu0 0.0
        %2746 = vmatprep.subr.mxu0 0.0
        %2747 = vmatpush1.msra.mxu0 0.0
        %2748 = vmatprep.subr.mxu0 0.0
        %2749 = vmatpush1.msra.mxu0 0.0
        %2750 = vmatprep.subr.mxu0 0.0
        %2751 = vmatpush1.msra.mxu0 0.0
        %2752 = vmatprep.subr.mxu0 0.0
        %2753 = vmatpush1.msra.mxu0 0.0
        %2754 = vmatprep.subr.mxu0 0.0
        %2755 = vmatpush1.msra.mxu0 0.0
        %2756 = vmatprep.subr.mxu0 0.0
        %2757 = vmatpush1.msra.mxu0 0.0
        %2758 = vmatprep.subr.mxu0 0.0
        %2759 = vmatpush1.msra.mxu0 0.0
        %2760 = vmatprep.subr.mxu0 0.0
        %2761 = vmatpush1.msra.mxu0 0.0
        %2762 = vmatprep.subr.mxu0 0.0
        %2763 = vmatpush1.msra.mxu0 0.0
        %2764 = vmatprep.subr.mxu0 0.0
        %2765 = vmatpush1.msra.mxu0 0.0
        %2766 = vmatprep.subr.mxu0 0.0
        %2767 = vmatpush1.msra.mxu0 %v2734
        %2768 = vmatprep.subr.mxu0 0.0
        %2769 = vmatpush2.msra.mxu0 0.0
        %2770 = vmatprep.subr.mxu0 0.0
        %2771 = vmatpush2.msra.mxu0 0.0
        %2772 = vmatprep.subr.mxu0 0.0
        %2773 = vmatpush2.msra.mxu0 0.0
        %2774 = vmatprep.subr.mxu0 0.0
        %2775 = vmatpush2.msra.mxu0 0.0
        %2776 = vmatprep.subr.mxu0 0.0
        %2777 = vmatpush2.msra.mxu0 0.0
        %2778 = vmatprep.subr.mxu0 0.0
        %2779 = vmatpush2.msra.mxu0 0.0
        %2780 = vmatprep.subr.mxu0 0.0
        %2781 = vmatpush2.msra.mxu0 0.0
        %2782 = vmatprep.subr.mxu0 0.0
        %2783 = vmatpush2.msra.mxu0 0.0
        %2784 = vmatprep.subr.mxu0 0.0
        %2785 = vmatpush2.msra.mxu0 0.0
        %2786 = vmatprep.subr.mxu0 0.0
        %2787 = vmatpush2.msra.mxu0 0.0
        %2788 = vmatprep.subr.mxu0 0.0
        %2789 = vmatpush2.msra.mxu0 0.0
        %2790 = vmatprep.subr.mxu0 0.0
        %2791 = vmatpush2.msra.mxu0 0.0
        %2792 = vmatprep.subr.mxu0 0.0
        %2793 = vmatpush2.msra.mxu0 0.0
        %2794 = vmatprep.subr.mxu0 0.0
        %2795 = vmatpush2.msra.mxu0 0.0
        %2796 = vmatprep.subr.mxu0 0.0
        %2797 = vmatpush2.msra.mxu0 0.0
        %2798 = vmatprep.subr.mxu0 0.0
        %2799 = vmatpush2.msra.mxu0 0.0
        %2800 = vmatprep.mubr.f32.mxu0 0.0
        %2801 = vmatmul.mubr.f32.gmra.mxu0 %v2730
        %v2802 = vpop.f32.mrf.mxu0
        %v2803 = vadd.f32 0.0, %v2802
        %v2804 = vpop.f32.mrf.mxu0
        %2805 = vdwg.mxu0
        %v2806 = vmax.f32 %v2803, 0.0
        %v2807 = vld [vmem:[%s15] sm:$0x7]
        %2809 = vset.pattern.permute.xlu0 0
        %2810 = vperm.xlu0 %2809, %v2807
        %v2811 = vpop.permute.xlu0 %2810
        %v2813 = vmul.f32 %v2806, %v2811
        %v2814 = vld [vmem:[%s16] sm:$0x7]
        %2816 = vset.pattern.permute.xlu0 0
        %2817 = vperm.xlu0 %2816, %v2814
        %v2818 = vpop.permute.xlu0 %2817
        %v2820 = vadd.f32 %v2813, %v2818
        %v2821 = vld [vmem:[%s17] sm:$0xff]
        %v2823 = vsel %vm2424, %v2820, 0
        %2825 = vmatprep.subr.mxu0 0.0
        %2826 = vmatpush1.msra.mxu0 0.0
        %2827 = vmatprep.subr.mxu0 0.0
        %2828 = vmatpush1.msra.mxu0 0.0
        %2829 = vmatprep.subr.mxu0 0.0
        %2830 = vmatpush1.msra.mxu0 0.0
        %2831 = vmatprep.subr.mxu0 0.0
        %2832 = vmatpush1.msra.mxu0 0.0
        %2833 = vmatprep.subr.mxu0 0.0
        %2834 = vmatpush1.msra.mxu0 0.0
        %2835 = vmatprep.subr.mxu0 0.0
        %2836 = vmatpush1.msra.mxu0 0.0
        %2837 = vmatprep.subr.mxu0 0.0
        %2838 = vmatpush1.msra.mxu0 0.0
        %2839 = vmatprep.subr.mxu0 0.0
        %2840 = vmatpush1.msra.mxu0 0.0
        %2841 = vmatprep.subr.mxu0 0.0
        %2842 = vmatpush1.msra.mxu0 0.0
        %2843 = vmatprep.subr.mxu0 0.0
        %2844 = vmatpush1.msra.mxu0 0.0
        %2845 = vmatprep.subr.mxu0 0.0
        %2846 = vmatpush1.msra.mxu0 0.0
        %2847 = vmatprep.subr.mxu0 0.0
        %2848 = vmatpush1.msra.mxu0 0.0
        %2849 = vmatprep.subr.mxu0 0.0
        %2850 = vmatpush1.msra.mxu0 0.0
        %2851 = vmatprep.subr.mxu0 0.0
        %2852 = vmatpush1.msra.mxu0 0.0
        %2853 = vmatprep.subr.mxu0 0.0
        %2854 = vmatpush1.msra.mxu0 0.0
        %2855 = vmatprep.subr.mxu0 0.0
        %2856 = vmatpush1.msra.mxu0 %v2821
        %2857 = vmatprep.subr.mxu0 0.0
        %2858 = vmatpush2.msra.mxu0 0.0
        %2859 = vmatprep.subr.mxu0 0.0
        %2860 = vmatpush2.msra.mxu0 0.0
        %2861 = vmatprep.subr.mxu0 0.0
        %2862 = vmatpush2.msra.mxu0 0.0
        %2863 = vmatprep.subr.mxu0 0.0
        %2864 = vmatpush2.msra.mxu0 0.0
        %2865 = vmatprep.subr.mxu0 0.0
        %2866 = vmatpush2.msra.mxu0 0.0
        %2867 = vmatprep.subr.mxu0 0.0
        %2868 = vmatpush2.msra.mxu0 0.0
        %2869 = vmatprep.subr.mxu0 0.0
        %2870 = vmatpush2.msra.mxu0 0.0
        %2871 = vmatprep.subr.mxu0 0.0
        %2872 = vmatpush2.msra.mxu0 0.0
        %2873 = vmatprep.subr.mxu0 0.0
        %2874 = vmatpush2.msra.mxu0 0.0
        %2875 = vmatprep.subr.mxu0 0.0
        %2876 = vmatpush2.msra.mxu0 0.0
        %2877 = vmatprep.subr.mxu0 0.0
        %2878 = vmatpush2.msra.mxu0 0.0
        %2879 = vmatprep.subr.mxu0 0.0
        %2880 = vmatpush2.msra.mxu0 0.0
        %2881 = vmatprep.subr.mxu0 0.0
        %2882 = vmatpush2.msra.mxu0 0.0
        %2883 = vmatprep.subr.mxu0 0.0
        %2884 = vmatpush2.msra.mxu0 0.0
        %2885 = vmatprep.subr.mxu0 0.0
        %2886 = vmatpush2.msra.mxu0 0.0
        %2887 = vmatprep.subr.mxu0 0.0
        %2888 = vmatpush2.msra.mxu0 0.0
        %2889 = vmatprep.mubr.f32.mxu0 0.0
        %2890 = vmatmul.mubr.f32.gmra.mxu0 %v2823
        %v2891 = vpop.f32.mrf.mxu0
        %v2892 = vadd.f32 0.0, %v2891
        %v2893 = vpop.f32.mrf.mxu0
        %2894 = vdwg.mxu0
        %v2895 = vld [vmem:[%s18] sm:$0x7]
        %v2896 = vmul.f32 %v2892, %v2895
        %v2897 = vld [vmem:[%s19] sm:$0x1]
        %v2899 = vsel %vm2728, %v2897, 0
        %v2902 = vsel %vm2732, %v2896, 0
        %2904 = vmatprep.subr.mxu0 0.0
        %2905 = vmatpush1.msra.mxu0 0.0
        %2906 = vmatprep.subr.mxu0 0.0
        %2907 = vmatpush1.msra.mxu0 0.0
        %2908 = vmatprep.subr.mxu0 0.0
        %2909 = vmatpush1.msra.mxu0 0.0
        %2910 = vmatprep.subr.mxu0 0.0
        %2911 = vmatpush1.msra.mxu0 0.0
        %2912 = vmatprep.subr.mxu0 0.0
        %2913 = vmatpush1.msra.mxu0 0.0
        %2914 = vmatprep.subr.mxu0 0.0
        %2915 = vmatpush1.msra.mxu0 0.0
        %2916 = vmatprep.subr.mxu0 0.0
        %2917 = vmatpush1.msra.mxu0 0.0
        %2918 = vmatprep.subr.mxu0 0.0
        %2919 = vmatpush1.msra.mxu0 0.0
        %2920 = vmatprep.subr.mxu0 0.0
        %2921 = vmatpush1.msra.mxu0 0.0
        %2922 = vmatprep.subr.mxu0 0.0
        %2923 = vmatpush1.msra.mxu0 0.0
        %2924 = vmatprep.subr.mxu0 0.0
        %2925 = vmatpush1.msra.mxu0 0.0
        %2926 = vmatprep.subr.mxu0 0.0
        %2927 = vmatpush1.msra.mxu0 0.0
        %2928 = vmatprep.subr.mxu0 0.0
        %2929 = vmatpush1.msra.mxu0 0.0
        %2930 = vmatprep.subr.mxu0 0.0
        %2931 = vmatpush1.msra.mxu0 0.0
        %2932 = vmatprep.subr.mxu0 0.0
        %2933 = vmatpush1.msra.mxu0 0.0
        %2934 = vmatprep.subr.mxu0 0.0
        %2935 = vmatpush1.msra.mxu0 %v2902
        %2936 = vmatprep.subr.mxu0 0.0
        %2937 = vmatpush2.msra.mxu0 0.0
        %2938 = vmatprep.subr.mxu0 0.0
        %2939 = vmatpush2.msra.mxu0 0.0
        %2940 = vmatprep.subr.mxu0 0.0
        %2941 = vmatpush2.msra.mxu0 0.0
        %2942 = vmatprep.subr.mxu0 0.0
        %2943 = vmatpush2.msra.mxu0 0.0
        %2944 = vmatprep.subr.mxu0 0.0
        %2945 = vmatpush2.msra.mxu0 0.0
        %2946 = vmatprep.subr.mxu0 0.0
        %2947 = vmatpush2.msra.mxu0 0.0
        %2948 = vmatprep.subr.mxu0 0.0
        %2949 = vmatpush2.msra.mxu0 0.0
        %2950 = vmatprep.subr.mxu0 0.0
        %2951 = vmatpush2.msra.mxu0 0.0
        %2952 = vmatprep.subr.mxu0 0.0
        %2953 = vmatpush2.msra.mxu0 0.0
        %2954 = vmatprep.subr.mxu0 0.0
        %2955 = vmatpush2.msra.mxu0 0.0
        %2956 = vmatprep.subr.mxu0 0.0
        %2957 = vmatpush2.msra.mxu0 0.0
        %2958 = vmatprep.subr.mxu0 0.0
        %2959 = vmatpush2.msra.mxu0 0.0
        %2960 = vmatprep.subr.mxu0 0.0
        %2961 = vmatpush2.msra.mxu0 0.0
        %2962 = vmatprep.subr.mxu0 0.0
        %2963 = vmatpush2.msra.mxu0 0.0
        %2964 = vmatprep.subr.mxu0 0.0
        %2965 = vmatpush2.msra.mxu0 0.0
        %2966 = vmatprep.subr.mxu0 0.0
        %2967 = vmatpush2.msra.mxu0 0.0
        %2968 = vmatprep.mubr.f32.mxu0 0.0
        %2969 = vmatmul.mubr.f32.gmra.mxu0 %v2899
        %v2970 = vpop.f32.mrf.mxu0
        %v2971 = vadd.f32 0.0, %v2970
        %v2972 = vpop.f32.mrf.mxu0
        %2973 = vdwg.mxu0
        %v2974 = vld [vmem:[%s20] sm:$0xff]
        %v2975 = vld [vmem:[%s20 + $0x8] sm:$0x1]
        %v2976 = vld [vmem:[%s21] sm:$0x1]
        %vm2977 = vcmask 72704
        %v2979 = vsel %vm2977, %v2971, 0
        %vm2981 = vcmask 1040384
        %v2983 = vsel %vm2981, %v2975, 0
        %2985 = vmatprep.subr.mxu0 0.0
        %2986 = vmatpush1.msra.mxu0 0.0
        %2987 = vmatprep.subr.mxu0 0.0
        %2988 = vmatpush1.msra.mxu0 0.0
        %2989 = vmatprep.subr.mxu0 0.0
        %2990 = vmatpush1.msra.mxu0 0.0
        %2991 = vmatprep.subr.mxu0 0.0
        %2992 = vmatpush1.msra.mxu0 0.0
        %2993 = vmatprep.subr.mxu0 0.0
        %2994 = vmatpush1.msra.mxu0 0.0
        %2995 = vmatprep.subr.mxu0 0.0
        %2996 = vmatpush1.msra.mxu0 0.0
        %2997 = vmatprep.subr.mxu0 0.0
        %2998 = vmatpush1.msra.mxu0 0.0
        %2999 = vmatprep.subr.mxu0 0.0
        %3000 = vmatpush1.msra.mxu0 0.0
        %3001 = vmatprep.subr.mxu0 0.0
        %3002 = vmatpush1.msra.mxu0 0.0
        %3003 = vmatprep.subr.mxu0 0.0
        %3004 = vmatpush1.msra.mxu0 0.0
        %3005 = vmatprep.subr.mxu0 0.0
        %3006 = vmatpush1.msra.mxu0 0.0
        %3007 = vmatprep.subr.mxu0 0.0
        %3008 = vmatpush1.msra.mxu0 0.0
        %3009 = vmatprep.subr.mxu0 0.0
        %3010 = vmatpush1.msra.mxu0 0.0
        %3011 = vmatprep.subr.mxu0 0.0
        %3012 = vmatpush1.msra.mxu0 0.0
        %3013 = vmatprep.subr.mxu0 0.0
        %3014 = vmatpush1.msra.mxu0 %v2983
        %3015 = vmatprep.subr.mxu0 0.0
        %3016 = vmatpush1.msra.mxu0 %v2974
        %3017 = vmatprep.subr.mxu0 0.0
        %3018 = vmatpush2.msra.mxu0 0.0
        %3019 = vmatprep.subr.mxu0 0.0
        %3020 = vmatpush2.msra.mxu0 0.0
        %3021 = vmatprep.subr.mxu0 0.0
        %3022 = vmatpush2.msra.mxu0 0.0
        %3023 = vmatprep.subr.mxu0 0.0
        %3024 = vmatpush2.msra.mxu0 0.0
        %3025 = vmatprep.subr.mxu0 0.0
        %3026 = vmatpush2.msra.mxu0 0.0
        %3027 = vmatprep.subr.mxu0 0.0
        %3028 = vmatpush2.msra.mxu0 0.0
        %3029 = vmatprep.subr.mxu0 0.0
        %3030 = vmatpush2.msra.mxu0 0.0
        %3031 = vmatprep.subr.mxu0 0.0
        %3032 = vmatpush2.msra.mxu0 0.0
        %3033 = vmatprep.subr.mxu0 0.0
        %3034 = vmatpush2.msra.mxu0 0.0
        %3035 = vmatprep.subr.mxu0 0.0
        %3036 = vmatpush2.msra.mxu0 0.0
        %3037 = vmatprep.subr.mxu0 0.0
        %3038 = vmatpush2.msra.mxu0 0.0
        %3039 = vmatprep.subr.mxu0 0.0
        %3040 = vmatpush2.msra.mxu0 0.0
        %3041 = vmatprep.subr.mxu0 0.0
        %3042 = vmatpush2.msra.mxu0 0.0
        %3043 = vmatprep.subr.mxu0 0.0
        %3044 = vmatpush2.msra.mxu0 0.0
        %3045 = vmatprep.subr.mxu0 0.0
        %3046 = vmatpush2.msra.mxu0 0.0
        %3047 = vmatprep.subr.mxu0 0.0
        %3048 = vmatpush2.msra.mxu0 0.0
        %3049 = vmatprep.mubr.f32.mxu0 0.0
        %3050 = vmatmul.mubr.f32.gmra.mxu0 %v2979
        %v3051 = vpop.f32.mrf.mxu0
        %v3052 = vadd.f32 %v2976, %v3051
        %v3053 = vpop.f32.mrf.mxu0
        %3054 = vdwg.mxu0
        %vm3055 = vcmask 16384
        %3056 = vst.msk [vmem:[%s700] sm:$0x1] %vm3055, %v3052
        %s3057 = sand.u32 %s533, 1
        %s3058 = scalar_lea.sflag [#allocation3], %s3057
        %s3059 = sand.u32 %s533, 1
        %s3060 = scalar_lea.vmem [#allocation2], %s3059
        // Predicated region
        $region113: #{_lambda_.1} parent=111 // pred_check
          %p3061 = pneg %p543
        $region114: #{_lambda_.1} parent=111 // pred_check_branch
          %3063 = sbr.rel (%p3061) target = $region116
        $region115: #{_lambda_.1} parent=111 // pred_region
          %s3065 = ssub.s32 16, 16
          %3066 = vsyncadd %s3058, %s3065
          %s3067 = smul.addr %s37, 16
          %s3068 = scalar_lea.hbm %s23, %s3067
          %s3070 = sshll.u32 %s3060, 4
          %s3071 = int_to_ptr.vmem [resolvable:$true] %s3070
          %3073 = dma.vmem_to_hbm [thread:$0]  %s3071, 16, %s3068, %s3058
        $region116: #{_lambda_.1} parent=111 // pred_fallthru
          _
      $region112: #{_lambda_.1} parent=5 // pred_fallthru
        _
      %p3074 = scmp.le.s32.totalorder 2, %s32
      // Predicated region
      $region117: #{_lambda_.1} parent=5 // pred_check
        %p3075 = pneg %p3074
      $region118: #{_lambda_.1} parent=5 // pred_check_branch
        %3077 = sbr.rel (%p3075) target = $region120
      $region119: #{_lambda_.1} parent=5 // pred_region
        %s3078 = ssub.s32 %s32, 2
        // Predicated region
        $region121: #{_lambda_.1} parent=119 // pred_check
          %p3079 = pneg %p549
        $region122: #{_lambda_.1} parent=119 // pred_check_branch
          %3081 = sbr.rel (%p3079) target = $region124
        $region123: #{_lambda_.1} parent=119 // pred_region
          %s3082 = sand.u32 %s534, 1
          %s3083 = scalar_lea.sflag [#allocation3], %s3082
          %s3084 = sand.u32 %s534, 1
          %s3085 = scalar_lea.vmem [#allocation2], %s3084
          %3086 = dma.done %s3083, 16
        $region124: #{_lambda_.1} parent=119 // pred_fallthru
          _
      $region120: #{_lambda_.1} parent=5 // pred_fallthru
        _
    $region6: #{_lambda_.1} parent=1 // loop_footer
      %s36 = sadd.s32 1, %s32
    $region7: #{_lambda_.1} parent=1 // loop_footer_branch
      %31 = sbr.rel target = $region3
    $region8: #{_lambda_.1} parent=1 // loop_exit
      _
    %3087 = vsyncpa [#allocation3], 1
    %s3088 = scalar_lea.sflag [#allocation3], 1
    %3089 = vsyncpa %s3088, 1

</llo_original>
